<compile_context>
chip_gen: v6e
topology: v6e:2x2x1
jax: 0.10.0
libtpu: 0.0.40
codegen_flags: <defaults>
</compile_context>

<pallas_src>
import functools

import jax
import jax.numpy as jnp
from jax import lax
from jax.experimental import pallas as pl
from jax.experimental.pallas import tpu as pltpu

EMBEDDING_DIM = 128
INPUTSIZE = 512
BN_EPS = 1e-6


# ----------------------------------------------------------------------------
# helpers
# ----------------------------------------------------------------------------
def _round_up(x, m):
    return (x + m - 1) // m * m


def _resident(shape):
    nd = len(shape)
    return pl.BlockSpec(shape, lambda i, _n=nd: (0,) * _n)


def _fold_bn(bias, gamma, beta, mean, var):
    # (x@W + b) -> BN  ==  x@(W*scale) + shift
    scale = gamma * lax.rsqrt(var + BN_EPS)
    shift = beta - mean * scale + bias * scale
    return scale, shift


# ----------------------------------------------------------------------------
# fused embedding: dense(512->2048)+BN+LReLU -> dense(2048->128)+BN+LReLU
# writes bf16 output directly time-major-compatible: (F, B*E), cols blocked by b
# ----------------------------------------------------------------------------
def _embed_kernel(x_ref, w1_ref, t1_ref, w2_ref, t2_ref, o_ref, *, f_len, emb, tb):
    x = x_ref[...]                                                    # (tb*F, 512) bf16
    z1 = jnp.dot(x, w1_ref[...], preferred_element_type=jnp.float32) + t1_ref[...]
    h1 = jnp.maximum(z1, 0.01 * z1).astype(jnp.bfloat16)              # LeakyReLU, 1 op
    z2 = jnp.dot(h1, w2_ref[...], preferred_element_type=jnp.float32) + t2_ref[...]
    y = jnp.maximum(z2, 0.01 * z2).astype(o_ref.dtype)                # (tb*F, E)
    # batch-major rows -> time-major columns: lane-aligned 128-wide writes
    for b in range(tb):
        o_ref[:, b * emb:(b + 1) * emb] = y[b * f_len:(b + 1) * f_len, :]


def fused_embedding_tm(x2d, w1s, t1, w2s, t2, batch, f_len):
    n, cin = x2d.shape
    emb = w2s.shape[1]
    # rows per grid step = a whole number of batch elements, targeting ~512 rows
    if f_len % 8 == 0:
        tb = max(1, min(batch, 512 // max(f_len, 1)))
        while batch % tb:
            tb -= 1
    else:
        tb = batch                     # full-array block keeps layout constraints happy
    kernel = functools.partial(_embed_kernel, f_len=f_len, emb=emb, tb=tb)
    return pl.pallas_call(
        kernel,
        out_shape=jax.ShapeDtypeStruct((f_len, batch * emb), jnp.bfloat16),
        grid=(batch // tb,),
        in_specs=[
            pl.BlockSpec((tb * f_len, cin), lambda i: (i, 0)),   # streaming x rows
            pl.BlockSpec(w1s.shape, lambda i: (0, 0)),           # VMEM-resident weights
            pl.BlockSpec(t1.shape, lambda i: (0, 0)),
            pl.BlockSpec(w2s.shape, lambda i: (0, 0)),
            pl.BlockSpec(t2.shape, lambda i: (0, 0)),
        ],
        out_specs=pl.BlockSpec((f_len, tb * emb), lambda i: (0, i)),
        compiler_params=pltpu.CompilerParams(
            dimension_semantics=("parallel",),
            vmem_limit_bytes=32 * 1024 * 1024),
    )(x2d, w1s, t1, w2s, t2)


# ----------------------------------------------------------------------------
# fused bidirectional LSTM layer (both directions in one kernel, time-major)
# gate layout per 128-lane group g in {i,f,g,o}: [fwd(H) | bwd(H) | zeros]
# ----------------------------------------------------------------------------
def _bilstm_recurrence(x_ref, wih_ref, whh_ref, b_ref, seq_len, batch, hidden, pad):
    T, B, H, P = seq_len, batch, hidden, pad
    # Hoisted input projection for BOTH directions (single bf16 matmul).
    gx = (jnp.dot(x_ref[...], wih_ref[...], preferred_element_type=jnp.float32)
          + b_ref[...])                                              # (T*B, 4P) f32
    whh = whh_ref[...]                                               # (P, 4P) bf16
    gate_is_fwd = (lax.broadcasted_iota(jnp.int32, (B, 4 * P), 1) % P) < H
    h = jnp.zeros((B, P), jnp.float32)                               # [h_f | h_b | 0]
    c = jnp.zeros((B, P), jnp.float32)
    hs = []
    for s in range(T):                 # fully unrolled static recurrence
        g = jnp.where(gate_is_fwd,
                      gx[s * B:(s + 1) * B, :],
                      gx[(T - 1 - s) * B:(T - s) * B, :])            # in-kernel reverse
        gates = g + jnp.dot(h.astype(jnp.bfloat16), whh,
                            preferred_element_type=jnp.float32)
        i_g = jax.nn.sigmoid(gates[:, 0:P])                          # 128-lane aligned
        f_g = jax.nn.sigmoid(gates[:, P:2 * P])
        g_g = jnp.tanh(gates[:, 2 * P:3 * P])
        o_g = jax.nn.sigmoid(gates[:, 3 * P:4 * P])
        c = f_g * c + i_g * g_g
        h = o_g * jnp.tanh(c)
        hs.append(h)
    return hs


def _bilstm_kernel(x_ref, wih_ref, whh_ref, b_ref, o_ref, *,
                   seq_len, batch, hidden, pad):
    T, B, H, P = seq_len, batch, hidden, pad
    hs = _bilstm_recurrence(x_ref, wih_ref, whh_ref, b_ref, T, B, H, P)
    out_is_fwd = lax.broadcasted_iota(jnp.int32, (B, P), 1) < H
    # physical time t: fwd half from step t, bwd half from step T-1-t; padding is 0
    out = jnp.concatenate(
        [jnp.where(out_is_fwd, hs[t], hs[T - 1 - t]) for t in range(T)], axis=0)
    o_ref[...] = out.astype(o_ref.dtype)          # ONE dense (T*B, P) bf16 store


def _bilstm_head_kernel(x_ref, wih_ref, whh_ref, b_ref, wf_ref, bf_ref, o_ref, *,
                        seq_len, batch, hidden, pad):
    # last layer: classifier fused in the epilogue; hidden states never hit HBM
    T, B, H, P = seq_len, batch, hidden, pad
    hs = _bilstm_recurrence(x_ref, wih_ref, whh_ref, b_ref, T, B, H, P)
    out_is_fwd = lax.broadcasted_iota(jnp.int32, (B, P), 1) < H
    acc = jnp.zeros((B, o_ref.shape[-1]), jnp.float32)
    for t in range(T):
        sel = jnp.where(out_is_fwd, hs[t], hs[T - 1 - t]).astype(jnp.bfloat16)
        acc = acc + jnp.dot(sel, wf_ref[t], preferred_element_type=jnp.float32)
    o_ref[...] = acc + bf_ref[...]                # (B, 128) padded logits


def bilstm_layer(x_tm, wih, whh, b, *, seq_len, batch, hidden, pad):
    # TODO(synk): for non-toy batch sizes, tile the grid over B ("parallel").
    kernel = functools.partial(_bilstm_kernel, seq_len=seq_len, batch=batch,
                               hidden=hidden, pad=pad)
    return pl.pallas_call(
        kernel,
        out_shape=jax.ShapeDtypeStruct((seq_len * batch, pad), jnp.bfloat16),
        grid=(1,),
        in_specs=[_resident(x_tm.shape), _resident(wih.shape),
                  _resident(whh.shape), _resident(b.shape)],
        out_specs=_resident((seq_len * batch, pad)),
        compiler_params=pltpu.CompilerParams(dimension_semantics=("arbitrary",)),
    )(x_tm, wih, whh, b)


def bilstm_head_layer(x_tm, wih, whh, b, wf, bf, *, seq_len, batch, hidden, pad):
    kernel = functools.partial(_bilstm_head_kernel, seq_len=seq_len, batch=batch,
                               hidden=hidden, pad=pad)
    return pl.pallas_call(
        kernel,
        out_shape=jax.ShapeDtypeStruct((batch, bf.shape[-1]), jnp.float32),
        grid=(1,),
        in_specs=[_resident(x_tm.shape), _resident(wih.shape),
                  _resident(whh.shape), _resident(b.shape),
                  _resident(wf.shape), _resident(bf.shape)],
        out_specs=_resident((batch, bf.shape[-1])),
        compiler_params=pltpu.CompilerParams(dimension_semantics=("arbitrary",)),
    )(x_tm, wih, whh, b, wf, bf)


# ----------------------------------------------------------------------------
# one-time parameter preprocessing (hoisted out of the forward pass)
# ----------------------------------------------------------------------------
def _pack_gate_cols(m_f, m_b, hidden, pad):
    # per-gate columns [i,f,g,o] of each direction -> [fwd(H) | bwd(H) | 0] per group
    r = m_f.shape[0]
    a = m_f.reshape(r, 4, hidden)
    b = m_b.reshape(r, 4, hidden)
    z = jnp.zeros((r, 4, pad - 2 * hidden), m_f.dtype)
    return jnp.concatenate([a, b, z], axis=2).reshape(r, 4 * pad)


def prepare_params(params, hidden_size, num_layers, seq_len):
    H = hidden_size
    P = max(128, _round_up(2 * H, 128))          # padded state / gate-group width
    s1, t1 = _fold_bn(params["b1"], params["bn1_gamma"], params["bn1_beta"],
                      params["bn1_mean"], params["bn1_var"])
    s2, t2 = _fold_bn(params["b2"], params["bn2_gamma"], params["bn2_beta"],
                      params["bn2_mean"], params["bn2_var"])
    prepped = {
        "w1": (params["w1"] * s1).astype(jnp.bfloat16),   # BN scale folded offline
        "t1": t1,
        "w2": (params["w2"] * s2).astype(jnp.bfloat16),
        "t2": t2,
        "pad": P,
    }
    layers = []
    for layer in range(num_layers):
        (wih_f, whh_f, b_f), (wih_b, whh_b, b_b) = params["lstm"][layer]
        d_in = wih_f.shape[0]
        wih = _pack_gate_cols(wih_f, wih_b, H, P)
        d_pad = d_in if layer == 0 else P        # layers>=1 consume P-wide padded acts
        wih = jnp.pad(wih, ((0, d_pad - d_in), (0, 0))).astype(jnp.bfloat16)
        whh = jnp.concatenate(
            [_pack_gate_cols(whh_f, jnp.zeros_like(whh_f), H, P),
             _pack_gate_cols(jnp.zeros_like(whh_b), whh_b, H, P),
             jnp.zeros((P - 2 * H, 4 * P), jnp.float32)], axis=0).astype(jnp.bfloat16)
        b = _pack_gate_cols(b_f, b_b, H, P)      # (1, 4P) f32
        layers.append((wih, whh, b))
    prepped["lstm"] = layers
    # classifier weights, 128-lane padded and time-blocked for the fused head
    wf_r = params["wf"].reshape(seq_len, 2 * H, 2)
    wf_pad = jnp.zeros((seq_len, P, 128), jnp.float32)
    wf_pad = wf_pad.at[:, :2 * H, :2].set(wf_r)
    prepped["wf"] = wf_pad.astype(jnp.bfloat16)
    prepped["bf"] = jnp.pad(params["bf"], ((0, 0), (0, 128 - params["bf"].shape[1])))
    return prepped


# ----------------------------------------------------------------------------
# parameter construction (deterministic, synthetic)
# ----------------------------------------------------------------------------
def init_params(key, hidden_size, num_layers, seq_len):
    keys = iter(jax.random.split(key, 128))

    def nrm(shape, s=0.05):
        return jax.random.normal(next(keys), shape, jnp.float32) * s

    p = {}
    c1 = 4 * INPUTSIZE
    p["w1"] = nrm((INPUTSIZE, c1))
    p["b1"] = nrm((1, c1))
    p["bn1_gamma"] = 1.0 + nrm((1, c1))
    p["bn1_beta"] = nrm((1, c1))
    p["bn1_mean"] = nrm((1, c1))
    p["bn1_var"] = 1.0 + jnp.abs(nrm((1, c1)))
    p["w2"] = nrm((c1, EMBEDDING_DIM), 0.02)
    p["b2"] = nrm((1, EMBEDDING_DIM))
    p["bn2_gamma"] = 1.0 + nrm((1, EMBEDDING_DIM))
    p["bn2_beta"] = nrm((1, EMBEDDING_DIM))
    p["bn2_mean"] = nrm((1, EMBEDDING_DIM))
    p["bn2_var"] = 1.0 + jnp.abs(nrm((1, EMBEDDING_DIM)))
    lstm = []
    for layer in range(num_layers):
        d_in = EMBEDDING_DIM if layer == 0 else 2 * hidden_size
        dirs = []
        for _direction in range(2):
            wih = nrm((d_in, 4 * hidden_size), 0.1)
            whh = nrm((hidden_size, 4 * hidden_size), 0.1)
            bias = nrm((1, 4 * hidden_size), 0.1)   # b_ih + b_hh combined
            dirs.append((wih, whh, bias))
        lstm.append(dirs)
    p["lstm"] = lstm
    p["wf"] = nrm((seq_len * 2 * hidden_size, 2), 0.05)
    p["bf"] = nrm((1, 2))
    return p


# ----------------------------------------------------------------------------
# forward pass (Pallas for the whole hot path, only free reshapes outside)
# ----------------------------------------------------------------------------
def netone_forward(prepped, datas, hidden_size, num_layers):
    B, F_len, C = datas.shape
    assert C == INPUTSIZE
    P = prepped["pad"]

    # fused conv1x1+BN+LReLU x2 over the channels-last slab, bf16 time-major out
    x2d = datas.reshape(B * F_len, C).astype(jnp.bfloat16)
    emb_tm = fused_embedding_tm(x2d, prepped["w1"], prepped["t1"],
                                prepped["w2"], prepped["t2"], B, F_len)  # (F, B*E)
    x_tm = emb_tm.reshape(F_len * B, EMBEDDING_DIM)   # free reshape -> time-major

    # stacked BiLSTM; the last layer fuses the 2-way classifier in its epilogue.
    # TODO(synk): inter-layer dropout(p=0.2) is inference-disabled and omitted.
    for layer in range(num_layers - 1):
        wih, whh, b = prepped["lstm"][layer]
        x_tm = bilstm_layer(x_tm, wih, whh, b, seq_len=F_len, batch=B,
                            hidden=hidden_size, pad=P)                   # (F*B, P)
    wih, whh, b = prepped["lstm"][num_layers - 1]
    logits_pad = bilstm_head_layer(x_tm, wih, whh, b,
                                   prepped["wf"], prepped["bf"],
                                   seq_len=F_len, batch=B,
                                   hidden=hidden_size, pad=P)            # (B, 128)
    return logits_pad[:, :2]


# ----------------------------------------------------------------------------
# pure-JAX f32 reference (numerical sanity check)
# ----------------------------------------------------------------------------
def _lstm_dir_ref(x_btd, wih, whh, b, H):
    B = x_btd.shape[0]

    def step(carry, x_t):
        h, c = carry
        gates = x_t @ wih + h @ whh + b
        i_g = jax.nn.sigmoid(gates[:, :H])
        f_g = jax.nn.sigmoid(gates[:, H:2 * H])
        g_g = jnp.tanh(gates[:, 2 * H:3 * H])
        o_g = jax.nn.sigmoid(gates[:, 3 * H:])
        c = f_g * c + i_g * g_g
        h = o_g * jnp.tanh(c)
        return (h, c), h

    init = (jnp.zeros((B, H), jnp.float32), jnp.zeros((B, H), jnp.float32))
    _, hs = lax.scan(step, init, jnp.transpose(x_btd, (1, 0, 2)))
    return jnp.transpose(hs, (1, 0, 2))


def netone_forward_ref(params, datas, hidden_size, num_layers):
    B, F_len, C = datas.shape
    x2d = datas.reshape(B * F_len, C).astype(jnp.float32)

    def block(x, w, b, g, bt, m, v):
        scale = g * lax.rsqrt(v + BN_EPS)
        z = (x @ w + b - m) * scale + bt
        return jnp.where(z >= 0.0, z, 0.01 * z)

    h1 = block(x2d, params["w1"], params["b1"], params["bn1_gamma"],
               params["bn1_beta"], params["bn1_mean"], params["bn1_var"])
    emb = block(h1, params["w2"], params["b2"], params["bn2_gamma"],
                params["bn2_beta"], params["bn2_mean"], params["bn2_var"])
    x_layer = emb.reshape(B, F_len, EMBEDDING_DIM)
    for layer in range(num_layers):
        wih_f, whh_f, b_f = params["lstm"][layer][0]
        wih_b, whh_b, b_b = params["lstm"][layer][1]
        out_f = _lstm_dir_ref(x_layer, wih_f, whh_f, b_f, hidden_size)
        out_b = _lstm_dir_ref(x_layer[:, ::-1], wih_b, whh_b, b_b,
                              hidden_size)[:, ::-1]
        x_layer = jnp.concatenate([out_f, out_b], axis=-1)
    flat = x_layer.reshape(B, -1)
    return flat @ params["wf"] + params["bf"]


# ----------------------------------------------------------------------------
if __name__ == "__main__":
    key = jax.random.PRNGKey(0)
    k_x, k_p = jax.random.split(key)

    num_classes = 4        # unused by forward (self.MLP / self.lsm are dead code)
    hidden_size = 32
    num_layers = 2
    middle_feature = 64    # unused by forward

    B, seq_len = 2, 8
    datas = jax.random.normal(k_x, (B, seq_len, INPUTSIZE), jnp.float32) * 0.5

    params = init_params(k_p, hidden_size, num_layers, seq_len)
    prepped = prepare_params(params, hidden_size, num_layers, seq_len)  # one-time prep

    out = netone_forward(prepped, datas, hidden_size, num_layers)
    out = jax.block_until_ready(out)

    ref = netone_forward_ref(params, datas, hidden_size, num_layers)
    ref = jax.block_until_ready(ref)

    assert out.shape == (B, 2), out.shape
    rel_err = float(jnp.max(jnp.abs(out - ref)) / (jnp.max(jnp.abs(ref)) + 1e-6))
    assert rel_err < 2e-2, f"Pallas vs reference mismatch: rel_err={rel_err}"

    print("KERNEL_OK")
</pallas_src>

<mosaic_0001>
module attributes {stable_mosaic.version = 11 : i64} {
  func.func @_embed_kernel(%arg0: i32, %arg1: memref<16x512xbf16, #tpu.memory_space<vmem>>, %arg2: memref<512x2048xbf16, #tpu.memory_space<vmem>>, %arg3: memref<1x2048xf32, #tpu.memory_space<vmem>>, %arg4: memref<2048x128xbf16, #tpu.memory_space<vmem>>, %arg5: memref<1x128xf32, #tpu.memory_space<vmem>>, %arg6: memref<8x256xbf16, #tpu.memory_space<vmem>>) attributes {dimension_semantics = [#tpu.dimension_semantics<parallel>], iteration_bounds = array<i64: 1>, scalar_prefetch = 0 : i64, scratch_operands = 0 : i64, tpu.core_type = #tpu.core_type<tc>, window_params = [{transform_indices = @transform_0, window_bounds = array<i64: 16, 512>}, {pipeline_mode = #tpu.pipeline_mode<synchronous>, transform_indices = @transform_1, window_bounds = array<i64: 512, 2048>}, {pipeline_mode = #tpu.pipeline_mode<synchronous>, transform_indices = @transform_2, window_bounds = array<i64: 1, 2048>}, {pipeline_mode = #tpu.pipeline_mode<synchronous>, transform_indices = @transform_3, window_bounds = array<i64: 2048, 128>}, {pipeline_mode = #tpu.pipeline_mode<synchronous>, transform_indices = @transform_4, window_bounds = array<i64: 1, 128>}, {transform_indices = @transform_5, window_bounds = array<i64: 8, 256>}]} {
    %c0 = arith.constant 0 : index
    %c0_0 = arith.constant 0 : index
    %0 = vector.load %arg1[%c0, %c0_0] : memref<16x512xbf16, #tpu.memory_space<vmem>>, vector<16x512xbf16>
    %c0_1 = arith.constant 0 : index
    %c0_2 = arith.constant 0 : index
    %1 = vector.load %arg2[%c0_1, %c0_2] : memref<512x2048xbf16, #tpu.memory_space<vmem>>, vector<512x2048xbf16>
    %cst = arith.constant dense<0.000000e+00> : vector<16x2048xf32>
    %2 = tpu.matmul %0, %1, %cst {dimension_numbers = #tpu.dot_dimension_numbers<[1], [0], [0], [1], [0, 0, 1, 1], [], []>} : vector<16x512xbf16>, vector<512x2048xbf16>, vector<16x2048xf32> -> vector<16x2048xf32>
    %c0_3 = arith.constant 0 : index
    %c0_4 = arith.constant 0 : index
    %3 = vector.load %arg3[%c0_3, %c0_4] : memref<1x2048xf32, #tpu.memory_space<vmem>>, vector<1x2048xf32>
    %4 = vector.broadcast %3 : vector<1x2048xf32> to vector<16x2048xf32>
    %5 = arith.addf %2, %4 : vector<16x2048xf32>
    %cst_5 = arith.constant 0.00999999977 : f32
    %6 = vector.broadcast %cst_5 : f32 to vector<16x2048xf32>
    %7 = arith.mulf %6, %5 : vector<16x2048xf32>
    %8 = arith.maximumf %5, %7 : vector<16x2048xf32>
    %9 = arith.truncf %8 : vector<16x2048xf32> to vector<16x2048xbf16>
    %c0_6 = arith.constant 0 : index
    %c0_7 = arith.constant 0 : index
    %10 = vector.load %arg4[%c0_6, %c0_7] : memref<2048x128xbf16, #tpu.memory_space<vmem>>, vector<2048x128xbf16>
    %cst_8 = arith.constant dense<0.000000e+00> : vector<16x128xf32>
    %11 = tpu.matmul %9, %10, %cst_8 {dimension_numbers = #tpu.dot_dimension_numbers<[1], [0], [0], [1], [0, 0, 1, 1], [], []>} : vector<16x2048xbf16>, vector<2048x128xbf16>, vector<16x128xf32> -> vector<16x128xf32>
    %c0_9 = arith.constant 0 : index
    %c0_10 = arith.constant 0 : index
    %12 = vector.load %arg5[%c0_9, %c0_10] : memref<1x128xf32, #tpu.memory_space<vmem>>, vector<1x128xf32>
    %13 = vector.broadcast %12 : vector<1x128xf32> to vector<16x128xf32>
    %14 = arith.addf %11, %13 : vector<16x128xf32>
    %cst_11 = arith.constant 0.00999999977 : f32
    %15 = vector.broadcast %cst_11 : f32 to vector<16x128xf32>
    %16 = arith.mulf %15, %14 : vector<16x128xf32>
    %17 = arith.maximumf %14, %16 : vector<16x128xf32>
    %18 = arith.truncf %17 : vector<16x128xf32> to vector<16x128xbf16>
    %19 = vector.extract_strided_slice %18 {offsets = [0, 0], sizes = [8, 128], strides = [1, 1]} : vector<16x128xbf16> to vector<8x128xbf16>
    %c0_12 = arith.constant 0 : index
    %c0_13 = arith.constant 0 : index
    %20 = vector.load %arg6[%c0_12, %c0_13] : memref<8x256xbf16, #tpu.memory_space<vmem>>, vector<8x128xbf16>
    tpu.vector_store %arg6[%c0_12, %c0_13], %19 {strides = array<i32>} : memref<8x256xbf16, #tpu.memory_space<vmem>>, vector<8x128xbf16>,
    %21 = vector.extract_strided_slice %18 {offsets = [8, 0], sizes = [8, 128], strides = [1, 1]} : vector<16x128xbf16> to vector<8x128xbf16>
    %c0_14 = arith.constant 0 : index
    %c128 = arith.constant 128 : index
    %22 = vector.load %arg6[%c0_14, %c128] : memref<8x256xbf16, #tpu.memory_space<vmem>>, vector<8x128xbf16>
    tpu.vector_store %arg6[%c0_14, %c128], %21 {strides = array<i32>} : memref<8x256xbf16, #tpu.memory_space<vmem>>, vector<8x128xbf16>,
    return
  }
  func.func @transform_0(%arg0: i32) -> (i32, i32) {
    %c0_i32 = arith.constant 0 : i32
    %c0_i32_0 = arith.constant 0 : i32
    return %arg0, %c0_i32 : i32, i32
  }
  func.func @transform_1(%arg0: i32) -> (i32, i32) {
    %c0_i32 = arith.constant 0 : i32
    %c0_i32_0 = arith.constant 0 : i32
    %c0_i32_1 = arith.constant 0 : i32
    return %c0_i32, %c0_i32_0 : i32, i32
  }
  func.func @transform_2(%arg0: i32) -> (i32, i32) {
    %c0_i32 = arith.constant 0 : i32
    %c0_i32_0 = arith.constant 0 : i32
    %c0_i32_1 = arith.constant 0 : i32
    return %c0_i32, %c0_i32_0 : i32, i32
  }
  func.func @transform_3(%arg0: i32) -> (i32, i32) {
    %c0_i32 = arith.constant 0 : i32
    %c0_i32_0 = arith.constant 0 : i32
    %c0_i32_1 = arith.constant 0 : i32
    return %c0_i32, %c0_i32_0 : i32, i32
  }
  func.func @transform_4(%arg0: i32) -> (i32, i32) {
    %c0_i32 = arith.constant 0 : i32
    %c0_i32_0 = arith.constant 0 : i32
    %c0_i32_1 = arith.constant 0 : i32
    return %c0_i32, %c0_i32_0 : i32, i32
  }
  func.func @transform_5(%arg0: i32) -> (i32, i32) {
    %c0_i32 = arith.constant 0 : i32
    %c0_i32_0 = arith.constant 0 : i32
    return %c0_i32, %arg0 : i32, i32
  }
}

</mosaic_0001>

<llo_original>
// kernel: tpu_custom_call.1
$region0: #{tpu_custom_call.1}
  #allocation0 [shape = 'u32[]', space=smem, size = 0x4, offset = 0x4, fixed_abs, tag = 'smem constant byte address 0x4 - core index']
  #allocation1 [shape = 'u32[144,128]{1,0:T(1,128)}', space=vmem, size = 0x12000, scoped, tag = 'internal scratch']
  %s0 = inlined_call_operand.hbm [shape: bf16[16,512], index: 0, kind: input, shape index: {}]
  %s1 = inlined_call_operand.hbm [shape: bf16[512,2048], index: 1, kind: input, shape index: {}]
  %s2 = inlined_call_operand.hbm [shape: f32[1,2048], index: 2, kind: input, shape index: {}]
  %s3 = inlined_call_operand.hbm [shape: bf16[2048,128], index: 3, kind: input, shape index: {}]
  %s4 = inlined_call_operand.hbm [shape: f32[1,128], index: 4, kind: input, shape index: {}]
  %s5 = inlined_call_operand.hbm [shape: bf16[8,256], index: 5, kind: output, shape index: {}]
  %s6 = sld [smem:[#allocation0]]
  $region50: #{tpu_custom_call.1} parent=0
    _
  %s8 = ssub.s32 1, %s6
  %s9 = scalar_select 0, %s8, %s6
  $region1: #{tpu_custom_call.1} parent=0
    #allocation2 [shape = 'u8[16384]{0}', space=vmem, size = 0x4000, scoped, tag = 'input window, operand 0, single buffered']
    #allocation3 [shape = 's32[1]{0}', space=sflag, size = 0x4, scoped, tag = 'scoped memory for tpu_custom_call.1']
    #allocation4 [shape = 's32[1]{0}', space=sflag, size = 0x4, scoped, tag = 'scoped memory for tpu_custom_call.1']
    #allocation5 [shape = 'u8[2097152]{0}', space=vmem, size = 0x200000, scoped, tag = 'input window, operand 1, single buffered']
    #allocation6 [shape = 's32[1]{0}', space=sflag, size = 0x4, scoped, tag = 'scoped memory for tpu_custom_call.1']
    #allocation7 [shape = 'u8[8192]{0}', space=vmem, size = 0x2000, scoped, tag = 'input window, operand 2, single buffered']
    #allocation8 [shape = 'u8[524288]{0}', space=vmem, size = 0x80000, scoped, tag = 'input window, operand 3, single buffered']
    #allocation9 [shape = 's32[1]{0}', space=sflag, size = 0x4, scoped, tag = 'scoped memory for tpu_custom_call.1']
    #allocation10 [shape = 'u8[512]{0}', space=vmem, size = 0x400, scoped, tag = 'input window, operand 4, single buffered']
    #allocation11 [shape = 'u8[4096]{0}', space=vmem, size = 0x1000, scoped, tag = 'output window, operand 0, single buffered']
    %10 = vsyncpa [#allocation3], 0
    %11 = vsyncpa [#allocation6], 0
    %12 = vsyncpa [#allocation9], 0
    %13 = vsyncpa [#allocation4], 0
    // Predicated region
    $region2: #{tpu_custom_call.1} parent=1 // pred_check
      _
    $region3: #{tpu_custom_call.1} parent=1 // pred_check_branch
      %15 = sbr.rel (0) target = $region5
    $region4: #{tpu_custom_call.1} parent=1 // pred_region
      %s17 = ssub.s32 512, 512
      %18 = vsyncadd [#allocation3], %s17
      %s19 = sshll.u32 [#allocation2], 4
      %s20 = int_to_ptr.vmem [resolvable:$true] %s19
      %25 = dma.hbm_to_vmem [thread:$0]  %s0, 512, %s20, [#allocation3], 256, 256, 16
    $region5: #{tpu_custom_call.1} parent=1 // pred_fallthru
      _
    // Predicated region
    $region6: #{tpu_custom_call.1} parent=1 // pred_check
      _
    $region7: #{tpu_custom_call.1} parent=1 // pred_check_branch
      %27 = sbr.rel (0) target = $region9
    $region8: #{tpu_custom_call.1} parent=1 // pred_region
      %s29 = ssub.s32 65536, 65536
      %30 = vsyncadd [#allocation6], %s29
      %s31 = sshll.u32 [#allocation5], 4
      %s32 = int_to_ptr.vmem [resolvable:$true] %s31
      %37 = dma.hbm_to_vmem [thread:$0]  %s1, 65536, %s32, [#allocation6], 1024, 1024, 64
    $region9: #{tpu_custom_call.1} parent=1 // pred_fallthru
      _
    // Predicated region
    $region10: #{tpu_custom_call.1} parent=1 // pred_check
      _
    $region11: #{tpu_custom_call.1} parent=1 // pred_check_branch
      %39 = sbr.rel (0) target = $region13
    $region12: #{tpu_custom_call.1} parent=1 // pred_region
      %s41 = ssub.s32 256, 256
      %42 = vsyncadd [#allocation6], %s41
      %s44 = sshll.u32 [#allocation7], 4
      %s45 = int_to_ptr.vmem [resolvable:$true] %s44
      %47 = dma.hbm_to_vmem [thread:$0]  %s2, 256, %s45, [#allocation6]
    $region13: #{tpu_custom_call.1} parent=1 // pred_fallthru
      _
    // Predicated region
    $region14: #{tpu_custom_call.1} parent=1 // pred_check
      _
    $region15: #{tpu_custom_call.1} parent=1 // pred_check_branch
      %49 = sbr.rel (0) target = $region17
    $region16: #{tpu_custom_call.1} parent=1 // pred_region
      %s51 = ssub.s32 16384, 16384
      %52 = vsyncadd [#allocation9], %s51
      %s53 = sshll.u32 [#allocation8], 4
      %s54 = int_to_ptr.vmem [resolvable:$true] %s53
      %59 = dma.hbm_to_vmem [thread:$0]  %s3, 16384, %s54, [#allocation9], 64, 64, 4
    $region17: #{tpu_custom_call.1} parent=1 // pred_fallthru
      _
    // Predicated region
    $region18: #{tpu_custom_call.1} parent=1 // pred_check
      _
    $region19: #{tpu_custom_call.1} parent=1 // pred_check_branch
      %61 = sbr.rel (0) target = $region21
    $region20: #{tpu_custom_call.1} parent=1 // pred_region
      %s63 = ssub.s32 16, 16
      %64 = vsyncadd [#allocation9], %s63
      %s66 = sshll.u32 [#allocation10], 4
      %s67 = int_to_ptr.vmem [resolvable:$true] %s66
      %69 = dma.hbm_to_vmem [thread:$0]  %s4, 16, %s67, [#allocation9]
    $region21: #{tpu_custom_call.1} parent=1 // pred_fallthru
      _
    // Predicated region
    $region22: #{tpu_custom_call.1} parent=1 // pred_check
      _
    $region23: #{tpu_custom_call.1} parent=1 // pred_check_branch
      %71 = sbr.rel (0) target = $region25
    $region24: #{tpu_custom_call.1} parent=1 // pred_region
      %72 = dma.done [#allocation3], 512
    $region25: #{tpu_custom_call.1} parent=1 // pred_fallthru
      _
    // Predicated region
    $region26: #{tpu_custom_call.1} parent=1 // pred_check
      _
    $region27: #{tpu_custom_call.1} parent=1 // pred_check_branch
      %74 = sbr.rel (0) target = $region29
    $region28: #{tpu_custom_call.1} parent=1 // pred_region
      %75 = dma.done [#allocation6], 65536
    $region29: #{tpu_custom_call.1} parent=1 // pred_fallthru
      _
    // Predicated region
    $region30: #{tpu_custom_call.1} parent=1 // pred_check
      _
    $region31: #{tpu_custom_call.1} parent=1 // pred_check_branch
      %77 = sbr.rel (0) target = $region33
    $region32: #{tpu_custom_call.1} parent=1 // pred_region
      %78 = dma.done [#allocation6], 256
    $region33: #{tpu_custom_call.1} parent=1 // pred_fallthru
      _
    // Predicated region
    $region34: #{tpu_custom_call.1} parent=1 // pred_check
      _
    $region35: #{tpu_custom_call.1} parent=1 // pred_check_branch
      %80 = sbr.rel (0) target = $region37
    $region36: #{tpu_custom_call.1} parent=1 // pred_region
      %81 = dma.done [#allocation9], 16384
    $region37: #{tpu_custom_call.1} parent=1 // pred_fallthru
      _
    // Predicated region
    $region38: #{tpu_custom_call.1} parent=1 // pred_check
      _
    $region39: #{tpu_custom_call.1} parent=1 // pred_check_branch
      %83 = sbr.rel (0) target = $region41
    $region40: #{tpu_custom_call.1} parent=1 // pred_region
      %84 = dma.done [#allocation9], 16
    $region41: #{tpu_custom_call.1} parent=1 // pred_fallthru
      _
    %v86 = vld [vmem:[#allocation2] sm:$0xff]
    %v87 = vld [vmem:[#allocation2 + $0x8] sm:$0xff]
    %v88 = vld [vmem:[#allocation2 + $0x10] sm:$0xff]
    %v89 = vld [vmem:[#allocation2 + $0x18] sm:$0xff]
    %v90 = vld [vmem:[#allocation5] sm:$0xff]
    %v91 = vld [vmem:[#allocation5 + $0x8] sm:$0xff]
    %v92 = vld [vmem:[#allocation5 + $0x10] sm:$0xff]
    %v93 = vld [vmem:[#allocation5 + $0x18] sm:$0xff]
    %v94 = vld [vmem:[#allocation5 + $0x20] sm:$0xff]
    %v95 = vld [vmem:[#allocation5 + $0x28] sm:$0xff]
    %v96 = vld [vmem:[#allocation5 + $0x30] sm:$0xff]
    %v97 = vld [vmem:[#allocation5 + $0x38] sm:$0xff]
    %v98 = vld [vmem:[#allocation5 + $0x40] sm:$0xff]
    %v99 = vld [vmem:[#allocation5 + $0x48] sm:$0xff]
    %v100 = vld [vmem:[#allocation5 + $0x50] sm:$0xff]
    %v101 = vld [vmem:[#allocation5 + $0x58] sm:$0xff]
    %v102 = vld [vmem:[#allocation5 + $0x60] sm:$0xff]
    %v103 = vld [vmem:[#allocation5 + $0x68] sm:$0xff]
    %v104 = vld [vmem:[#allocation5 + $0x70] sm:$0xff]
    %v105 = vld [vmem:[#allocation5 + $0x78] sm:$0xff]
    %v106 = vld [vmem:[#allocation5 + $0x80] sm:$0xff]
    %v107 = vld [vmem:[#allocation5 + $0x88] sm:$0xff]
    %v108 = vld [vmem:[#allocation5 + $0x90] sm:$0xff]
    %v109 = vld [vmem:[#allocation5 + $0x98] sm:$0xff]
    %v110 = vld [vmem:[#allocation5 + $0xa0] sm:$0xff]
    %v111 = vld [vmem:[#allocation5 + $0xa8] sm:$0xff]
    %v112 = vld [vmem:[#allocation5 + $0xb0] sm:$0xff]
    %v113 = vld [vmem:[#allocation5 + $0xb8] sm:$0xff]
    %v114 = vld [vmem:[#allocation5 + $0xc0] sm:$0xff]
    %v115 = vld [vmem:[#allocation5 + $0xc8] sm:$0xff]
    %v116 = vld [vmem:[#allocation5 + $0xd0] sm:$0xff]
    %v117 = vld [vmem:[#allocation5 + $0xd8] sm:$0xff]
    %v118 = vld [vmem:[#allocation5 + $0xe0] sm:$0xff]
    %v119 = vld [vmem:[#allocation5 + $0xe8] sm:$0xff]
    %v120 = vld [vmem:[#allocation5 + $0xf0] sm:$0xff]
    %v121 = vld [vmem:[#allocation5 + $0xf8] sm:$0xff]
    %v122 = vld [vmem:[#allocation5 + $0x100] sm:$0xff]
    %v123 = vld [vmem:[#allocation5 + $0x108] sm:$0xff]
    %v124 = vld [vmem:[#allocation5 + $0x110] sm:$0xff]
    %v125 = vld [vmem:[#allocation5 + $0x118] sm:$0xff]
    %v126 = vld [vmem:[#allocation5 + $0x120] sm:$0xff]
    %v127 = vld [vmem:[#allocation5 + $0x128] sm:$0xff]
    %v128 = vld [vmem:[#allocation5 + $0x130] sm:$0xff]
    %v129 = vld [vmem:[#allocation5 + $0x138] sm:$0xff]
    %v130 = vld [vmem:[#allocation5 + $0x140] sm:$0xff]
    %v131 = vld [vmem:[#allocation5 + $0x148] sm:$0xff]
    %v132 = vld [vmem:[#allocation5 + $0x150] sm:$0xff]
    %v133 = vld [vmem:[#allocation5 + $0x158] sm:$0xff]
    %v134 = vld [vmem:[#allocation5 + $0x160] sm:$0xff]
    %v135 = vld [vmem:[#allocation5 + $0x168] sm:$0xff]
    %v136 = vld [vmem:[#allocation5 + $0x170] sm:$0xff]
    %v137 = vld [vmem:[#allocation5 + $0x178] sm:$0xff]
    %v138 = vld [vmem:[#allocation5 + $0x180] sm:$0xff]
    %v139 = vld [vmem:[#allocation5 + $0x188] sm:$0xff]
    %v140 = vld [vmem:[#allocation5 + $0x190] sm:$0xff]
    %v141 = vld [vmem:[#allocation5 + $0x198] sm:$0xff]
    %v142 = vld [vmem:[#allocation5 + $0x1a0] sm:$0xff]
    %v143 = vld [vmem:[#allocation5 + $0x1a8] sm:$0xff]
    %v144 = vld [vmem:[#allocation5 + $0x1b0] sm:$0xff]
    %v145 = vld [vmem:[#allocation5 + $0x1b8] sm:$0xff]
    %v146 = vld [vmem:[#allocation5 + $0x1c0] sm:$0xff]
    %v147 = vld [vmem:[#allocation5 + $0x1c8] sm:$0xff]
    %v148 = vld [vmem:[#allocation5 + $0x1d0] sm:$0xff]
    %v149 = vld [vmem:[#allocation5 + $0x1d8] sm:$0xff]
    %v150 = vld [vmem:[#allocation5 + $0x1e0] sm:$0xff]
    %v151 = vld [vmem:[#allocation5 + $0x1e8] sm:$0xff]
    %v152 = vld [vmem:[#allocation5 + $0x1f0] sm:$0xff]
    %v153 = vld [vmem:[#allocation5 + $0x1f8] sm:$0xff]
    %v154 = vld [vmem:[#allocation5 + $0x200] sm:$0xff]
    %v155 = vld [vmem:[#allocation5 + $0x208] sm:$0xff]
    %v156 = vld [vmem:[#allocation5 + $0x210] sm:$0xff]
    %v157 = vld [vmem:[#allocation5 + $0x218] sm:$0xff]
    %v158 = vld [vmem:[#allocation5 + $0x220] sm:$0xff]
    %v159 = vld [vmem:[#allocation5 + $0x228] sm:$0xff]
    %v160 = vld [vmem:[#allocation5 + $0x230] sm:$0xff]
    %v161 = vld [vmem:[#allocation5 + $0x238] sm:$0xff]
    %v162 = vld [vmem:[#allocation5 + $0x240] sm:$0xff]
    %v163 = vld [vmem:[#allocation5 + $0x248] sm:$0xff]
    %v164 = vld [vmem:[#allocation5 + $0x250] sm:$0xff]
    %v165 = vld [vmem:[#allocation5 + $0x258] sm:$0xff]
    %v166 = vld [vmem:[#allocation5 + $0x260] sm:$0xff]
    %v167 = vld [vmem:[#allocation5 + $0x268] sm:$0xff]
    %v168 = vld [vmem:[#allocation5 + $0x270] sm:$0xff]
    %v169 = vld [vmem:[#allocation5 + $0x278] sm:$0xff]
    %v170 = vld [vmem:[#allocation5 + $0x280] sm:$0xff]
    %v171 = vld [vmem:[#allocation5 + $0x288] sm:$0xff]
    %v172 = vld [vmem:[#allocation5 + $0x290] sm:$0xff]
    %v173 = vld [vmem:[#allocation5 + $0x298] sm:$0xff]
    %v174 = vld [vmem:[#allocation5 + $0x2a0] sm:$0xff]
    %v175 = vld [vmem:[#allocation5 + $0x2a8] sm:$0xff]
    %v176 = vld [vmem:[#allocation5 + $0x2b0] sm:$0xff]
    %v177 = vld [vmem:[#allocation5 + $0x2b8] sm:$0xff]
    %v178 = vld [vmem:[#allocation5 + $0x2c0] sm:$0xff]
    %v179 = vld [vmem:[#allocation5 + $0x2c8] sm:$0xff]
    %v180 = vld [vmem:[#allocation5 + $0x2d0] sm:$0xff]
    %v181 = vld [vmem:[#allocation5 + $0x2d8] sm:$0xff]
    %v182 = vld [vmem:[#allocation5 + $0x2e0] sm:$0xff]
    %v183 = vld [vmem:[#allocation5 + $0x2e8] sm:$0xff]
    %v184 = vld [vmem:[#allocation5 + $0x2f0] sm:$0xff]
    %v185 = vld [vmem:[#allocation5 + $0x2f8] sm:$0xff]
    %v186 = vld [vmem:[#allocation5 + $0x300] sm:$0xff]
    %v187 = vld [vmem:[#allocation5 + $0x308] sm:$0xff]
    %v188 = vld [vmem:[#allocation5 + $0x310] sm:$0xff]
    %v189 = vld [vmem:[#allocation5 + $0x318] sm:$0xff]
    %v190 = vld [vmem:[#allocation5 + $0x320] sm:$0xff]
    %v191 = vld [vmem:[#allocation5 + $0x328] sm:$0xff]
    %v192 = vld [vmem:[#allocation5 + $0x330] sm:$0xff]
    %v193 = vld [vmem:[#allocation5 + $0x338] sm:$0xff]
    %v194 = vld [vmem:[#allocation5 + $0x340] sm:$0xff]
    %v195 = vld [vmem:[#allocation5 + $0x348] sm:$0xff]
    %v196 = vld [vmem:[#allocation5 + $0x350] sm:$0xff]
    %v197 = vld [vmem:[#allocation5 + $0x358] sm:$0xff]
    %v198 = vld [vmem:[#allocation5 + $0x360] sm:$0xff]
    %v199 = vld [vmem:[#allocation5 + $0x368] sm:$0xff]
    %v200 = vld [vmem:[#allocation5 + $0x370] sm:$0xff]
    %v201 = vld [vmem:[#allocation5 + $0x378] sm:$0xff]
    %v202 = vld [vmem:[#allocation5 + $0x380] sm:$0xff]
    %v203 = vld [vmem:[#allocation5 + $0x388] sm:$0xff]
    %v204 = vld [vmem:[#allocation5 + $0x390] sm:$0xff]
    %v205 = vld [vmem:[#allocation5 + $0x398] sm:$0xff]
    %v206 = vld [vmem:[#allocation5 + $0x3a0] sm:$0xff]
    %v207 = vld [vmem:[#allocation5 + $0x3a8] sm:$0xff]
    %v208 = vld [vmem:[#allocation5 + $0x3b0] sm:$0xff]
    %v209 = vld [vmem:[#allocation5 + $0x3b8] sm:$0xff]
    %v210 = vld [vmem:[#allocation5 + $0x3c0] sm:$0xff]
    %v211 = vld [vmem:[#allocation5 + $0x3c8] sm:$0xff]
    %v212 = vld [vmem:[#allocation5 + $0x3d0] sm:$0xff]
    %v213 = vld [vmem:[#allocation5 + $0x3d8] sm:$0xff]
    %v214 = vld [vmem:[#allocation5 + $0x3e0] sm:$0xff]
    %v215 = vld [vmem:[#allocation5 + $0x3e8] sm:$0xff]
    %v216 = vld [vmem:[#allocation5 + $0x3f0] sm:$0xff]
    %v217 = vld [vmem:[#allocation5 + $0x3f8] sm:$0xff]
    %v218 = vld [vmem:[#allocation5 + $0x400] sm:$0xff]
    %v219 = vld [vmem:[#allocation5 + $0x408] sm:$0xff]
    %v220 = vld [vmem:[#allocation5 + $0x410] sm:$0xff]
    %v221 = vld [vmem:[#allocation5 + $0x418] sm:$0xff]
    %v222 = vld [vmem:[#allocation5 + $0x420] sm:$0xff]
    %v223 = vld [vmem:[#allocation5 + $0x428] sm:$0xff]
    %v224 = vld [vmem:[#allocation5 + $0x430] sm:$0xff]
    %v225 = vld [vmem:[#allocation5 + $0x438] sm:$0xff]
    %v226 = vld [vmem:[#allocation5 + $0x440] sm:$0xff]
    %v227 = vld [vmem:[#allocation5 + $0x448] sm:$0xff]
    %v228 = vld [vmem:[#allocation5 + $0x450] sm:$0xff]
    %v229 = vld [vmem:[#allocation5 + $0x458] sm:$0xff]
    %v230 = vld [vmem:[#allocation5 + $0x460] sm:$0xff]
    %v231 = vld [vmem:[#allocation5 + $0x468] sm:$0xff]
    %v232 = vld [vmem:[#allocation5 + $0x470] sm:$0xff]
    %v233 = vld [vmem:[#allocation5 + $0x478] sm:$0xff]
    %v234 = vld [vmem:[#allocation5 + $0x480] sm:$0xff]
    %v235 = vld [vmem:[#allocation5 + $0x488] sm:$0xff]
    %v236 = vld [vmem:[#allocation5 + $0x490] sm:$0xff]
    %v237 = vld [vmem:[#allocation5 + $0x498] sm:$0xff]
    %v238 = vld [vmem:[#allocation5 + $0x4a0] sm:$0xff]
    %v239 = vld [vmem:[#allocation5 + $0x4a8] sm:$0xff]
    %v240 = vld [vmem:[#allocation5 + $0x4b0] sm:$0xff]
    %v241 = vld [vmem:[#allocation5 + $0x4b8] sm:$0xff]
    %v242 = vld [vmem:[#allocation5 + $0x4c0] sm:$0xff]
    %v243 = vld [vmem:[#allocation5 + $0x4c8] sm:$0xff]
    %v244 = vld [vmem:[#allocation5 + $0x4d0] sm:$0xff]
    %v245 = vld [vmem:[#allocation5 + $0x4d8] sm:$0xff]
    %v246 = vld [vmem:[#allocation5 + $0x4e0] sm:$0xff]
    %v247 = vld [vmem:[#allocation5 + $0x4e8] sm:$0xff]
    %v248 = vld [vmem:[#allocation5 + $0x4f0] sm:$0xff]
    %v249 = vld [vmem:[#allocation5 + $0x4f8] sm:$0xff]
    %v250 = vld [vmem:[#allocation5 + $0x500] sm:$0xff]
    %v251 = vld [vmem:[#allocation5 + $0x508] sm:$0xff]
    %v252 = vld [vmem:[#allocation5 + $0x510] sm:$0xff]
    %v253 = vld [vmem:[#allocation5 + $0x518] sm:$0xff]
    %v254 = vld [vmem:[#allocation5 + $0x520] sm:$0xff]
    %v255 = vld [vmem:[#allocation5 + $0x528] sm:$0xff]
    %v256 = vld [vmem:[#allocation5 + $0x530] sm:$0xff]
    %v257 = vld [vmem:[#allocation5 + $0x538] sm:$0xff]
    %v258 = vld [vmem:[#allocation5 + $0x540] sm:$0xff]
    %v259 = vld [vmem:[#allocation5 + $0x548] sm:$0xff]
    %v260 = vld [vmem:[#allocation5 + $0x550] sm:$0xff]
    %v261 = vld [vmem:[#allocation5 + $0x558] sm:$0xff]
    %v262 = vld [vmem:[#allocation5 + $0x560] sm:$0xff]
    %v263 = vld [vmem:[#allocation5 + $0x568] sm:$0xff]
    %v264 = vld [vmem:[#allocation5 + $0x570] sm:$0xff]
    %v265 = vld [vmem:[#allocation5 + $0x578] sm:$0xff]
    %v266 = vld [vmem:[#allocation5 + $0x580] sm:$0xff]
    %v267 = vld [vmem:[#allocation5 + $0x588] sm:$0xff]
    %v268 = vld [vmem:[#allocation5 + $0x590] sm:$0xff]
    %v269 = vld [vmem:[#allocation5 + $0x598] sm:$0xff]
    %v270 = vld [vmem:[#allocation5 + $0x5a0] sm:$0xff]
    %v271 = vld [vmem:[#allocation5 + $0x5a8] sm:$0xff]
    %v272 = vld [vmem:[#allocation5 + $0x5b0] sm:$0xff]
    %v273 = vld [vmem:[#allocation5 + $0x5b8] sm:$0xff]
    %v274 = vld [vmem:[#allocation5 + $0x5c0] sm:$0xff]
    %v275 = vld [vmem:[#allocation5 + $0x5c8] sm:$0xff]
    %v276 = vld [vmem:[#allocation5 + $0x5d0] sm:$0xff]
    %v277 = vld [vmem:[#allocation5 + $0x5d8] sm:$0xff]
    %v278 = vld [vmem:[#allocation5 + $0x5e0] sm:$0xff]
    %v279 = vld [vmem:[#allocation5 + $0x5e8] sm:$0xff]
    %v280 = vld [vmem:[#allocation5 + $0x5f0] sm:$0xff]
    %v281 = vld [vmem:[#allocation5 + $0x5f8] sm:$0xff]
    %v282 = vld [vmem:[#allocation5 + $0x600] sm:$0xff]
    %v283 = vld [vmem:[#allocation5 + $0x608] sm:$0xff]
    %v284 = vld [vmem:[#allocation5 + $0x610] sm:$0xff]
    %v285 = vld [vmem:[#allocation5 + $0x618] sm:$0xff]
    %v286 = vld [vmem:[#allocation5 + $0x620] sm:$0xff]
    %v287 = vld [vmem:[#allocation5 + $0x628] sm:$0xff]
    %v288 = vld [vmem:[#allocation5 + $0x630] sm:$0xff]
    %v289 = vld [vmem:[#allocation5 + $0x638] sm:$0xff]
    %v290 = vld [vmem:[#allocation5 + $0x640] sm:$0xff]
    %v291 = vld [vmem:[#allocation5 + $0x648] sm:$0xff]
    %v292 = vld [vmem:[#allocation5 + $0x650] sm:$0xff]
    %v293 = vld [vmem:[#allocation5 + $0x658] sm:$0xff]
    %v294 = vld [vmem:[#allocation5 + $0x660] sm:$0xff]
    %v295 = vld [vmem:[#allocation5 + $0x668] sm:$0xff]
    %v296 = vld [vmem:[#allocation5 + $0x670] sm:$0xff]
    %v297 = vld [vmem:[#allocation5 + $0x678] sm:$0xff]
    %v298 = vld [vmem:[#allocation5 + $0x680] sm:$0xff]
    %v299 = vld [vmem:[#allocation5 + $0x688] sm:$0xff]
    %v300 = vld [vmem:[#allocation5 + $0x690] sm:$0xff]
    %v301 = vld [vmem:[#allocation5 + $0x698] sm:$0xff]
    %v302 = vld [vmem:[#allocation5 + $0x6a0] sm:$0xff]
    %v303 = vld [vmem:[#allocation5 + $0x6a8] sm:$0xff]
    %v304 = vld [vmem:[#allocation5 + $0x6b0] sm:$0xff]
    %v305 = vld [vmem:[#allocation5 + $0x6b8] sm:$0xff]
    %v306 = vld [vmem:[#allocation5 + $0x6c0] sm:$0xff]
    %v307 = vld [vmem:[#allocation5 + $0x6c8] sm:$0xff]
    %v308 = vld [vmem:[#allocation5 + $0x6d0] sm:$0xff]
    %v309 = vld [vmem:[#allocation5 + $0x6d8] sm:$0xff]
    %v310 = vld [vmem:[#allocation5 + $0x6e0] sm:$0xff]
    %v311 = vld [vmem:[#allocation5 + $0x6e8] sm:$0xff]
    %v312 = vld [vmem:[#allocation5 + $0x6f0] sm:$0xff]
    %v313 = vld [vmem:[#allocation5 + $0x6f8] sm:$0xff]
    %v314 = vld [vmem:[#allocation5 + $0x700] sm:$0xff]
    %v315 = vld [vmem:[#allocation5 + $0x708] sm:$0xff]
    %v316 = vld [vmem:[#allocation5 + $0x710] sm:$0xff]
    %v317 = vld [vmem:[#allocation5 + $0x718] sm:$0xff]
    %v318 = vld [vmem:[#allocation5 + $0x720] sm:$0xff]
    %v319 = vld [vmem:[#allocation5 + $0x728] sm:$0xff]
    %v320 = vld [vmem:[#allocation5 + $0x730] sm:$0xff]
    %v321 = vld [vmem:[#allocation5 + $0x738] sm:$0xff]
    %v322 = vld [vmem:[#allocation5 + $0x740] sm:$0xff]
    %v323 = vld [vmem:[#allocation5 + $0x748] sm:$0xff]
    %v324 = vld [vmem:[#allocation5 + $0x750] sm:$0xff]
    %v325 = vld [vmem:[#allocation5 + $0x758] sm:$0xff]
    %v326 = vld [vmem:[#allocation5 + $0x760] sm:$0xff]
    %v327 = vld [vmem:[#allocation5 + $0x768] sm:$0xff]
    %v328 = vld [vmem:[#allocation5 + $0x770] sm:$0xff]
    %v329 = vld [vmem:[#allocation5 + $0x778] sm:$0xff]
    %v330 = vld [vmem:[#allocation5 + $0x780] sm:$0xff]
    %v331 = vld [vmem:[#allocation5 + $0x788] sm:$0xff]
    %v332 = vld [vmem:[#allocation5 + $0x790] sm:$0xff]
    %v333 = vld [vmem:[#allocation5 + $0x798] sm:$0xff]
    %v334 = vld [vmem:[#allocation5 + $0x7a0] sm:$0xff]
    %v335 = vld [vmem:[#allocation5 + $0x7a8] sm:$0xff]
    %v336 = vld [vmem:[#allocation5 + $0x7b0] sm:$0xff]
    %v337 = vld [vmem:[#allocation5 + $0x7b8] sm:$0xff]
    %v338 = vld [vmem:[#allocation5 + $0x7c0] sm:$0xff]
    %v339 = vld [vmem:[#allocation5 + $0x7c8] sm:$0xff]
    %v340 = vld [vmem:[#allocation5 + $0x7d0] sm:$0xff]
    %v341 = vld [vmem:[#allocation5 + $0x7d8] sm:$0xff]
    %v342 = vld [vmem:[#allocation5 + $0x7e0] sm:$0xff]
    %v343 = vld [vmem:[#allocation5 + $0x7e8] sm:$0xff]
    %v344 = vld [vmem:[#allocation5 + $0x7f0] sm:$0xff]
    %v345 = vld [vmem:[#allocation5 + $0x7f8] sm:$0xff]
    %v346 = vld [vmem:[#allocation5 + $0x800] sm:$0xff]
    %v347 = vld [vmem:[#allocation5 + $0x808] sm:$0xff]
    %v348 = vld [vmem:[#allocation5 + $0x810] sm:$0xff]
    %v349 = vld [vmem:[#allocation5 + $0x818] sm:$0xff]
    %v350 = vld [vmem:[#allocation5 + $0x820] sm:$0xff]
    %v351 = vld [vmem:[#allocation5 + $0x828] sm:$0xff]
    %v352 = vld [vmem:[#allocation5 + $0x830] sm:$0xff]
    %v353 = vld [vmem:[#allocation5 + $0x838] sm:$0xff]
    %v354 = vld [vmem:[#allocation5 + $0x840] sm:$0xff]
    %v355 = vld [vmem:[#allocation5 + $0x848] sm:$0xff]
    %v356 = vld [vmem:[#allocation5 + $0x850] sm:$0xff]
    %v357 = vld [vmem:[#allocation5 + $0x858] sm:$0xff]
    %v358 = vld [vmem:[#allocation5 + $0x860] sm:$0xff]
    %v359 = vld [vmem:[#allocation5 + $0x868] sm:$0xff]
    %v360 = vld [vmem:[#allocation5 + $0x870] sm:$0xff]
    %v361 = vld [vmem:[#allocation5 + $0x878] sm:$0xff]
    %v362 = vld [vmem:[#allocation5 + $0x880] sm:$0xff]
    %v363 = vld [vmem:[#allocation5 + $0x888] sm:$0xff]
    %v364 = vld [vmem:[#allocation5 + $0x890] sm:$0xff]
    %v365 = vld [vmem:[#allocation5 + $0x898] sm:$0xff]
    %v366 = vld [vmem:[#allocation5 + $0x8a0] sm:$0xff]
    %v367 = vld [vmem:[#allocation5 + $0x8a8] sm:$0xff]
    %v368 = vld [vmem:[#allocation5 + $0x8b0] sm:$0xff]
    %v369 = vld [vmem:[#allocation5 + $0x8b8] sm:$0xff]
    %v370 = vld [vmem:[#allocation5 + $0x8c0] sm:$0xff]
    %v371 = vld [vmem:[#allocation5 + $0x8c8] sm:$0xff]
    %v372 = vld [vmem:[#allocation5 + $0x8d0] sm:$0xff]
    %v373 = vld [vmem:[#allocation5 + $0x8d8] sm:$0xff]
    %v374 = vld [vmem:[#allocation5 + $0x8e0] sm:$0xff]
    %v375 = vld [vmem:[#allocation5 + $0x8e8] sm:$0xff]
    %v376 = vld [vmem:[#allocation5 + $0x8f0] sm:$0xff]
    %v377 = vld [vmem:[#allocation5 + $0x8f8] sm:$0xff]
    %v378 = vld [vmem:[#allocation5 + $0x900] sm:$0xff]
    %v379 = vld [vmem:[#allocation5 + $0x908] sm:$0xff]
    %v380 = vld [vmem:[#allocation5 + $0x910] sm:$0xff]
    %v381 = vld [vmem:[#allocation5 + $0x918] sm:$0xff]
    %v382 = vld [vmem:[#allocation5 + $0x920] sm:$0xff]
    %v383 = vld [vmem:[#allocation5 + $0x928] sm:$0xff]
    %v384 = vld [vmem:[#allocation5 + $0x930] sm:$0xff]
    %v385 = vld [vmem:[#allocation5 + $0x938] sm:$0xff]
    %v386 = vld [vmem:[#allocation5 + $0x940] sm:$0xff]
    %v387 = vld [vmem:[#allocation5 + $0x948] sm:$0xff]
    %v388 = vld [vmem:[#allocation5 + $0x950] sm:$0xff]
    %v389 = vld [vmem:[#allocation5 + $0x958] sm:$0xff]
    %v390 = vld [vmem:[#allocation5 + $0x960] sm:$0xff]
    %v391 = vld [vmem:[#allocation5 + $0x968] sm:$0xff]
    %v392 = vld [vmem:[#allocation5 + $0x970] sm:$0xff]
    %v393 = vld [vmem:[#allocation5 + $0x978] sm:$0xff]
    %v394 = vld [vmem:[#allocation5 + $0x980] sm:$0xff]
    %v395 = vld [vmem:[#allocation5 + $0x988] sm:$0xff]
    %v396 = vld [vmem:[#allocation5 + $0x990] sm:$0xff]
    %v397 = vld [vmem:[#allocation5 + $0x998] sm:$0xff]
    %v398 = vld [vmem:[#allocation5 + $0x9a0] sm:$0xff]
    %v399 = vld [vmem:[#allocation5 + $0x9a8] sm:$0xff]
    %v400 = vld [vmem:[#allocation5 + $0x9b0] sm:$0xff]
    %v401 = vld [vmem:[#allocation5 + $0x9b8] sm:$0xff]
    %v402 = vld [vmem:[#allocation5 + $0x9c0] sm:$0xff]
    %v403 = vld [vmem:[#allocation5 + $0x9c8] sm:$0xff]
    %v404 = vld [vmem:[#allocation5 + $0x9d0] sm:$0xff]
    %v405 = vld [vmem:[#allocation5 + $0x9d8] sm:$0xff]
    %v406 = vld [vmem:[#allocation5 + $0x9e0] sm:$0xff]
    %v407 = vld [vmem:[#allocation5 + $0x9e8] sm:$0xff]
    %v408 = vld [vmem:[#allocation5 + $0x9f0] sm:$0xff]
    %v409 = vld [vmem:[#allocation5 + $0x9f8] sm:$0xff]
    %v410 = vld [vmem:[#allocation5 + $0xa00] sm:$0xff]
    %v411 = vld [vmem:[#allocation5 + $0xa08] sm:$0xff]
    %v412 = vld [vmem:[#allocation5 + $0xa10] sm:$0xff]
    %v413 = vld [vmem:[#allocation5 + $0xa18] sm:$0xff]
    %v414 = vld [vmem:[#allocation5 + $0xa20] sm:$0xff]
    %v415 = vld [vmem:[#allocation5 + $0xa28] sm:$0xff]
    %v416 = vld [vmem:[#allocation5 + $0xa30] sm:$0xff]
    %v417 = vld [vmem:[#allocation5 + $0xa38] sm:$0xff]
    %v418 = vld [vmem:[#allocation5 + $0xa40] sm:$0xff]
    %v419 = vld [vmem:[#allocation5 + $0xa48] sm:$0xff]
    %v420 = vld [vmem:[#allocation5 + $0xa50] sm:$0xff]
    %v421 = vld [vmem:[#allocation5 + $0xa58] sm:$0xff]
    %v422 = vld [vmem:[#allocation5 + $0xa60] sm:$0xff]
    %v423 = vld [vmem:[#allocation5 + $0xa68] sm:$0xff]
    %v424 = vld [vmem:[#allocation5 + $0xa70] sm:$0xff]
    %v425 = vld [vmem:[#allocation5 + $0xa78] sm:$0xff]
    %v426 = vld [vmem:[#allocation5 + $0xa80] sm:$0xff]
    %v427 = vld [vmem:[#allocation5 + $0xa88] sm:$0xff]
    %v428 = vld [vmem:[#allocation5 + $0xa90] sm:$0xff]
    %v429 = vld [vmem:[#allocation5 + $0xa98] sm:$0xff]
    %v430 = vld [vmem:[#allocation5 + $0xaa0] sm:$0xff]
    %v431 = vld [vmem:[#allocation5 + $0xaa8] sm:$0xff]
    %v432 = vld [vmem:[#allocation5 + $0xab0] sm:$0xff]
    %v433 = vld [vmem:[#allocation5 + $0xab8] sm:$0xff]
    %v434 = vld [vmem:[#allocation5 + $0xac0] sm:$0xff]
    %v435 = vld [vmem:[#allocation5 + $0xac8] sm:$0xff]
    %v436 = vld [vmem:[#allocation5 + $0xad0] sm:$0xff]
    %v437 = vld [vmem:[#allocation5 + $0xad8] sm:$0xff]
    %v438 = vld [vmem:[#allocation5 + $0xae0] sm:$0xff]
    %v439 = vld [vmem:[#allocation5 + $0xae8] sm:$0xff]
    %v440 = vld [vmem:[#allocation5 + $0xaf0] sm:$0xff]
    %v441 = vld [vmem:[#allocation5 + $0xaf8] sm:$0xff]
    %v442 = vld [vmem:[#allocation5 + $0xb00] sm:$0xff]
    %v443 = vld [vmem:[#allocation5 + $0xb08] sm:$0xff]
    %v444 = vld [vmem:[#allocation5 + $0xb10] sm:$0xff]
    %v445 = vld [vmem:[#allocation5 + $0xb18] sm:$0xff]
    %v446 = vld [vmem:[#allocation5 + $0xb20] sm:$0xff]
    %v447 = vld [vmem:[#allocation5 + $0xb28] sm:$0xff]
    %v448 = vld [vmem:[#allocation5 + $0xb30] sm:$0xff]
    %v449 = vld [vmem:[#allocation5 + $0xb38] sm:$0xff]
    %v450 = vld [vmem:[#allocation5 + $0xb40] sm:$0xff]
    %v451 = vld [vmem:[#allocation5 + $0xb48] sm:$0xff]
    %v452 = vld [vmem:[#allocation5 + $0xb50] sm:$0xff]
    %v453 = vld [vmem:[#allocation5 + $0xb58] sm:$0xff]
    %v454 = vld [vmem:[#allocation5 + $0xb60] sm:$0xff]
    %v455 = vld [vmem:[#allocation5 + $0xb68] sm:$0xff]
    %v456 = vld [vmem:[#allocation5 + $0xb70] sm:$0xff]
    %v457 = vld [vmem:[#allocation5 + $0xb78] sm:$0xff]
    %v458 = vld [vmem:[#allocation5 + $0xb80] sm:$0xff]
    %v459 = vld [vmem:[#allocation5 + $0xb88] sm:$0xff]
    %v460 = vld [vmem:[#allocation5 + $0xb90] sm:$0xff]
    %v461 = vld [vmem:[#allocation5 + $0xb98] sm:$0xff]
    %v462 = vld [vmem:[#allocation5 + $0xba0] sm:$0xff]
    %v463 = vld [vmem:[#allocation5 + $0xba8] sm:$0xff]
    %v464 = vld [vmem:[#allocation5 + $0xbb0] sm:$0xff]
    %v465 = vld [vmem:[#allocation5 + $0xbb8] sm:$0xff]
    %v466 = vld [vmem:[#allocation5 + $0xbc0] sm:$0xff]
    %v467 = vld [vmem:[#allocation5 + $0xbc8] sm:$0xff]
    %v468 = vld [vmem:[#allocation5 + $0xbd0] sm:$0xff]
    %v469 = vld [vmem:[#allocation5 + $0xbd8] sm:$0xff]
    %v470 = vld [vmem:[#allocation5 + $0xbe0] sm:$0xff]
    %v471 = vld [vmem:[#allocation5 + $0xbe8] sm:$0xff]
    %v472 = vld [vmem:[#allocation5 + $0xbf0] sm:$0xff]
    %v473 = vld [vmem:[#allocation5 + $0xbf8] sm:$0xff]
    %v474 = vld [vmem:[#allocation5 + $0xc00] sm:$0xff]
    %v475 = vld [vmem:[#allocation5 + $0xc08] sm:$0xff]
    %v476 = vld [vmem:[#allocation5 + $0xc10] sm:$0xff]
    %v477 = vld [vmem:[#allocation5 + $0xc18] sm:$0xff]
    %v478 = vld [vmem:[#allocation5 + $0xc20] sm:$0xff]
    %v479 = vld [vmem:[#allocation5 + $0xc28] sm:$0xff]
    %v480 = vld [vmem:[#allocation5 + $0xc30] sm:$0xff]
    %v481 = vld [vmem:[#allocation5 + $0xc38] sm:$0xff]
    %v482 = vld [vmem:[#allocation5 + $0xc40] sm:$0xff]
    %v483 = vld [vmem:[#allocation5 + $0xc48] sm:$0xff]
    %v484 = vld [vmem:[#allocation5 + $0xc50] sm:$0xff]
    %v485 = vld [vmem:[#allocation5 + $0xc58] sm:$0xff]
    %v486 = vld [vmem:[#allocation5 + $0xc60] sm:$0xff]
    %v487 = vld [vmem:[#allocation5 + $0xc68] sm:$0xff]
    %v488 = vld [vmem:[#allocation5 + $0xc70] sm:$0xff]
    %v489 = vld [vmem:[#allocation5 + $0xc78] sm:$0xff]
    %v490 = vld [vmem:[#allocation5 + $0xc80] sm:$0xff]
    %v491 = vld [vmem:[#allocation5 + $0xc88] sm:$0xff]
    %v492 = vld [vmem:[#allocation5 + $0xc90] sm:$0xff]
    %v493 = vld [vmem:[#allocation5 + $0xc98] sm:$0xff]
    %v494 = vld [vmem:[#allocation5 + $0xca0] sm:$0xff]
    %v495 = vld [vmem:[#allocation5 + $0xca8] sm:$0xff]
    %v496 = vld [vmem:[#allocation5 + $0xcb0] sm:$0xff]
    %v497 = vld [vmem:[#allocation5 + $0xcb8] sm:$0xff]
    %v498 = vld [vmem:[#allocation5 + $0xcc0] sm:$0xff]
    %v499 = vld [vmem:[#allocation5 + $0xcc8] sm:$0xff]
    %v500 = vld [vmem:[#allocation5 + $0xcd0] sm:$0xff]
    %v501 = vld [vmem:[#allocation5 + $0xcd8] sm:$0xff]
    %v502 = vld [vmem:[#allocation5 + $0xce0] sm:$0xff]
    %v503 = vld [vmem:[#allocation5 + $0xce8] sm:$0xff]
    %v504 = vld [vmem:[#allocation5 + $0xcf0] sm:$0xff]
    %v505 = vld [vmem:[#allocation5 + $0xcf8] sm:$0xff]
    %v506 = vld [vmem:[#allocation5 + $0xd00] sm:$0xff]
    %v507 = vld [vmem:[#allocation5 + $0xd08] sm:$0xff]
    %v508 = vld [vmem:[#allocation5 + $0xd10] sm:$0xff]
    %v509 = vld [vmem:[#allocation5 + $0xd18] sm:$0xff]
    %v510 = vld [vmem:[#allocation5 + $0xd20] sm:$0xff]
    %v511 = vld [vmem:[#allocation5 + $0xd28] sm:$0xff]
    %v512 = vld [vmem:[#allocation5 + $0xd30] sm:$0xff]
    %v513 = vld [vmem:[#allocation5 + $0xd38] sm:$0xff]
    %v514 = vld [vmem:[#allocation5 + $0xd40] sm:$0xff]
    %v515 = vld [vmem:[#allocation5 + $0xd48] sm:$0xff]
    %v516 = vld [vmem:[#allocation5 + $0xd50] sm:$0xff]
    %v517 = vld [vmem:[#allocation5 + $0xd58] sm:$0xff]
    %v518 = vld [vmem:[#allocation5 + $0xd60] sm:$0xff]
    %v519 = vld [vmem:[#allocation5 + $0xd68] sm:$0xff]
    %v520 = vld [vmem:[#allocation5 + $0xd70] sm:$0xff]
    %v521 = vld [vmem:[#allocation5 + $0xd78] sm:$0xff]
    %v522 = vld [vmem:[#allocation5 + $0xd80] sm:$0xff]
    %v523 = vld [vmem:[#allocation5 + $0xd88] sm:$0xff]
    %v524 = vld [vmem:[#allocation5 + $0xd90] sm:$0xff]
    %v525 = vld [vmem:[#allocation5 + $0xd98] sm:$0xff]
    %v526 = vld [vmem:[#allocation5 + $0xda0] sm:$0xff]
    %v527 = vld [vmem:[#allocation5 + $0xda8] sm:$0xff]
    %v528 = vld [vmem:[#allocation5 + $0xdb0] sm:$0xff]
    %v529 = vld [vmem:[#allocation5 + $0xdb8] sm:$0xff]
    %v530 = vld [vmem:[#allocation5 + $0xdc0] sm:$0xff]
    %v531 = vld [vmem:[#allocation5 + $0xdc8] sm:$0xff]
    %v532 = vld [vmem:[#allocation5 + $0xdd0] sm:$0xff]
    %v533 = vld [vmem:[#allocation5 + $0xdd8] sm:$0xff]
    %v534 = vld [vmem:[#allocation5 + $0xde0] sm:$0xff]
    %v535 = vld [vmem:[#allocation5 + $0xde8] sm:$0xff]
    %v536 = vld [vmem:[#allocation5 + $0xdf0] sm:$0xff]
    %v537 = vld [vmem:[#allocation5 + $0xdf8] sm:$0xff]
    %v538 = vld [vmem:[#allocation5 + $0xe00] sm:$0xff]
    %v539 = vld [vmem:[#allocation5 + $0xe08] sm:$0xff]
    %v540 = vld [vmem:[#allocation5 + $0xe10] sm:$0xff]
    %v541 = vld [vmem:[#allocation5 + $0xe18] sm:$0xff]
    %v542 = vld [vmem:[#allocation5 + $0xe20] sm:$0xff]
    %v543 = vld [vmem:[#allocation5 + $0xe28] sm:$0xff]
    %v544 = vld [vmem:[#allocation5 + $0xe30] sm:$0xff]
    %v545 = vld [vmem:[#allocation5 + $0xe38] sm:$0xff]
    %v546 = vld [vmem:[#allocation5 + $0xe40] sm:$0xff]
    %v547 = vld [vmem:[#allocation5 + $0xe48] sm:$0xff]
    %v548 = vld [vmem:[#allocation5 + $0xe50] sm:$0xff]
    %v549 = vld [vmem:[#allocation5 + $0xe58] sm:$0xff]
    %v550 = vld [vmem:[#allocation5 + $0xe60] sm:$0xff]
    %v551 = vld [vmem:[#allocation5 + $0xe68] sm:$0xff]
    %v552 = vld [vmem:[#allocation5 + $0xe70] sm:$0xff]
    %v553 = vld [vmem:[#allocation5 + $0xe78] sm:$0xff]
    %v554 = vld [vmem:[#allocation5 + $0xe80] sm:$0xff]
    %v555 = vld [vmem:[#allocation5 + $0xe88] sm:$0xff]
    %v556 = vld [vmem:[#allocation5 + $0xe90] sm:$0xff]
    %v557 = vld [vmem:[#allocation5 + $0xe98] sm:$0xff]
    %v558 = vld [vmem:[#allocation5 + $0xea0] sm:$0xff]
    %v559 = vld [vmem:[#allocation5 + $0xea8] sm:$0xff]
    %v560 = vld [vmem:[#allocation5 + $0xeb0] sm:$0xff]
    %v561 = vld [vmem:[#allocation5 + $0xeb8] sm:$0xff]
    %v562 = vld [vmem:[#allocation5 + $0xec0] sm:$0xff]
    %v563 = vld [vmem:[#allocation5 + $0xec8] sm:$0xff]
    %v564 = vld [vmem:[#allocation5 + $0xed0] sm:$0xff]
    %v565 = vld [vmem:[#allocation5 + $0xed8] sm:$0xff]
    %v566 = vld [vmem:[#allocation5 + $0xee0] sm:$0xff]
    %v567 = vld [vmem:[#allocation5 + $0xee8] sm:$0xff]
    %v568 = vld [vmem:[#allocation5 + $0xef0] sm:$0xff]
    %v569 = vld [vmem:[#allocation5 + $0xef8] sm:$0xff]
    %v570 = vld [vmem:[#allocation5 + $0xf00] sm:$0xff]
    %v571 = vld [vmem:[#allocation5 + $0xf08] sm:$0xff]
    %v572 = vld [vmem:[#allocation5 + $0xf10] sm:$0xff]
    %v573 = vld [vmem:[#allocation5 + $0xf18] sm:$0xff]
    %v574 = vld [vmem:[#allocation5 + $0xf20] sm:$0xff]
    %v575 = vld [vmem:[#allocation5 + $0xf28] sm:$0xff]
    %v576 = vld [vmem:[#allocation5 + $0xf30] sm:$0xff]
    %v577 = vld [vmem:[#allocation5 + $0xf38] sm:$0xff]
    %v578 = vld [vmem:[#allocation5 + $0xf40] sm:$0xff]
    %v579 = vld [vmem:[#allocation5 + $0xf48] sm:$0xff]
    %v580 = vld [vmem:[#allocation5 + $0xf50] sm:$0xff]
    %v581 = vld [vmem:[#allocation5 + $0xf58] sm:$0xff]
    %v582 = vld [vmem:[#allocation5 + $0xf60] sm:$0xff]
    %v583 = vld [vmem:[#allocation5 + $0xf68] sm:$0xff]
    %v584 = vld [vmem:[#allocation5 + $0xf70] sm:$0xff]
    %v585 = vld [vmem:[#allocation5 + $0xf78] sm:$0xff]
    %v586 = vld [vmem:[#allocation5 + $0xf80] sm:$0xff]
    %v587 = vld [vmem:[#allocation5 + $0xf88] sm:$0xff]
    %v588 = vld [vmem:[#allocation5 + $0xf90] sm:$0xff]
    %v589 = vld [vmem:[#allocation5 + $0xf98] sm:$0xff]
    %v590 = vld [vmem:[#allocation5 + $0xfa0] sm:$0xff]
    %v591 = vld [vmem:[#allocation5 + $0xfa8] sm:$0xff]
    %v592 = vld [vmem:[#allocation5 + $0xfb0] sm:$0xff]
    %v593 = vld [vmem:[#allocation5 + $0xfb8] sm:$0xff]
    %v594 = vld [vmem:[#allocation5 + $0xfc0] sm:$0xff]
    %v595 = vld [vmem:[#allocation5 + $0xfc8] sm:$0xff]
    %v596 = vld [vmem:[#allocation5 + $0xfd0] sm:$0xff]
    %v597 = vld [vmem:[#allocation5 + $0xfd8] sm:$0xff]
    %v598 = vld [vmem:[#allocation5 + $0xfe0] sm:$0xff]
    %v599 = vld [vmem:[#allocation5 + $0xfe8] sm:$0xff]
    %v600 = vld [vmem:[#allocation5 + $0xff0] sm:$0xff]
    %v601 = vld [vmem:[#allocation5 + $0xff8] sm:$0xff]
    %v602 = vld [vmem:[#allocation7] sm:$0xff]
    %v603 = vld [vmem:[#allocation7 + $0x8] sm:$0xff]
    %v606 = vlaneseq
    %v607 = vshrl.u32 %v606, 7
    %v608 = vsub.s32 0, %v607
    %v609 = vrot.slane %v602, %v608
    %v610 = vlaneseq
    %v611 = vshrl.u32 %v610, 7
    %v612 = vsub.s32 1, %v611
    %v613 = vrot.slane %v602, %v612
    %v614 = vlaneseq
    %v615 = vshrl.u32 %v614, 7
    %v616 = vsub.s32 2, %v615
    %v617 = vrot.slane %v602, %v616
    %v618 = vlaneseq
    %v619 = vshrl.u32 %v618, 7
    %v620 = vsub.s32 3, %v619
    %v621 = vrot.slane %v602, %v620
    %v622 = vlaneseq
    %v623 = vshrl.u32 %v622, 7
    %v624 = vsub.s32 4, %v623
    %v625 = vrot.slane %v602, %v624
    %v626 = vlaneseq
    %v627 = vshrl.u32 %v626, 7
    %v628 = vsub.s32 5, %v627
    %v629 = vrot.slane %v602, %v628
    %v630 = vlaneseq
    %v631 = vshrl.u32 %v630, 7
    %v632 = vsub.s32 6, %v631
    %v633 = vrot.slane %v602, %v632
    %v634 = vlaneseq
    %v635 = vshrl.u32 %v634, 7
    %v636 = vsub.s32 7, %v635
    %v637 = vrot.slane %v602, %v636
    %v638 = vlaneseq
    %v639 = vshrl.u32 %v638, 7
    %v640 = vsub.s32 0, %v639
    %v641 = vrot.slane %v603, %v640
    %v642 = vlaneseq
    %v643 = vshrl.u32 %v642, 7
    %v644 = vsub.s32 1, %v643
    %v645 = vrot.slane %v603, %v644
    %v646 = vlaneseq
    %v647 = vshrl.u32 %v646, 7
    %v648 = vsub.s32 2, %v647
    %v649 = vrot.slane %v603, %v648
    %v650 = vlaneseq
    %v651 = vshrl.u32 %v650, 7
    %v652 = vsub.s32 3, %v651
    %v653 = vrot.slane %v603, %v652
    %v654 = vlaneseq
    %v655 = vshrl.u32 %v654, 7
    %v656 = vsub.s32 4, %v655
    %v657 = vrot.slane %v603, %v656
    %v658 = vlaneseq
    %v659 = vshrl.u32 %v658, 7
    %v660 = vsub.s32 5, %v659
    %v661 = vrot.slane %v603, %v660
    %v662 = vlaneseq
    %v663 = vshrl.u32 %v662, 7
    %v664 = vsub.s32 6, %v663
    %v665 = vrot.slane %v603, %v664
    %v666 = vlaneseq
    %v667 = vshrl.u32 %v666, 7
    %v668 = vsub.s32 7, %v667
    %v669 = vrot.slane %v603, %v668
    %v690 = vunpack.c.l.b16 %v86
    %v691 = vunpack.c.h.b16 %v86
    %v692 = vunpack.c.l.b16 %v87
    %v693 = vunpack.c.h.b16 %v87
    %v694 = vunpack.c.l.b16 %v88
    %v695 = vunpack.c.h.b16 %v88
    %v696 = vunpack.c.l.b16 %v89
    %v697 = vunpack.c.h.b16 %v89
    %v698 = vpack.c.b16 %v694, %v690
    %v699 = vpack.c.b16 %v695, %v691
    %v700 = vpack.c.b16 %v696, %v692
    %v701 = vpack.c.b16 %v697, %v693
    %v1218 = vunpack.c.l.b16 %v90
    %v1219 = vunpack.c.h.b16 %v90
    %v1220 = vunpack.c.l.b16 %v91
    %v1221 = vunpack.c.h.b16 %v91
    %v1222 = vunpack.c.l.b16 %v92
    %v1223 = vunpack.c.h.b16 %v92
    %v1224 = vunpack.c.l.b16 %v93
    %v1225 = vunpack.c.h.b16 %v93
    %v1226 = vunpack.c.l.b16 %v94
    %v1227 = vunpack.c.h.b16 %v94
    %v1228 = vunpack.c.l.b16 %v95
    %v1229 = vunpack.c.h.b16 %v95
    %v1230 = vunpack.c.l.b16 %v96
    %v1231 = vunpack.c.h.b16 %v96
    %v1232 = vunpack.c.l.b16 %v97
    %v1233 = vunpack.c.h.b16 %v97
    %v1234 = vunpack.c.l.b16 %v98
    %v1235 = vunpack.c.h.b16 %v98
    %v1236 = vunpack.c.l.b16 %v99
    %v1237 = vunpack.c.h.b16 %v99
    %v1238 = vunpack.c.l.b16 %v100
    %v1239 = vunpack.c.h.b16 %v100
    %v1240 = vunpack.c.l.b16 %v101
    %v1241 = vunpack.c.h.b16 %v101
    %v1242 = vunpack.c.l.b16 %v102
    %v1243 = vunpack.c.h.b16 %v102
    %v1244 = vunpack.c.l.b16 %v103
    %v1245 = vunpack.c.h.b16 %v103
    %v1246 = vunpack.c.l.b16 %v104
    %v1247 = vunpack.c.h.b16 %v104
    %v1248 = vunpack.c.l.b16 %v105
    %v1249 = vunpack.c.h.b16 %v105
    %v1250 = vunpack.c.l.b16 %v106
    %v1251 = vunpack.c.h.b16 %v106
    %v1252 = vunpack.c.l.b16 %v107
    %v1253 = vunpack.c.h.b16 %v107
    %v1254 = vunpack.c.l.b16 %v108
    %v1255 = vunpack.c.h.b16 %v108
    %v1256 = vunpack.c.l.b16 %v109
    %v1257 = vunpack.c.h.b16 %v109
    %v1258 = vunpack.c.l.b16 %v110
    %v1259 = vunpack.c.h.b16 %v110
    %v1260 = vunpack.c.l.b16 %v111
    %v1261 = vunpack.c.h.b16 %v111
    %v1262 = vunpack.c.l.b16 %v112
    %v1263 = vunpack.c.h.b16 %v112
    %v1264 = vunpack.c.l.b16 %v113
    %v1265 = vunpack.c.h.b16 %v113
    %v1266 = vunpack.c.l.b16 %v114
    %v1267 = vunpack.c.h.b16 %v114
    %v1268 = vunpack.c.l.b16 %v115
    %v1269 = vunpack.c.h.b16 %v115
    %v1270 = vunpack.c.l.b16 %v116
    %v1271 = vunpack.c.h.b16 %v116
    %v1272 = vunpack.c.l.b16 %v117
    %v1273 = vunpack.c.h.b16 %v117
    %v1274 = vunpack.c.l.b16 %v118
    %v1275 = vunpack.c.h.b16 %v118
    %v1276 = vunpack.c.l.b16 %v119
    %v1277 = vunpack.c.h.b16 %v119
    %v1278 = vunpack.c.l.b16 %v120
    %v1279 = vunpack.c.h.b16 %v120
    %v1280 = vunpack.c.l.b16 %v121
    %v1281 = vunpack.c.h.b16 %v121
    %v1282 = vunpack.c.l.b16 %v122
    %v1283 = vunpack.c.h.b16 %v122
    %v1284 = vunpack.c.l.b16 %v123
    %v1285 = vunpack.c.h.b16 %v123
    %v1286 = vunpack.c.l.b16 %v124
    %v1287 = vunpack.c.h.b16 %v124
    %v1288 = vunpack.c.l.b16 %v125
    %v1289 = vunpack.c.h.b16 %v125
    %v1290 = vunpack.c.l.b16 %v126
    %v1291 = vunpack.c.h.b16 %v126
    %v1292 = vunpack.c.l.b16 %v127
    %v1293 = vunpack.c.h.b16 %v127
    %v1294 = vunpack.c.l.b16 %v128
    %v1295 = vunpack.c.h.b16 %v128
    %v1296 = vunpack.c.l.b16 %v129
    %v1297 = vunpack.c.h.b16 %v129
    %v1298 = vunpack.c.l.b16 %v130
    %v1299 = vunpack.c.h.b16 %v130
    %v1300 = vunpack.c.l.b16 %v131
    %v1301 = vunpack.c.h.b16 %v131
    %v1302 = vunpack.c.l.b16 %v132
    %v1303 = vunpack.c.h.b16 %v132
    %v1304 = vunpack.c.l.b16 %v133
    %v1305 = vunpack.c.h.b16 %v133
    %v1306 = vunpack.c.l.b16 %v134
    %v1307 = vunpack.c.h.b16 %v134
    %v1308 = vunpack.c.l.b16 %v135
    %v1309 = vunpack.c.h.b16 %v135
    %v1310 = vunpack.c.l.b16 %v136
    %v1311 = vunpack.c.h.b16 %v136
    %v1312 = vunpack.c.l.b16 %v137
    %v1313 = vunpack.c.h.b16 %v137
    %v1314 = vunpack.c.l.b16 %v138
    %v1315 = vunpack.c.h.b16 %v138
    %v1316 = vunpack.c.l.b16 %v139
    %v1317 = vunpack.c.h.b16 %v139
    %v1318 = vunpack.c.l.b16 %v140
    %v1319 = vunpack.c.h.b16 %v140
    %v1320 = vunpack.c.l.b16 %v141
    %v1321 = vunpack.c.h.b16 %v141
    %v1322 = vunpack.c.l.b16 %v142
    %v1323 = vunpack.c.h.b16 %v142
    %v1324 = vunpack.c.l.b16 %v143
    %v1325 = vunpack.c.h.b16 %v143
    %v1326 = vunpack.c.l.b16 %v144
    %v1327 = vunpack.c.h.b16 %v144
    %v1328 = vunpack.c.l.b16 %v145
    %v1329 = vunpack.c.h.b16 %v145
    %v1330 = vunpack.c.l.b16 %v146
    %v1331 = vunpack.c.h.b16 %v146
    %v1332 = vunpack.c.l.b16 %v147
    %v1333 = vunpack.c.h.b16 %v147
    %v1334 = vunpack.c.l.b16 %v148
    %v1335 = vunpack.c.h.b16 %v148
    %v1336 = vunpack.c.l.b16 %v149
    %v1337 = vunpack.c.h.b16 %v149
    %v1338 = vunpack.c.l.b16 %v150
    %v1339 = vunpack.c.h.b16 %v150
    %v1340 = vunpack.c.l.b16 %v151
    %v1341 = vunpack.c.h.b16 %v151
    %v1342 = vunpack.c.l.b16 %v152
    %v1343 = vunpack.c.h.b16 %v152
    %v1344 = vunpack.c.l.b16 %v153
    %v1345 = vunpack.c.h.b16 %v153
    %v1346 = vunpack.c.l.b16 %v154
    %v1347 = vunpack.c.h.b16 %v154
    %v1348 = vunpack.c.l.b16 %v155
    %v1349 = vunpack.c.h.b16 %v155
    %v1350 = vunpack.c.l.b16 %v156
    %v1351 = vunpack.c.h.b16 %v156
    %v1352 = vunpack.c.l.b16 %v157
    %v1353 = vunpack.c.h.b16 %v157
    %v1354 = vunpack.c.l.b16 %v158
    %v1355 = vunpack.c.h.b16 %v158
    %v1356 = vunpack.c.l.b16 %v159
    %v1357 = vunpack.c.h.b16 %v159
    %v1358 = vunpack.c.l.b16 %v160
    %v1359 = vunpack.c.h.b16 %v160
    %v1360 = vunpack.c.l.b16 %v161
    %v1361 = vunpack.c.h.b16 %v161
    %v1362 = vunpack.c.l.b16 %v162
    %v1363 = vunpack.c.h.b16 %v162
    %v1364 = vunpack.c.l.b16 %v163
    %v1365 = vunpack.c.h.b16 %v163
    %v1366 = vunpack.c.l.b16 %v164
    %v1367 = vunpack.c.h.b16 %v164
    %v1368 = vunpack.c.l.b16 %v165
    %v1369 = vunpack.c.h.b16 %v165
    %v1370 = vunpack.c.l.b16 %v166
    %v1371 = vunpack.c.h.b16 %v166
    %v1372 = vunpack.c.l.b16 %v167
    %v1373 = vunpack.c.h.b16 %v167
    %v1374 = vunpack.c.l.b16 %v168
    %v1375 = vunpack.c.h.b16 %v168
    %v1376 = vunpack.c.l.b16 %v169
    %v1377 = vunpack.c.h.b16 %v169
    %v1378 = vunpack.c.l.b16 %v170
    %v1379 = vunpack.c.h.b16 %v170
    %v1380 = vunpack.c.l.b16 %v171
    %v1381 = vunpack.c.h.b16 %v171
    %v1382 = vunpack.c.l.b16 %v172
    %v1383 = vunpack.c.h.b16 %v172
    %v1384 = vunpack.c.l.b16 %v173
    %v1385 = vunpack.c.h.b16 %v173
    %v1386 = vunpack.c.l.b16 %v174
    %v1387 = vunpack.c.h.b16 %v174
    %v1388 = vunpack.c.l.b16 %v175
    %v1389 = vunpack.c.h.b16 %v175
    %v1390 = vunpack.c.l.b16 %v176
    %v1391 = vunpack.c.h.b16 %v176
    %v1392 = vunpack.c.l.b16 %v177
    %v1393 = vunpack.c.h.b16 %v177
    %v1394 = vunpack.c.l.b16 %v178
    %v1395 = vunpack.c.h.b16 %v178
    %v1396 = vunpack.c.l.b16 %v179
    %v1397 = vunpack.c.h.b16 %v179
    %v1398 = vunpack.c.l.b16 %v180
    %v1399 = vunpack.c.h.b16 %v180
    %v1400 = vunpack.c.l.b16 %v181
    %v1401 = vunpack.c.h.b16 %v181
    %v1402 = vunpack.c.l.b16 %v182
    %v1403 = vunpack.c.h.b16 %v182
    %v1404 = vunpack.c.l.b16 %v183
    %v1405 = vunpack.c.h.b16 %v183
    %v1406 = vunpack.c.l.b16 %v184
    %v1407 = vunpack.c.h.b16 %v184
    %v1408 = vunpack.c.l.b16 %v185
    %v1409 = vunpack.c.h.b16 %v185
    %v1410 = vunpack.c.l.b16 %v186
    %v1411 = vunpack.c.h.b16 %v186
    %v1412 = vunpack.c.l.b16 %v187
    %v1413 = vunpack.c.h.b16 %v187
    %v1414 = vunpack.c.l.b16 %v188
    %v1415 = vunpack.c.h.b16 %v188
    %v1416 = vunpack.c.l.b16 %v189
    %v1417 = vunpack.c.h.b16 %v189
    %v1418 = vunpack.c.l.b16 %v190
    %v1419 = vunpack.c.h.b16 %v190
    %v1420 = vunpack.c.l.b16 %v191
    %v1421 = vunpack.c.h.b16 %v191
    %v1422 = vunpack.c.l.b16 %v192
    %v1423 = vunpack.c.h.b16 %v192
    %v1424 = vunpack.c.l.b16 %v193
    %v1425 = vunpack.c.h.b16 %v193
    %v1426 = vunpack.c.l.b16 %v194
    %v1427 = vunpack.c.h.b16 %v194
    %v1428 = vunpack.c.l.b16 %v195
    %v1429 = vunpack.c.h.b16 %v195
    %v1430 = vunpack.c.l.b16 %v196
    %v1431 = vunpack.c.h.b16 %v196
    %v1432 = vunpack.c.l.b16 %v197
    %v1433 = vunpack.c.h.b16 %v197
    %v1434 = vunpack.c.l.b16 %v198
    %v1435 = vunpack.c.h.b16 %v198
    %v1436 = vunpack.c.l.b16 %v199
    %v1437 = vunpack.c.h.b16 %v199
    %v1438 = vunpack.c.l.b16 %v200
    %v1439 = vunpack.c.h.b16 %v200
    %v1440 = vunpack.c.l.b16 %v201
    %v1441 = vunpack.c.h.b16 %v201
    %v1442 = vunpack.c.l.b16 %v202
    %v1443 = vunpack.c.h.b16 %v202
    %v1444 = vunpack.c.l.b16 %v203
    %v1445 = vunpack.c.h.b16 %v203
    %v1446 = vunpack.c.l.b16 %v204
    %v1447 = vunpack.c.h.b16 %v204
    %v1448 = vunpack.c.l.b16 %v205
    %v1449 = vunpack.c.h.b16 %v205
    %v1450 = vunpack.c.l.b16 %v206
    %v1451 = vunpack.c.h.b16 %v206
    %v1452 = vunpack.c.l.b16 %v207
    %v1453 = vunpack.c.h.b16 %v207
    %v1454 = vunpack.c.l.b16 %v208
    %v1455 = vunpack.c.h.b16 %v208
    %v1456 = vunpack.c.l.b16 %v209
    %v1457 = vunpack.c.h.b16 %v209
    %v1458 = vunpack.c.l.b16 %v210
    %v1459 = vunpack.c.h.b16 %v210
    %v1460 = vunpack.c.l.b16 %v211
    %v1461 = vunpack.c.h.b16 %v211
    %v1462 = vunpack.c.l.b16 %v212
    %v1463 = vunpack.c.h.b16 %v212
    %v1464 = vunpack.c.l.b16 %v213
    %v1465 = vunpack.c.h.b16 %v213
    %v1466 = vunpack.c.l.b16 %v214
    %v1467 = vunpack.c.h.b16 %v214
    %v1468 = vunpack.c.l.b16 %v215
    %v1469 = vunpack.c.h.b16 %v215
    %v1470 = vunpack.c.l.b16 %v216
    %v1471 = vunpack.c.h.b16 %v216
    %v1472 = vunpack.c.l.b16 %v217
    %v1473 = vunpack.c.h.b16 %v217
    %v1474 = vunpack.c.l.b16 %v218
    %v1475 = vunpack.c.h.b16 %v218
    %v1476 = vunpack.c.l.b16 %v219
    %v1477 = vunpack.c.h.b16 %v219
    %v1478 = vunpack.c.l.b16 %v220
    %v1479 = vunpack.c.h.b16 %v220
    %v1480 = vunpack.c.l.b16 %v221
    %v1481 = vunpack.c.h.b16 %v221
    %v1482 = vunpack.c.l.b16 %v222
    %v1483 = vunpack.c.h.b16 %v222
    %v1484 = vunpack.c.l.b16 %v223
    %v1485 = vunpack.c.h.b16 %v223
    %v1486 = vunpack.c.l.b16 %v224
    %v1487 = vunpack.c.h.b16 %v224
    %v1488 = vunpack.c.l.b16 %v225
    %v1489 = vunpack.c.h.b16 %v225
    %v1490 = vunpack.c.l.b16 %v226
    %v1491 = vunpack.c.h.b16 %v226
    %v1492 = vunpack.c.l.b16 %v227
    %v1493 = vunpack.c.h.b16 %v227
    %v1494 = vunpack.c.l.b16 %v228
    %v1495 = vunpack.c.h.b16 %v228
    %v1496 = vunpack.c.l.b16 %v229
    %v1497 = vunpack.c.h.b16 %v229
    %v1498 = vunpack.c.l.b16 %v230
    %v1499 = vunpack.c.h.b16 %v230
    %v1500 = vunpack.c.l.b16 %v231
    %v1501 = vunpack.c.h.b16 %v231
    %v1502 = vunpack.c.l.b16 %v232
    %v1503 = vunpack.c.h.b16 %v232
    %v1504 = vunpack.c.l.b16 %v233
    %v1505 = vunpack.c.h.b16 %v233
    %v1506 = vunpack.c.l.b16 %v234
    %v1507 = vunpack.c.h.b16 %v234
    %v1508 = vunpack.c.l.b16 %v235
    %v1509 = vunpack.c.h.b16 %v235
    %v1510 = vunpack.c.l.b16 %v236
    %v1511 = vunpack.c.h.b16 %v236
    %v1512 = vunpack.c.l.b16 %v237
    %v1513 = vunpack.c.h.b16 %v237
    %v1514 = vunpack.c.l.b16 %v238
    %v1515 = vunpack.c.h.b16 %v238
    %v1516 = vunpack.c.l.b16 %v239
    %v1517 = vunpack.c.h.b16 %v239
    %v1518 = vunpack.c.l.b16 %v240
    %v1519 = vunpack.c.h.b16 %v240
    %v1520 = vunpack.c.l.b16 %v241
    %v1521 = vunpack.c.h.b16 %v241
    %v1522 = vunpack.c.l.b16 %v242
    %v1523 = vunpack.c.h.b16 %v242
    %v1524 = vunpack.c.l.b16 %v243
    %v1525 = vunpack.c.h.b16 %v243
    %v1526 = vunpack.c.l.b16 %v244
    %v1527 = vunpack.c.h.b16 %v244
    %v1528 = vunpack.c.l.b16 %v245
    %v1529 = vunpack.c.h.b16 %v245
    %v1530 = vunpack.c.l.b16 %v246
    %v1531 = vunpack.c.h.b16 %v246
    %v1532 = vunpack.c.l.b16 %v247
    %v1533 = vunpack.c.h.b16 %v247
    %v1534 = vunpack.c.l.b16 %v248
    %v1535 = vunpack.c.h.b16 %v248
    %v1536 = vunpack.c.l.b16 %v249
    %v1537 = vunpack.c.h.b16 %v249
    %v1538 = vunpack.c.l.b16 %v250
    %v1539 = vunpack.c.h.b16 %v250
    %v1540 = vunpack.c.l.b16 %v251
    %v1541 = vunpack.c.h.b16 %v251
    %v1542 = vunpack.c.l.b16 %v252
    %v1543 = vunpack.c.h.b16 %v252
    %v1544 = vunpack.c.l.b16 %v253
    %v1545 = vunpack.c.h.b16 %v253
    %v1546 = vunpack.c.l.b16 %v254
    %v1547 = vunpack.c.h.b16 %v254
    %v1548 = vunpack.c.l.b16 %v255
    %v1549 = vunpack.c.h.b16 %v255
    %v1550 = vunpack.c.l.b16 %v256
    %v1551 = vunpack.c.h.b16 %v256
    %v1552 = vunpack.c.l.b16 %v257
    %v1553 = vunpack.c.h.b16 %v257
    %v1554 = vunpack.c.l.b16 %v258
    %v1555 = vunpack.c.h.b16 %v258
    %v1556 = vunpack.c.l.b16 %v259
    %v1557 = vunpack.c.h.b16 %v259
    %v1558 = vunpack.c.l.b16 %v260
    %v1559 = vunpack.c.h.b16 %v260
    %v1560 = vunpack.c.l.b16 %v261
    %v1561 = vunpack.c.h.b16 %v261
    %v1562 = vunpack.c.l.b16 %v262
    %v1563 = vunpack.c.h.b16 %v262
    %v1564 = vunpack.c.l.b16 %v263
    %v1565 = vunpack.c.h.b16 %v263
    %v1566 = vunpack.c.l.b16 %v264
    %v1567 = vunpack.c.h.b16 %v264
    %v1568 = vunpack.c.l.b16 %v265
    %v1569 = vunpack.c.h.b16 %v265
    %v1570 = vunpack.c.l.b16 %v266
    %v1571 = vunpack.c.h.b16 %v266
    %v1572 = vunpack.c.l.b16 %v267
    %v1573 = vunpack.c.h.b16 %v267
    %v1574 = vunpack.c.l.b16 %v268
    %v1575 = vunpack.c.h.b16 %v268
    %v1576 = vunpack.c.l.b16 %v269
    %v1577 = vunpack.c.h.b16 %v269
    %v1578 = vunpack.c.l.b16 %v270
    %v1579 = vunpack.c.h.b16 %v270
    %v1580 = vunpack.c.l.b16 %v271
    %v1581 = vunpack.c.h.b16 %v271
    %v1582 = vunpack.c.l.b16 %v272
    %v1583 = vunpack.c.h.b16 %v272
    %v1584 = vunpack.c.l.b16 %v273
    %v1585 = vunpack.c.h.b16 %v273
    %v1586 = vunpack.c.l.b16 %v274
    %v1587 = vunpack.c.h.b16 %v274
    %v1588 = vunpack.c.l.b16 %v275
    %v1589 = vunpack.c.h.b16 %v275
    %v1590 = vunpack.c.l.b16 %v276
    %v1591 = vunpack.c.h.b16 %v276
    %v1592 = vunpack.c.l.b16 %v277
    %v1593 = vunpack.c.h.b16 %v277
    %v1594 = vunpack.c.l.b16 %v278
    %v1595 = vunpack.c.h.b16 %v278
    %v1596 = vunpack.c.l.b16 %v279
    %v1597 = vunpack.c.h.b16 %v279
    %v1598 = vunpack.c.l.b16 %v280
    %v1599 = vunpack.c.h.b16 %v280
    %v1600 = vunpack.c.l.b16 %v281
    %v1601 = vunpack.c.h.b16 %v281
    %v1602 = vunpack.c.l.b16 %v282
    %v1603 = vunpack.c.h.b16 %v282
    %v1604 = vunpack.c.l.b16 %v283
    %v1605 = vunpack.c.h.b16 %v283
    %v1606 = vunpack.c.l.b16 %v284
    %v1607 = vunpack.c.h.b16 %v284
    %v1608 = vunpack.c.l.b16 %v285
    %v1609 = vunpack.c.h.b16 %v285
    %v1610 = vunpack.c.l.b16 %v286
    %v1611 = vunpack.c.h.b16 %v286
    %v1612 = vunpack.c.l.b16 %v287
    %v1613 = vunpack.c.h.b16 %v287
    %v1614 = vunpack.c.l.b16 %v288
    %v1615 = vunpack.c.h.b16 %v288
    %v1616 = vunpack.c.l.b16 %v289
    %v1617 = vunpack.c.h.b16 %v289
    %v1618 = vunpack.c.l.b16 %v290
    %v1619 = vunpack.c.h.b16 %v290
    %v1620 = vunpack.c.l.b16 %v291
    %v1621 = vunpack.c.h.b16 %v291
    %v1622 = vunpack.c.l.b16 %v292
    %v1623 = vunpack.c.h.b16 %v292
    %v1624 = vunpack.c.l.b16 %v293
    %v1625 = vunpack.c.h.b16 %v293
    %v1626 = vunpack.c.l.b16 %v294
    %v1627 = vunpack.c.h.b16 %v294
    %v1628 = vunpack.c.l.b16 %v295
    %v1629 = vunpack.c.h.b16 %v295
    %v1630 = vunpack.c.l.b16 %v296
    %v1631 = vunpack.c.h.b16 %v296
    %v1632 = vunpack.c.l.b16 %v297
    %v1633 = vunpack.c.h.b16 %v297
    %v1634 = vunpack.c.l.b16 %v298
    %v1635 = vunpack.c.h.b16 %v298
    %v1636 = vunpack.c.l.b16 %v299
    %v1637 = vunpack.c.h.b16 %v299
    %v1638 = vunpack.c.l.b16 %v300
    %v1639 = vunpack.c.h.b16 %v300
    %v1640 = vunpack.c.l.b16 %v301
    %v1641 = vunpack.c.h.b16 %v301
    %v1642 = vunpack.c.l.b16 %v302
    %v1643 = vunpack.c.h.b16 %v302
    %v1644 = vunpack.c.l.b16 %v303
    %v1645 = vunpack.c.h.b16 %v303
    %v1646 = vunpack.c.l.b16 %v304
    %v1647 = vunpack.c.h.b16 %v304
    %v1648 = vunpack.c.l.b16 %v305
    %v1649 = vunpack.c.h.b16 %v305
    %v1650 = vunpack.c.l.b16 %v306
    %v1651 = vunpack.c.h.b16 %v306
    %v1652 = vunpack.c.l.b16 %v307
    %v1653 = vunpack.c.h.b16 %v307
    %v1654 = vunpack.c.l.b16 %v308
    %v1655 = vunpack.c.h.b16 %v308
    %v1656 = vunpack.c.l.b16 %v309
    %v1657 = vunpack.c.h.b16 %v309
    %v1658 = vunpack.c.l.b16 %v310
    %v1659 = vunpack.c.h.b16 %v310
    %v1660 = vunpack.c.l.b16 %v311
    %v1661 = vunpack.c.h.b16 %v311
    %v1662 = vunpack.c.l.b16 %v312
    %v1663 = vunpack.c.h.b16 %v312
    %v1664 = vunpack.c.l.b16 %v313
    %v1665 = vunpack.c.h.b16 %v313
    %v1666 = vunpack.c.l.b16 %v314
    %v1667 = vunpack.c.h.b16 %v314
    %v1668 = vunpack.c.l.b16 %v315
    %v1669 = vunpack.c.h.b16 %v315
    %v1670 = vunpack.c.l.b16 %v316
    %v1671 = vunpack.c.h.b16 %v316
    %v1672 = vunpack.c.l.b16 %v317
    %v1673 = vunpack.c.h.b16 %v317
    %v1674 = vunpack.c.l.b16 %v318
    %v1675 = vunpack.c.h.b16 %v318
    %v1676 = vunpack.c.l.b16 %v319
    %v1677 = vunpack.c.h.b16 %v319
    %v1678 = vunpack.c.l.b16 %v320
    %v1679 = vunpack.c.h.b16 %v320
    %v1680 = vunpack.c.l.b16 %v321
    %v1681 = vunpack.c.h.b16 %v321
    %v1682 = vunpack.c.l.b16 %v322
    %v1683 = vunpack.c.h.b16 %v322
    %v1684 = vunpack.c.l.b16 %v323
    %v1685 = vunpack.c.h.b16 %v323
    %v1686 = vunpack.c.l.b16 %v324
    %v1687 = vunpack.c.h.b16 %v324
    %v1688 = vunpack.c.l.b16 %v325
    %v1689 = vunpack.c.h.b16 %v325
    %v1690 = vunpack.c.l.b16 %v326
    %v1691 = vunpack.c.h.b16 %v326
    %v1692 = vunpack.c.l.b16 %v327
    %v1693 = vunpack.c.h.b16 %v327
    %v1694 = vunpack.c.l.b16 %v328
    %v1695 = vunpack.c.h.b16 %v328
    %v1696 = vunpack.c.l.b16 %v329
    %v1697 = vunpack.c.h.b16 %v329
    %v1698 = vunpack.c.l.b16 %v330
    %v1699 = vunpack.c.h.b16 %v330
    %v1700 = vunpack.c.l.b16 %v331
    %v1701 = vunpack.c.h.b16 %v331
    %v1702 = vunpack.c.l.b16 %v332
    %v1703 = vunpack.c.h.b16 %v332
    %v1704 = vunpack.c.l.b16 %v333
    %v1705 = vunpack.c.h.b16 %v333
    %v1706 = vunpack.c.l.b16 %v334
    %v1707 = vunpack.c.h.b16 %v334
    %v1708 = vunpack.c.l.b16 %v335
    %v1709 = vunpack.c.h.b16 %v335
    %v1710 = vunpack.c.l.b16 %v336
    %v1711 = vunpack.c.h.b16 %v336
    %v1712 = vunpack.c.l.b16 %v337
    %v1713 = vunpack.c.h.b16 %v337
    %v1714 = vunpack.c.l.b16 %v338
    %v1715 = vunpack.c.h.b16 %v338
    %v1716 = vunpack.c.l.b16 %v339
    %v1717 = vunpack.c.h.b16 %v339
    %v1718 = vunpack.c.l.b16 %v340
    %v1719 = vunpack.c.h.b16 %v340
    %v1720 = vunpack.c.l.b16 %v341
    %v1721 = vunpack.c.h.b16 %v341
    %v1722 = vunpack.c.l.b16 %v342
    %v1723 = vunpack.c.h.b16 %v342
    %v1724 = vunpack.c.l.b16 %v343
    %v1725 = vunpack.c.h.b16 %v343
    %v1726 = vunpack.c.l.b16 %v344
    %v1727 = vunpack.c.h.b16 %v344
    %v1728 = vunpack.c.l.b16 %v345
    %v1729 = vunpack.c.h.b16 %v345
    %v1730 = vunpack.c.l.b16 %v346
    %v1731 = vunpack.c.h.b16 %v346
    %v1732 = vunpack.c.l.b16 %v347
    %v1733 = vunpack.c.h.b16 %v347
    %v1734 = vunpack.c.l.b16 %v348
    %v1735 = vunpack.c.h.b16 %v348
    %v1736 = vunpack.c.l.b16 %v349
    %v1737 = vunpack.c.h.b16 %v349
    %v1738 = vunpack.c.l.b16 %v350
    %v1739 = vunpack.c.h.b16 %v350
    %v1740 = vunpack.c.l.b16 %v351
    %v1741 = vunpack.c.h.b16 %v351
    %v1742 = vunpack.c.l.b16 %v352
    %v1743 = vunpack.c.h.b16 %v352
    %v1744 = vunpack.c.l.b16 %v353
    %v1745 = vunpack.c.h.b16 %v353
    %v1746 = vunpack.c.l.b16 %v354
    %v1747 = vunpack.c.h.b16 %v354
    %v1748 = vunpack.c.l.b16 %v355
    %v1749 = vunpack.c.h.b16 %v355
    %v1750 = vunpack.c.l.b16 %v356
    %v1751 = vunpack.c.h.b16 %v356
    %v1752 = vunpack.c.l.b16 %v357
    %v1753 = vunpack.c.h.b16 %v357
    %v1754 = vunpack.c.l.b16 %v358
    %v1755 = vunpack.c.h.b16 %v358
    %v1756 = vunpack.c.l.b16 %v359
    %v1757 = vunpack.c.h.b16 %v359
    %v1758 = vunpack.c.l.b16 %v360
    %v1759 = vunpack.c.h.b16 %v360
    %v1760 = vunpack.c.l.b16 %v361
    %v1761 = vunpack.c.h.b16 %v361
    %v1762 = vunpack.c.l.b16 %v362
    %v1763 = vunpack.c.h.b16 %v362
    %v1764 = vunpack.c.l.b16 %v363
    %v1765 = vunpack.c.h.b16 %v363
    %v1766 = vunpack.c.l.b16 %v364
    %v1767 = vunpack.c.h.b16 %v364
    %v1768 = vunpack.c.l.b16 %v365
    %v1769 = vunpack.c.h.b16 %v365
    %v1770 = vunpack.c.l.b16 %v366
    %v1771 = vunpack.c.h.b16 %v366
    %v1772 = vunpack.c.l.b16 %v367
    %v1773 = vunpack.c.h.b16 %v367
    %v1774 = vunpack.c.l.b16 %v368
    %v1775 = vunpack.c.h.b16 %v368
    %v1776 = vunpack.c.l.b16 %v369
    %v1777 = vunpack.c.h.b16 %v369
    %v1778 = vunpack.c.l.b16 %v370
    %v1779 = vunpack.c.h.b16 %v370
    %v1780 = vunpack.c.l.b16 %v371
    %v1781 = vunpack.c.h.b16 %v371
    %v1782 = vunpack.c.l.b16 %v372
    %v1783 = vunpack.c.h.b16 %v372
    %v1784 = vunpack.c.l.b16 %v373
    %v1785 = vunpack.c.h.b16 %v373
    %v1786 = vunpack.c.l.b16 %v374
    %v1787 = vunpack.c.h.b16 %v374
    %v1788 = vunpack.c.l.b16 %v375
    %v1789 = vunpack.c.h.b16 %v375
    %v1790 = vunpack.c.l.b16 %v376
    %v1791 = vunpack.c.h.b16 %v376
    %v1792 = vunpack.c.l.b16 %v377
    %v1793 = vunpack.c.h.b16 %v377
    %v1794 = vunpack.c.l.b16 %v378
    %v1795 = vunpack.c.h.b16 %v378
    %v1796 = vunpack.c.l.b16 %v379
    %v1797 = vunpack.c.h.b16 %v379
    %v1798 = vunpack.c.l.b16 %v380
    %v1799 = vunpack.c.h.b16 %v380
    %v1800 = vunpack.c.l.b16 %v381
    %v1801 = vunpack.c.h.b16 %v381
    %v1802 = vunpack.c.l.b16 %v382
    %v1803 = vunpack.c.h.b16 %v382
    %v1804 = vunpack.c.l.b16 %v383
    %v1805 = vunpack.c.h.b16 %v383
    %v1806 = vunpack.c.l.b16 %v384
    %v1807 = vunpack.c.h.b16 %v384
    %v1808 = vunpack.c.l.b16 %v385
    %v1809 = vunpack.c.h.b16 %v385
    %v1810 = vunpack.c.l.b16 %v386
    %v1811 = vunpack.c.h.b16 %v386
    %v1812 = vunpack.c.l.b16 %v387
    %v1813 = vunpack.c.h.b16 %v387
    %v1814 = vunpack.c.l.b16 %v388
    %v1815 = vunpack.c.h.b16 %v388
    %v1816 = vunpack.c.l.b16 %v389
    %v1817 = vunpack.c.h.b16 %v389
    %v1818 = vunpack.c.l.b16 %v390
    %v1819 = vunpack.c.h.b16 %v390
    %v1820 = vunpack.c.l.b16 %v391
    %v1821 = vunpack.c.h.b16 %v391
    %v1822 = vunpack.c.l.b16 %v392
    %v1823 = vunpack.c.h.b16 %v392
    %v1824 = vunpack.c.l.b16 %v393
    %v1825 = vunpack.c.h.b16 %v393
    %v1826 = vunpack.c.l.b16 %v394
    %v1827 = vunpack.c.h.b16 %v394
    %v1828 = vunpack.c.l.b16 %v395
    %v1829 = vunpack.c.h.b16 %v395
    %v1830 = vunpack.c.l.b16 %v396
    %v1831 = vunpack.c.h.b16 %v396
    %v1832 = vunpack.c.l.b16 %v397
    %v1833 = vunpack.c.h.b16 %v397
    %v1834 = vunpack.c.l.b16 %v398
    %v1835 = vunpack.c.h.b16 %v398
    %v1836 = vunpack.c.l.b16 %v399
    %v1837 = vunpack.c.h.b16 %v399
    %v1838 = vunpack.c.l.b16 %v400
    %v1839 = vunpack.c.h.b16 %v400
    %v1840 = vunpack.c.l.b16 %v401
    %v1841 = vunpack.c.h.b16 %v401
    %v1842 = vunpack.c.l.b16 %v402
    %v1843 = vunpack.c.h.b16 %v402
    %v1844 = vunpack.c.l.b16 %v403
    %v1845 = vunpack.c.h.b16 %v403
    %v1846 = vunpack.c.l.b16 %v404
    %v1847 = vunpack.c.h.b16 %v404
    %v1848 = vunpack.c.l.b16 %v405
    %v1849 = vunpack.c.h.b16 %v405
    %v1850 = vunpack.c.l.b16 %v406
    %v1851 = vunpack.c.h.b16 %v406
    %v1852 = vunpack.c.l.b16 %v407
    %v1853 = vunpack.c.h.b16 %v407
    %v1854 = vunpack.c.l.b16 %v408
    %v1855 = vunpack.c.h.b16 %v408
    %v1856 = vunpack.c.l.b16 %v409
    %v1857 = vunpack.c.h.b16 %v409
    %v1858 = vunpack.c.l.b16 %v410
    %v1859 = vunpack.c.h.b16 %v410
    %v1860 = vunpack.c.l.b16 %v411
    %v1861 = vunpack.c.h.b16 %v411
    %v1862 = vunpack.c.l.b16 %v412
    %v1863 = vunpack.c.h.b16 %v412
    %v1864 = vunpack.c.l.b16 %v413
    %v1865 = vunpack.c.h.b16 %v413
    %v1866 = vunpack.c.l.b16 %v414
    %v1867 = vunpack.c.h.b16 %v414
    %v1868 = vunpack.c.l.b16 %v415
    %v1869 = vunpack.c.h.b16 %v415
    %v1870 = vunpack.c.l.b16 %v416
    %v1871 = vunpack.c.h.b16 %v416
    %v1872 = vunpack.c.l.b16 %v417
    %v1873 = vunpack.c.h.b16 %v417
    %v1874 = vunpack.c.l.b16 %v418
    %v1875 = vunpack.c.h.b16 %v418
    %v1876 = vunpack.c.l.b16 %v419
    %v1877 = vunpack.c.h.b16 %v419
    %v1878 = vunpack.c.l.b16 %v420
    %v1879 = vunpack.c.h.b16 %v420
    %v1880 = vunpack.c.l.b16 %v421
    %v1881 = vunpack.c.h.b16 %v421
    %v1882 = vunpack.c.l.b16 %v422
    %v1883 = vunpack.c.h.b16 %v422
    %v1884 = vunpack.c.l.b16 %v423
    %v1885 = vunpack.c.h.b16 %v423
    %v1886 = vunpack.c.l.b16 %v424
    %v1887 = vunpack.c.h.b16 %v424
    %v1888 = vunpack.c.l.b16 %v425
    %v1889 = vunpack.c.h.b16 %v425
    %v1890 = vunpack.c.l.b16 %v426
    %v1891 = vunpack.c.h.b16 %v426
    %v1892 = vunpack.c.l.b16 %v427
    %v1893 = vunpack.c.h.b16 %v427
    %v1894 = vunpack.c.l.b16 %v428
    %v1895 = vunpack.c.h.b16 %v428
    %v1896 = vunpack.c.l.b16 %v429
    %v1897 = vunpack.c.h.b16 %v429
    %v1898 = vunpack.c.l.b16 %v430
    %v1899 = vunpack.c.h.b16 %v430
    %v1900 = vunpack.c.l.b16 %v431
    %v1901 = vunpack.c.h.b16 %v431
    %v1902 = vunpack.c.l.b16 %v432
    %v1903 = vunpack.c.h.b16 %v432
    %v1904 = vunpack.c.l.b16 %v433
    %v1905 = vunpack.c.h.b16 %v433
    %v1906 = vunpack.c.l.b16 %v434
    %v1907 = vunpack.c.h.b16 %v434
    %v1908 = vunpack.c.l.b16 %v435
    %v1909 = vunpack.c.h.b16 %v435
    %v1910 = vunpack.c.l.b16 %v436
    %v1911 = vunpack.c.h.b16 %v436
    %v1912 = vunpack.c.l.b16 %v437
    %v1913 = vunpack.c.h.b16 %v437
    %v1914 = vunpack.c.l.b16 %v438
    %v1915 = vunpack.c.h.b16 %v438
    %v1916 = vunpack.c.l.b16 %v439
    %v1917 = vunpack.c.h.b16 %v439
    %v1918 = vunpack.c.l.b16 %v440
    %v1919 = vunpack.c.h.b16 %v440
    %v1920 = vunpack.c.l.b16 %v441
    %v1921 = vunpack.c.h.b16 %v441
    %v1922 = vunpack.c.l.b16 %v442
    %v1923 = vunpack.c.h.b16 %v442
    %v1924 = vunpack.c.l.b16 %v443
    %v1925 = vunpack.c.h.b16 %v443
    %v1926 = vunpack.c.l.b16 %v444
    %v1927 = vunpack.c.h.b16 %v444
    %v1928 = vunpack.c.l.b16 %v445
    %v1929 = vunpack.c.h.b16 %v445
    %v1930 = vunpack.c.l.b16 %v446
    %v1931 = vunpack.c.h.b16 %v446
    %v1932 = vunpack.c.l.b16 %v447
    %v1933 = vunpack.c.h.b16 %v447
    %v1934 = vunpack.c.l.b16 %v448
    %v1935 = vunpack.c.h.b16 %v448
    %v1936 = vunpack.c.l.b16 %v449
    %v1937 = vunpack.c.h.b16 %v449
    %v1938 = vunpack.c.l.b16 %v450
    %v1939 = vunpack.c.h.b16 %v450
    %v1940 = vunpack.c.l.b16 %v451
    %v1941 = vunpack.c.h.b16 %v451
    %v1942 = vunpack.c.l.b16 %v452
    %v1943 = vunpack.c.h.b16 %v452
    %v1944 = vunpack.c.l.b16 %v453
    %v1945 = vunpack.c.h.b16 %v453
    %v1946 = vunpack.c.l.b16 %v454
    %v1947 = vunpack.c.h.b16 %v454
    %v1948 = vunpack.c.l.b16 %v455
    %v1949 = vunpack.c.h.b16 %v455
    %v1950 = vunpack.c.l.b16 %v456
    %v1951 = vunpack.c.h.b16 %v456
    %v1952 = vunpack.c.l.b16 %v457
    %v1953 = vunpack.c.h.b16 %v457
    %v1954 = vunpack.c.l.b16 %v458
    %v1955 = vunpack.c.h.b16 %v458
    %v1956 = vunpack.c.l.b16 %v459
    %v1957 = vunpack.c.h.b16 %v459
    %v1958 = vunpack.c.l.b16 %v460
    %v1959 = vunpack.c.h.b16 %v460
    %v1960 = vunpack.c.l.b16 %v461
    %v1961 = vunpack.c.h.b16 %v461
    %v1962 = vunpack.c.l.b16 %v462
    %v1963 = vunpack.c.h.b16 %v462
    %v1964 = vunpack.c.l.b16 %v463
    %v1965 = vunpack.c.h.b16 %v463
    %v1966 = vunpack.c.l.b16 %v464
    %v1967 = vunpack.c.h.b16 %v464
    %v1968 = vunpack.c.l.b16 %v465
    %v1969 = vunpack.c.h.b16 %v465
    %v1970 = vunpack.c.l.b16 %v466
    %v1971 = vunpack.c.h.b16 %v466
    %v1972 = vunpack.c.l.b16 %v467
    %v1973 = vunpack.c.h.b16 %v467
    %v1974 = vunpack.c.l.b16 %v468
    %v1975 = vunpack.c.h.b16 %v468
    %v1976 = vunpack.c.l.b16 %v469
    %v1977 = vunpack.c.h.b16 %v469
    %v1978 = vunpack.c.l.b16 %v470
    %v1979 = vunpack.c.h.b16 %v470
    %v1980 = vunpack.c.l.b16 %v471
    %v1981 = vunpack.c.h.b16 %v471
    %v1982 = vunpack.c.l.b16 %v472
    %v1983 = vunpack.c.h.b16 %v472
    %v1984 = vunpack.c.l.b16 %v473
    %v1985 = vunpack.c.h.b16 %v473
    %v1986 = vunpack.c.l.b16 %v474
    %v1987 = vunpack.c.h.b16 %v474
    %v1988 = vunpack.c.l.b16 %v475
    %v1989 = vunpack.c.h.b16 %v475
    %v1990 = vunpack.c.l.b16 %v476
    %v1991 = vunpack.c.h.b16 %v476
    %v1992 = vunpack.c.l.b16 %v477
    %v1993 = vunpack.c.h.b16 %v477
    %v1994 = vunpack.c.l.b16 %v478
    %v1995 = vunpack.c.h.b16 %v478
    %v1996 = vunpack.c.l.b16 %v479
    %v1997 = vunpack.c.h.b16 %v479
    %v1998 = vunpack.c.l.b16 %v480
    %v1999 = vunpack.c.h.b16 %v480
    %v2000 = vunpack.c.l.b16 %v481
    %v2001 = vunpack.c.h.b16 %v481
    %v2002 = vunpack.c.l.b16 %v482
    %v2003 = vunpack.c.h.b16 %v482
    %v2004 = vunpack.c.l.b16 %v483
    %v2005 = vunpack.c.h.b16 %v483
    %v2006 = vunpack.c.l.b16 %v484
    %v2007 = vunpack.c.h.b16 %v484
    %v2008 = vunpack.c.l.b16 %v485
    %v2009 = vunpack.c.h.b16 %v485
    %v2010 = vunpack.c.l.b16 %v486
    %v2011 = vunpack.c.h.b16 %v486
    %v2012 = vunpack.c.l.b16 %v487
    %v2013 = vunpack.c.h.b16 %v487
    %v2014 = vunpack.c.l.b16 %v488
    %v2015 = vunpack.c.h.b16 %v488
    %v2016 = vunpack.c.l.b16 %v489
    %v2017 = vunpack.c.h.b16 %v489
    %v2018 = vunpack.c.l.b16 %v490
    %v2019 = vunpack.c.h.b16 %v490
    %v2020 = vunpack.c.l.b16 %v491
    %v2021 = vunpack.c.h.b16 %v491
    %v2022 = vunpack.c.l.b16 %v492
    %v2023 = vunpack.c.h.b16 %v492
    %v2024 = vunpack.c.l.b16 %v493
    %v2025 = vunpack.c.h.b16 %v493
    %v2026 = vunpack.c.l.b16 %v494
    %v2027 = vunpack.c.h.b16 %v494
    %v2028 = vunpack.c.l.b16 %v495
    %v2029 = vunpack.c.h.b16 %v495
    %v2030 = vunpack.c.l.b16 %v496
    %v2031 = vunpack.c.h.b16 %v496
    %v2032 = vunpack.c.l.b16 %v497
    %v2033 = vunpack.c.h.b16 %v497
    %v2034 = vunpack.c.l.b16 %v498
    %v2035 = vunpack.c.h.b16 %v498
    %v2036 = vunpack.c.l.b16 %v499
    %v2037 = vunpack.c.h.b16 %v499
    %v2038 = vunpack.c.l.b16 %v500
    %v2039 = vunpack.c.h.b16 %v500
    %v2040 = vunpack.c.l.b16 %v501
    %v2041 = vunpack.c.h.b16 %v501
    %v2042 = vunpack.c.l.b16 %v502
    %v2043 = vunpack.c.h.b16 %v502
    %v2044 = vunpack.c.l.b16 %v503
    %v2045 = vunpack.c.h.b16 %v503
    %v2046 = vunpack.c.l.b16 %v504
    %v2047 = vunpack.c.h.b16 %v504
    %v2048 = vunpack.c.l.b16 %v505
    %v2049 = vunpack.c.h.b16 %v505
    %v2050 = vunpack.c.l.b16 %v506
    %v2051 = vunpack.c.h.b16 %v506
    %v2052 = vunpack.c.l.b16 %v507
    %v2053 = vunpack.c.h.b16 %v507
    %v2054 = vunpack.c.l.b16 %v508
    %v2055 = vunpack.c.h.b16 %v508
    %v2056 = vunpack.c.l.b16 %v509
    %v2057 = vunpack.c.h.b16 %v509
    %v2058 = vunpack.c.l.b16 %v510
    %v2059 = vunpack.c.h.b16 %v510
    %v2060 = vunpack.c.l.b16 %v511
    %v2061 = vunpack.c.h.b16 %v511
    %v2062 = vunpack.c.l.b16 %v512
    %v2063 = vunpack.c.h.b16 %v512
    %v2064 = vunpack.c.l.b16 %v513
    %v2065 = vunpack.c.h.b16 %v513
    %v2066 = vunpack.c.l.b16 %v514
    %v2067 = vunpack.c.h.b16 %v514
    %v2068 = vunpack.c.l.b16 %v515
    %v2069 = vunpack.c.h.b16 %v515
    %v2070 = vunpack.c.l.b16 %v516
    %v2071 = vunpack.c.h.b16 %v516
    %v2072 = vunpack.c.l.b16 %v517
    %v2073 = vunpack.c.h.b16 %v517
    %v2074 = vunpack.c.l.b16 %v518
    %v2075 = vunpack.c.h.b16 %v518
    %v2076 = vunpack.c.l.b16 %v519
    %v2077 = vunpack.c.h.b16 %v519
    %v2078 = vunpack.c.l.b16 %v520
    %v2079 = vunpack.c.h.b16 %v520
    %v2080 = vunpack.c.l.b16 %v521
    %v2081 = vunpack.c.h.b16 %v521
    %v2082 = vunpack.c.l.b16 %v522
    %v2083 = vunpack.c.h.b16 %v522
    %v2084 = vunpack.c.l.b16 %v523
    %v2085 = vunpack.c.h.b16 %v523
    %v2086 = vunpack.c.l.b16 %v524
    %v2087 = vunpack.c.h.b16 %v524
    %v2088 = vunpack.c.l.b16 %v525
    %v2089 = vunpack.c.h.b16 %v525
    %v2090 = vunpack.c.l.b16 %v526
    %v2091 = vunpack.c.h.b16 %v526
    %v2092 = vunpack.c.l.b16 %v527
    %v2093 = vunpack.c.h.b16 %v527
    %v2094 = vunpack.c.l.b16 %v528
    %v2095 = vunpack.c.h.b16 %v528
    %v2096 = vunpack.c.l.b16 %v529
    %v2097 = vunpack.c.h.b16 %v529
    %v2098 = vunpack.c.l.b16 %v530
    %v2099 = vunpack.c.h.b16 %v530
    %v2100 = vunpack.c.l.b16 %v531
    %v2101 = vunpack.c.h.b16 %v531
    %v2102 = vunpack.c.l.b16 %v532
    %v2103 = vunpack.c.h.b16 %v532
    %v2104 = vunpack.c.l.b16 %v533
    %v2105 = vunpack.c.h.b16 %v533
    %v2106 = vunpack.c.l.b16 %v534
    %v2107 = vunpack.c.h.b16 %v534
    %v2108 = vunpack.c.l.b16 %v535
    %v2109 = vunpack.c.h.b16 %v535
    %v2110 = vunpack.c.l.b16 %v536
    %v2111 = vunpack.c.h.b16 %v536
    %v2112 = vunpack.c.l.b16 %v537
    %v2113 = vunpack.c.h.b16 %v537
    %v2114 = vunpack.c.l.b16 %v538
    %v2115 = vunpack.c.h.b16 %v538
    %v2116 = vunpack.c.l.b16 %v539
    %v2117 = vunpack.c.h.b16 %v539
    %v2118 = vunpack.c.l.b16 %v540
    %v2119 = vunpack.c.h.b16 %v540
    %v2120 = vunpack.c.l.b16 %v541
    %v2121 = vunpack.c.h.b16 %v541
    %v2122 = vunpack.c.l.b16 %v542
    %v2123 = vunpack.c.h.b16 %v542
    %v2124 = vunpack.c.l.b16 %v543
    %v2125 = vunpack.c.h.b16 %v543
    %v2126 = vunpack.c.l.b16 %v544
    %v2127 = vunpack.c.h.b16 %v544
    %v2128 = vunpack.c.l.b16 %v545
    %v2129 = vunpack.c.h.b16 %v545
    %v2130 = vunpack.c.l.b16 %v546
    %v2131 = vunpack.c.h.b16 %v546
    %v2132 = vunpack.c.l.b16 %v547
    %v2133 = vunpack.c.h.b16 %v547
    %v2134 = vunpack.c.l.b16 %v548
    %v2135 = vunpack.c.h.b16 %v548
    %v2136 = vunpack.c.l.b16 %v549
    %v2137 = vunpack.c.h.b16 %v549
    %v2138 = vunpack.c.l.b16 %v550
    %v2139 = vunpack.c.h.b16 %v550
    %v2140 = vunpack.c.l.b16 %v551
    %v2141 = vunpack.c.h.b16 %v551
    %v2142 = vunpack.c.l.b16 %v552
    %v2143 = vunpack.c.h.b16 %v552
    %v2144 = vunpack.c.l.b16 %v553
    %v2145 = vunpack.c.h.b16 %v553
    %v2146 = vunpack.c.l.b16 %v554
    %v2147 = vunpack.c.h.b16 %v554
    %v2148 = vunpack.c.l.b16 %v555
    %v2149 = vunpack.c.h.b16 %v555
    %v2150 = vunpack.c.l.b16 %v556
    %v2151 = vunpack.c.h.b16 %v556
    %v2152 = vunpack.c.l.b16 %v557
    %v2153 = vunpack.c.h.b16 %v557
    %v2154 = vunpack.c.l.b16 %v558
    %v2155 = vunpack.c.h.b16 %v558
    %v2156 = vunpack.c.l.b16 %v559
    %v2157 = vunpack.c.h.b16 %v559
    %v2158 = vunpack.c.l.b16 %v560
    %v2159 = vunpack.c.h.b16 %v560
    %v2160 = vunpack.c.l.b16 %v561
    %v2161 = vunpack.c.h.b16 %v561
    %v2162 = vunpack.c.l.b16 %v562
    %v2163 = vunpack.c.h.b16 %v562
    %v2164 = vunpack.c.l.b16 %v563
    %v2165 = vunpack.c.h.b16 %v563
    %v2166 = vunpack.c.l.b16 %v564
    %v2167 = vunpack.c.h.b16 %v564
    %v2168 = vunpack.c.l.b16 %v565
    %v2169 = vunpack.c.h.b16 %v565
    %v2170 = vunpack.c.l.b16 %v566
    %v2171 = vunpack.c.h.b16 %v566
    %v2172 = vunpack.c.l.b16 %v567
    %v2173 = vunpack.c.h.b16 %v567
    %v2174 = vunpack.c.l.b16 %v568
    %v2175 = vunpack.c.h.b16 %v568
    %v2176 = vunpack.c.l.b16 %v569
    %v2177 = vunpack.c.h.b16 %v569
    %v2178 = vunpack.c.l.b16 %v570
    %v2179 = vunpack.c.h.b16 %v570
    %v2180 = vunpack.c.l.b16 %v571
    %v2181 = vunpack.c.h.b16 %v571
    %v2182 = vunpack.c.l.b16 %v572
    %v2183 = vunpack.c.h.b16 %v572
    %v2184 = vunpack.c.l.b16 %v573
    %v2185 = vunpack.c.h.b16 %v573
    %v2186 = vunpack.c.l.b16 %v574
    %v2187 = vunpack.c.h.b16 %v574
    %v2188 = vunpack.c.l.b16 %v575
    %v2189 = vunpack.c.h.b16 %v575
    %v2190 = vunpack.c.l.b16 %v576
    %v2191 = vunpack.c.h.b16 %v576
    %v2192 = vunpack.c.l.b16 %v577
    %v2193 = vunpack.c.h.b16 %v577
    %v2194 = vunpack.c.l.b16 %v578
    %v2195 = vunpack.c.h.b16 %v578
    %v2196 = vunpack.c.l.b16 %v579
    %v2197 = vunpack.c.h.b16 %v579
    %v2198 = vunpack.c.l.b16 %v580
    %v2199 = vunpack.c.h.b16 %v580
    %v2200 = vunpack.c.l.b16 %v581
    %v2201 = vunpack.c.h.b16 %v581
    %v2202 = vunpack.c.l.b16 %v582
    %v2203 = vunpack.c.h.b16 %v582
    %v2204 = vunpack.c.l.b16 %v583
    %v2205 = vunpack.c.h.b16 %v583
    %v2206 = vunpack.c.l.b16 %v584
    %v2207 = vunpack.c.h.b16 %v584
    %v2208 = vunpack.c.l.b16 %v585
    %v2209 = vunpack.c.h.b16 %v585
    %v2210 = vunpack.c.l.b16 %v586
    %v2211 = vunpack.c.h.b16 %v586
    %v2212 = vunpack.c.l.b16 %v587
    %v2213 = vunpack.c.h.b16 %v587
    %v2214 = vunpack.c.l.b16 %v588
    %v2215 = vunpack.c.h.b16 %v588
    %v2216 = vunpack.c.l.b16 %v589
    %v2217 = vunpack.c.h.b16 %v589
    %v2218 = vunpack.c.l.b16 %v590
    %v2219 = vunpack.c.h.b16 %v590
    %v2220 = vunpack.c.l.b16 %v591
    %v2221 = vunpack.c.h.b16 %v591
    %v2222 = vunpack.c.l.b16 %v592
    %v2223 = vunpack.c.h.b16 %v592
    %v2224 = vunpack.c.l.b16 %v593
    %v2225 = vunpack.c.h.b16 %v593
    %v2226 = vunpack.c.l.b16 %v594
    %v2227 = vunpack.c.h.b16 %v594
    %v2228 = vunpack.c.l.b16 %v595
    %v2229 = vunpack.c.h.b16 %v595
    %v2230 = vunpack.c.l.b16 %v596
    %v2231 = vunpack.c.h.b16 %v596
    %v2232 = vunpack.c.l.b16 %v597
    %v2233 = vunpack.c.h.b16 %v597
    %v2234 = vunpack.c.l.b16 %v598
    %v2235 = vunpack.c.h.b16 %v598
    %v2236 = vunpack.c.l.b16 %v599
    %v2237 = vunpack.c.h.b16 %v599
    %v2238 = vunpack.c.l.b16 %v600
    %v2239 = vunpack.c.h.b16 %v600
    %v2240 = vunpack.c.l.b16 %v601
    %v2241 = vunpack.c.h.b16 %v601
    %v2242 = vpack.c.b16 %v1234, %v1218
    %v2243 = vpack.c.b16 %v1235, %v1219
    %v2244 = vpack.c.b16 %v1236, %v1220
    %v2245 = vpack.c.b16 %v1237, %v1221
    %v2246 = vpack.c.b16 %v1238, %v1222
    %v2247 = vpack.c.b16 %v1239, %v1223
    %v2248 = vpack.c.b16 %v1240, %v1224
    %v2249 = vpack.c.b16 %v1241, %v1225
    %v2250 = vpack.c.b16 %v1242, %v1226
    %v2251 = vpack.c.b16 %v1243, %v1227
    %v2252 = vpack.c.b16 %v1244, %v1228
    %v2253 = vpack.c.b16 %v1245, %v1229
    %v2254 = vpack.c.b16 %v1246, %v1230
    %v2255 = vpack.c.b16 %v1247, %v1231
    %v2256 = vpack.c.b16 %v1248, %v1232
    %v2257 = vpack.c.b16 %v1249, %v1233
    %v2258 = vpack.c.b16 %v1266, %v1250
    %v2259 = vpack.c.b16 %v1267, %v1251
    %v2260 = vpack.c.b16 %v1268, %v1252
    %v2261 = vpack.c.b16 %v1269, %v1253
    %v2262 = vpack.c.b16 %v1270, %v1254
    %v2263 = vpack.c.b16 %v1271, %v1255
    %v2264 = vpack.c.b16 %v1272, %v1256
    %v2265 = vpack.c.b16 %v1273, %v1257
    %v2266 = vpack.c.b16 %v1274, %v1258
    %v2267 = vpack.c.b16 %v1275, %v1259
    %v2268 = vpack.c.b16 %v1276, %v1260
    %v2269 = vpack.c.b16 %v1277, %v1261
    %v2270 = vpack.c.b16 %v1278, %v1262
    %v2271 = vpack.c.b16 %v1279, %v1263
    %v2272 = vpack.c.b16 %v1280, %v1264
    %v2273 = vpack.c.b16 %v1281, %v1265
    %v2274 = vpack.c.b16 %v1298, %v1282
    %v2275 = vpack.c.b16 %v1299, %v1283
    %v2276 = vpack.c.b16 %v1300, %v1284
    %v2277 = vpack.c.b16 %v1301, %v1285
    %v2278 = vpack.c.b16 %v1302, %v1286
    %v2279 = vpack.c.b16 %v1303, %v1287
    %v2280 = vpack.c.b16 %v1304, %v1288
    %v2281 = vpack.c.b16 %v1305, %v1289
    %v2282 = vpack.c.b16 %v1306, %v1290
    %v2283 = vpack.c.b16 %v1307, %v1291
    %v2284 = vpack.c.b16 %v1308, %v1292
    %v2285 = vpack.c.b16 %v1309, %v1293
    %v2286 = vpack.c.b16 %v1310, %v1294
    %v2287 = vpack.c.b16 %v1311, %v1295
    %v2288 = vpack.c.b16 %v1312, %v1296
    %v2289 = vpack.c.b16 %v1313, %v1297
    %v2290 = vpack.c.b16 %v1330, %v1314
    %v2291 = vpack.c.b16 %v1331, %v1315
    %v2292 = vpack.c.b16 %v1332, %v1316
    %v2293 = vpack.c.b16 %v1333, %v1317
    %v2294 = vpack.c.b16 %v1334, %v1318
    %v2295 = vpack.c.b16 %v1335, %v1319
    %v2296 = vpack.c.b16 %v1336, %v1320
    %v2297 = vpack.c.b16 %v1337, %v1321
    %v2298 = vpack.c.b16 %v1338, %v1322
    %v2299 = vpack.c.b16 %v1339, %v1323
    %v2300 = vpack.c.b16 %v1340, %v1324
    %v2301 = vpack.c.b16 %v1341, %v1325
    %v2302 = vpack.c.b16 %v1342, %v1326
    %v2303 = vpack.c.b16 %v1343, %v1327
    %v2304 = vpack.c.b16 %v1344, %v1328
    %v2305 = vpack.c.b16 %v1345, %v1329
    %v2306 = vpack.c.b16 %v1362, %v1346
    %v2307 = vpack.c.b16 %v1363, %v1347
    %v2308 = vpack.c.b16 %v1364, %v1348
    %v2309 = vpack.c.b16 %v1365, %v1349
    %v2310 = vpack.c.b16 %v1366, %v1350
    %v2311 = vpack.c.b16 %v1367, %v1351
    %v2312 = vpack.c.b16 %v1368, %v1352
    %v2313 = vpack.c.b16 %v1369, %v1353
    %v2314 = vpack.c.b16 %v1370, %v1354
    %v2315 = vpack.c.b16 %v1371, %v1355
    %v2316 = vpack.c.b16 %v1372, %v1356
    %v2317 = vpack.c.b16 %v1373, %v1357
    %v2318 = vpack.c.b16 %v1374, %v1358
    %v2319 = vpack.c.b16 %v1375, %v1359
    %v2320 = vpack.c.b16 %v1376, %v1360
    %v2321 = vpack.c.b16 %v1377, %v1361
    %v2322 = vpack.c.b16 %v1394, %v1378
    %v2323 = vpack.c.b16 %v1395, %v1379
    %v2324 = vpack.c.b16 %v1396, %v1380
    %v2325 = vpack.c.b16 %v1397, %v1381
    %v2326 = vpack.c.b16 %v1398, %v1382
    %v2327 = vpack.c.b16 %v1399, %v1383
    %v2328 = vpack.c.b16 %v1400, %v1384
    %v2329 = vpack.c.b16 %v1401, %v1385
    %v2330 = vpack.c.b16 %v1402, %v1386
    %v2331 = vpack.c.b16 %v1403, %v1387
    %v2332 = vpack.c.b16 %v1404, %v1388
    %v2333 = vpack.c.b16 %v1405, %v1389
    %v2334 = vpack.c.b16 %v1406, %v1390
    %v2335 = vpack.c.b16 %v1407, %v1391
    %v2336 = vpack.c.b16 %v1408, %v1392
    %v2337 = vpack.c.b16 %v1409, %v1393
    %v2338 = vpack.c.b16 %v1426, %v1410
    %v2339 = vpack.c.b16 %v1427, %v1411
    %v2340 = vpack.c.b16 %v1428, %v1412
    %v2341 = vpack.c.b16 %v1429, %v1413
    %v2342 = vpack.c.b16 %v1430, %v1414
    %v2343 = vpack.c.b16 %v1431, %v1415
    %v2344 = vpack.c.b16 %v1432, %v1416
    %v2345 = vpack.c.b16 %v1433, %v1417
    %v2346 = vpack.c.b16 %v1434, %v1418
    %v2347 = vpack.c.b16 %v1435, %v1419
    %v2348 = vpack.c.b16 %v1436, %v1420
    %v2349 = vpack.c.b16 %v1437, %v1421
    %v2350 = vpack.c.b16 %v1438, %v1422
    %v2351 = vpack.c.b16 %v1439, %v1423
    %v2352 = vpack.c.b16 %v1440, %v1424
    %v2353 = vpack.c.b16 %v1441, %v1425
    %v2354 = vpack.c.b16 %v1458, %v1442
    %v2355 = vpack.c.b16 %v1459, %v1443
    %v2356 = vpack.c.b16 %v1460, %v1444
    %v2357 = vpack.c.b16 %v1461, %v1445
    %v2358 = vpack.c.b16 %v1462, %v1446
    %v2359 = vpack.c.b16 %v1463, %v1447
    %v2360 = vpack.c.b16 %v1464, %v1448
    %v2361 = vpack.c.b16 %v1465, %v1449
    %v2362 = vpack.c.b16 %v1466, %v1450
    %v2363 = vpack.c.b16 %v1467, %v1451
    %v2364 = vpack.c.b16 %v1468, %v1452
    %v2365 = vpack.c.b16 %v1469, %v1453
    %v2366 = vpack.c.b16 %v1470, %v1454
    %v2367 = vpack.c.b16 %v1471, %v1455
    %v2368 = vpack.c.b16 %v1472, %v1456
    %v2369 = vpack.c.b16 %v1473, %v1457
    %v2370 = vpack.c.b16 %v1490, %v1474
    %v2371 = vpack.c.b16 %v1491, %v1475
    %v2372 = vpack.c.b16 %v1492, %v1476
    %v2373 = vpack.c.b16 %v1493, %v1477
    %v2374 = vpack.c.b16 %v1494, %v1478
    %v2375 = vpack.c.b16 %v1495, %v1479
    %v2376 = vpack.c.b16 %v1496, %v1480
    %v2377 = vpack.c.b16 %v1497, %v1481
    %v2378 = vpack.c.b16 %v1498, %v1482
    %v2379 = vpack.c.b16 %v1499, %v1483
    %v2380 = vpack.c.b16 %v1500, %v1484
    %v2381 = vpack.c.b16 %v1501, %v1485
    %v2382 = vpack.c.b16 %v1502, %v1486
    %v2383 = vpack.c.b16 %v1503, %v1487
    %v2384 = vpack.c.b16 %v1504, %v1488
    %v2385 = vpack.c.b16 %v1505, %v1489
    %v2386 = vpack.c.b16 %v1522, %v1506
    %v2387 = vpack.c.b16 %v1523, %v1507
    %v2388 = vpack.c.b16 %v1524, %v1508
    %v2389 = vpack.c.b16 %v1525, %v1509
    %v2390 = vpack.c.b16 %v1526, %v1510
    %v2391 = vpack.c.b16 %v1527, %v1511
    %v2392 = vpack.c.b16 %v1528, %v1512
    %v2393 = vpack.c.b16 %v1529, %v1513
    %v2394 = vpack.c.b16 %v1530, %v1514
    %v2395 = vpack.c.b16 %v1531, %v1515
    %v2396 = vpack.c.b16 %v1532, %v1516
    %v2397 = vpack.c.b16 %v1533, %v1517
    %v2398 = vpack.c.b16 %v1534, %v1518
    %v2399 = vpack.c.b16 %v1535, %v1519
    %v2400 = vpack.c.b16 %v1536, %v1520
    %v2401 = vpack.c.b16 %v1537, %v1521
    %v2402 = vpack.c.b16 %v1554, %v1538
    %v2403 = vpack.c.b16 %v1555, %v1539
    %v2404 = vpack.c.b16 %v1556, %v1540
    %v2405 = vpack.c.b16 %v1557, %v1541
    %v2406 = vpack.c.b16 %v1558, %v1542
    %v2407 = vpack.c.b16 %v1559, %v1543
    %v2408 = vpack.c.b16 %v1560, %v1544
    %v2409 = vpack.c.b16 %v1561, %v1545
    %v2410 = vpack.c.b16 %v1562, %v1546
    %v2411 = vpack.c.b16 %v1563, %v1547
    %v2412 = vpack.c.b16 %v1564, %v1548
    %v2413 = vpack.c.b16 %v1565, %v1549
    %v2414 = vpack.c.b16 %v1566, %v1550
    %v2415 = vpack.c.b16 %v1567, %v1551
    %v2416 = vpack.c.b16 %v1568, %v1552
    %v2417 = vpack.c.b16 %v1569, %v1553
    %v2418 = vpack.c.b16 %v1586, %v1570
    %v2419 = vpack.c.b16 %v1587, %v1571
    %v2420 = vpack.c.b16 %v1588, %v1572
    %v2421 = vpack.c.b16 %v1589, %v1573
    %v2422 = vpack.c.b16 %v1590, %v1574
    %v2423 = vpack.c.b16 %v1591, %v1575
    %v2424 = vpack.c.b16 %v1592, %v1576
    %v2425 = vpack.c.b16 %v1593, %v1577
    %v2426 = vpack.c.b16 %v1594, %v1578
    %v2427 = vpack.c.b16 %v1595, %v1579
    %v2428 = vpack.c.b16 %v1596, %v1580
    %v2429 = vpack.c.b16 %v1597, %v1581
    %v2430 = vpack.c.b16 %v1598, %v1582
    %v2431 = vpack.c.b16 %v1599, %v1583
    %v2432 = vpack.c.b16 %v1600, %v1584
    %v2433 = vpack.c.b16 %v1601, %v1585
    %v2434 = vpack.c.b16 %v1618, %v1602
    %v2435 = vpack.c.b16 %v1619, %v1603
    %v2436 = vpack.c.b16 %v1620, %v1604
    %v2437 = vpack.c.b16 %v1621, %v1605
    %v2438 = vpack.c.b16 %v1622, %v1606
    %v2439 = vpack.c.b16 %v1623, %v1607
    %v2440 = vpack.c.b16 %v1624, %v1608
    %v2441 = vpack.c.b16 %v1625, %v1609
    %v2442 = vpack.c.b16 %v1626, %v1610
    %v2443 = vpack.c.b16 %v1627, %v1611
    %v2444 = vpack.c.b16 %v1628, %v1612
    %v2445 = vpack.c.b16 %v1629, %v1613
    %v2446 = vpack.c.b16 %v1630, %v1614
    %v2447 = vpack.c.b16 %v1631, %v1615
    %v2448 = vpack.c.b16 %v1632, %v1616
    %v2449 = vpack.c.b16 %v1633, %v1617
    %v2450 = vpack.c.b16 %v1650, %v1634
    %v2451 = vpack.c.b16 %v1651, %v1635
    %v2452 = vpack.c.b16 %v1652, %v1636
    %v2453 = vpack.c.b16 %v1653, %v1637
    %v2454 = vpack.c.b16 %v1654, %v1638
    %v2455 = vpack.c.b16 %v1655, %v1639
    %v2456 = vpack.c.b16 %v1656, %v1640
    %v2457 = vpack.c.b16 %v1657, %v1641
    %v2458 = vpack.c.b16 %v1658, %v1642
    %v2459 = vpack.c.b16 %v1659, %v1643
    %v2460 = vpack.c.b16 %v1660, %v1644
    %v2461 = vpack.c.b16 %v1661, %v1645
    %v2462 = vpack.c.b16 %v1662, %v1646
    %v2463 = vpack.c.b16 %v1663, %v1647
    %v2464 = vpack.c.b16 %v1664, %v1648
    %v2465 = vpack.c.b16 %v1665, %v1649
    %v2466 = vpack.c.b16 %v1682, %v1666
    %v2467 = vpack.c.b16 %v1683, %v1667
    %v2468 = vpack.c.b16 %v1684, %v1668
    %v2469 = vpack.c.b16 %v1685, %v1669
    %v2470 = vpack.c.b16 %v1686, %v1670
    %v2471 = vpack.c.b16 %v1687, %v1671
    %v2472 = vpack.c.b16 %v1688, %v1672
    %v2473 = vpack.c.b16 %v1689, %v1673
    %v2474 = vpack.c.b16 %v1690, %v1674
    %v2475 = vpack.c.b16 %v1691, %v1675
    %v2476 = vpack.c.b16 %v1692, %v1676
    %v2477 = vpack.c.b16 %v1693, %v1677
    %v2478 = vpack.c.b16 %v1694, %v1678
    %v2479 = vpack.c.b16 %v1695, %v1679
    %v2480 = vpack.c.b16 %v1696, %v1680
    %v2481 = vpack.c.b16 %v1697, %v1681
    %v2482 = vpack.c.b16 %v1714, %v1698
    %v2483 = vpack.c.b16 %v1715, %v1699
    %v2484 = vpack.c.b16 %v1716, %v1700
    %v2485 = vpack.c.b16 %v1717, %v1701
    %v2486 = vpack.c.b16 %v1718, %v1702
    %v2487 = vpack.c.b16 %v1719, %v1703
    %v2488 = vpack.c.b16 %v1720, %v1704
    %v2489 = vpack.c.b16 %v1721, %v1705
    %v2490 = vpack.c.b16 %v1722, %v1706
    %v2491 = vpack.c.b16 %v1723, %v1707
    %v2492 = vpack.c.b16 %v1724, %v1708
    %v2493 = vpack.c.b16 %v1725, %v1709
    %v2494 = vpack.c.b16 %v1726, %v1710
    %v2495 = vpack.c.b16 %v1727, %v1711
    %v2496 = vpack.c.b16 %v1728, %v1712
    %v2497 = vpack.c.b16 %v1729, %v1713
    %v2498 = vpack.c.b16 %v1746, %v1730
    %v2499 = vpack.c.b16 %v1747, %v1731
    %v2500 = vpack.c.b16 %v1748, %v1732
    %v2501 = vpack.c.b16 %v1749, %v1733
    %v2502 = vpack.c.b16 %v1750, %v1734
    %v2503 = vpack.c.b16 %v1751, %v1735
    %v2504 = vpack.c.b16 %v1752, %v1736
    %v2505 = vpack.c.b16 %v1753, %v1737
    %v2506 = vpack.c.b16 %v1754, %v1738
    %v2507 = vpack.c.b16 %v1755, %v1739
    %v2508 = vpack.c.b16 %v1756, %v1740
    %v2509 = vpack.c.b16 %v1757, %v1741
    %v2510 = vpack.c.b16 %v1758, %v1742
    %v2511 = vpack.c.b16 %v1759, %v1743
    %v2512 = vpack.c.b16 %v1760, %v1744
    %v2513 = vpack.c.b16 %v1761, %v1745
    %v2514 = vpack.c.b16 %v1778, %v1762
    %v2515 = vpack.c.b16 %v1779, %v1763
    %v2516 = vpack.c.b16 %v1780, %v1764
    %v2517 = vpack.c.b16 %v1781, %v1765
    %v2518 = vpack.c.b16 %v1782, %v1766
    %v2519 = vpack.c.b16 %v1783, %v1767
    %v2520 = vpack.c.b16 %v1784, %v1768
    %v2521 = vpack.c.b16 %v1785, %v1769
    %v2522 = vpack.c.b16 %v1786, %v1770
    %v2523 = vpack.c.b16 %v1787, %v1771
    %v2524 = vpack.c.b16 %v1788, %v1772
    %v2525 = vpack.c.b16 %v1789, %v1773
    %v2526 = vpack.c.b16 %v1790, %v1774
    %v2527 = vpack.c.b16 %v1791, %v1775
    %v2528 = vpack.c.b16 %v1792, %v1776
    %v2529 = vpack.c.b16 %v1793, %v1777
    %v2530 = vpack.c.b16 %v1810, %v1794
    %v2531 = vpack.c.b16 %v1811, %v1795
    %v2532 = vpack.c.b16 %v1812, %v1796
    %v2533 = vpack.c.b16 %v1813, %v1797
    %v2534 = vpack.c.b16 %v1814, %v1798
    %v2535 = vpack.c.b16 %v1815, %v1799
    %v2536 = vpack.c.b16 %v1816, %v1800
    %v2537 = vpack.c.b16 %v1817, %v1801
    %v2538 = vpack.c.b16 %v1818, %v1802
    %v2539 = vpack.c.b16 %v1819, %v1803
    %v2540 = vpack.c.b16 %v1820, %v1804
    %v2541 = vpack.c.b16 %v1821, %v1805
    %v2542 = vpack.c.b16 %v1822, %v1806
    %v2543 = vpack.c.b16 %v1823, %v1807
    %v2544 = vpack.c.b16 %v1824, %v1808
    %v2545 = vpack.c.b16 %v1825, %v1809
    %v2546 = vpack.c.b16 %v1842, %v1826
    %v2547 = vpack.c.b16 %v1843, %v1827
    %v2548 = vpack.c.b16 %v1844, %v1828
    %v2549 = vpack.c.b16 %v1845, %v1829
    %v2550 = vpack.c.b16 %v1846, %v1830
    %v2551 = vpack.c.b16 %v1847, %v1831
    %v2552 = vpack.c.b16 %v1848, %v1832
    %v2553 = vpack.c.b16 %v1849, %v1833
    %v2554 = vpack.c.b16 %v1850, %v1834
    %v2555 = vpack.c.b16 %v1851, %v1835
    %v2556 = vpack.c.b16 %v1852, %v1836
    %v2557 = vpack.c.b16 %v1853, %v1837
    %v2558 = vpack.c.b16 %v1854, %v1838
    %v2559 = vpack.c.b16 %v1855, %v1839
    %v2560 = vpack.c.b16 %v1856, %v1840
    %v2561 = vpack.c.b16 %v1857, %v1841
    %v2562 = vpack.c.b16 %v1874, %v1858
    %v2563 = vpack.c.b16 %v1875, %v1859
    %v2564 = vpack.c.b16 %v1876, %v1860
    %v2565 = vpack.c.b16 %v1877, %v1861
    %v2566 = vpack.c.b16 %v1878, %v1862
    %v2567 = vpack.c.b16 %v1879, %v1863
    %v2568 = vpack.c.b16 %v1880, %v1864
    %v2569 = vpack.c.b16 %v1881, %v1865
    %v2570 = vpack.c.b16 %v1882, %v1866
    %v2571 = vpack.c.b16 %v1883, %v1867
    %v2572 = vpack.c.b16 %v1884, %v1868
    %v2573 = vpack.c.b16 %v1885, %v1869
    %v2574 = vpack.c.b16 %v1886, %v1870
    %v2575 = vpack.c.b16 %v1887, %v1871
    %v2576 = vpack.c.b16 %v1888, %v1872
    %v2577 = vpack.c.b16 %v1889, %v1873
    %v2578 = vpack.c.b16 %v1906, %v1890
    %v2579 = vpack.c.b16 %v1907, %v1891
    %v2580 = vpack.c.b16 %v1908, %v1892
    %v2581 = vpack.c.b16 %v1909, %v1893
    %v2582 = vpack.c.b16 %v1910, %v1894
    %v2583 = vpack.c.b16 %v1911, %v1895
    %v2584 = vpack.c.b16 %v1912, %v1896
    %v2585 = vpack.c.b16 %v1913, %v1897
    %v2586 = vpack.c.b16 %v1914, %v1898
    %v2587 = vpack.c.b16 %v1915, %v1899
    %v2588 = vpack.c.b16 %v1916, %v1900
    %v2589 = vpack.c.b16 %v1917, %v1901
    %v2590 = vpack.c.b16 %v1918, %v1902
    %v2591 = vpack.c.b16 %v1919, %v1903
    %v2592 = vpack.c.b16 %v1920, %v1904
    %v2593 = vpack.c.b16 %v1921, %v1905
    %v2594 = vpack.c.b16 %v1938, %v1922
    %v2595 = vpack.c.b16 %v1939, %v1923
    %v2596 = vpack.c.b16 %v1940, %v1924
    %v2597 = vpack.c.b16 %v1941, %v1925
    %v2598 = vpack.c.b16 %v1942, %v1926
    %v2599 = vpack.c.b16 %v1943, %v1927
    %v2600 = vpack.c.b16 %v1944, %v1928
    %v2601 = vpack.c.b16 %v1945, %v1929
    %v2602 = vpack.c.b16 %v1946, %v1930
    %v2603 = vpack.c.b16 %v1947, %v1931
    %v2604 = vpack.c.b16 %v1948, %v1932
    %v2605 = vpack.c.b16 %v1949, %v1933
    %v2606 = vpack.c.b16 %v1950, %v1934
    %v2607 = vpack.c.b16 %v1951, %v1935
    %v2608 = vpack.c.b16 %v1952, %v1936
    %v2609 = vpack.c.b16 %v1953, %v1937
    %v2610 = vpack.c.b16 %v1970, %v1954
    %v2611 = vpack.c.b16 %v1971, %v1955
    %v2612 = vpack.c.b16 %v1972, %v1956
    %v2613 = vpack.c.b16 %v1973, %v1957
    %v2614 = vpack.c.b16 %v1974, %v1958
    %v2615 = vpack.c.b16 %v1975, %v1959
    %v2616 = vpack.c.b16 %v1976, %v1960
    %v2617 = vpack.c.b16 %v1977, %v1961
    %v2618 = vpack.c.b16 %v1978, %v1962
    %v2619 = vpack.c.b16 %v1979, %v1963
    %v2620 = vpack.c.b16 %v1980, %v1964
    %v2621 = vpack.c.b16 %v1981, %v1965
    %v2622 = vpack.c.b16 %v1982, %v1966
    %v2623 = vpack.c.b16 %v1983, %v1967
    %v2624 = vpack.c.b16 %v1984, %v1968
    %v2625 = vpack.c.b16 %v1985, %v1969
    %v2626 = vpack.c.b16 %v2002, %v1986
    %v2627 = vpack.c.b16 %v2003, %v1987
    %v2628 = vpack.c.b16 %v2004, %v1988
    %v2629 = vpack.c.b16 %v2005, %v1989
    %v2630 = vpack.c.b16 %v2006, %v1990
    %v2631 = vpack.c.b16 %v2007, %v1991
    %v2632 = vpack.c.b16 %v2008, %v1992
    %v2633 = vpack.c.b16 %v2009, %v1993
    %v2634 = vpack.c.b16 %v2010, %v1994
    %v2635 = vpack.c.b16 %v2011, %v1995
    %v2636 = vpack.c.b16 %v2012, %v1996
    %v2637 = vpack.c.b16 %v2013, %v1997
    %v2638 = vpack.c.b16 %v2014, %v1998
    %v2639 = vpack.c.b16 %v2015, %v1999
    %v2640 = vpack.c.b16 %v2016, %v2000
    %v2641 = vpack.c.b16 %v2017, %v2001
    %v2642 = vpack.c.b16 %v2034, %v2018
    %v2643 = vpack.c.b16 %v2035, %v2019
    %v2644 = vpack.c.b16 %v2036, %v2020
    %v2645 = vpack.c.b16 %v2037, %v2021
    %v2646 = vpack.c.b16 %v2038, %v2022
    %v2647 = vpack.c.b16 %v2039, %v2023
    %v2648 = vpack.c.b16 %v2040, %v2024
    %v2649 = vpack.c.b16 %v2041, %v2025
    %v2650 = vpack.c.b16 %v2042, %v2026
    %v2651 = vpack.c.b16 %v2043, %v2027
    %v2652 = vpack.c.b16 %v2044, %v2028
    %v2653 = vpack.c.b16 %v2045, %v2029
    %v2654 = vpack.c.b16 %v2046, %v2030
    %v2655 = vpack.c.b16 %v2047, %v2031
    %v2656 = vpack.c.b16 %v2048, %v2032
    %v2657 = vpack.c.b16 %v2049, %v2033
    %v2658 = vpack.c.b16 %v2066, %v2050
    %v2659 = vpack.c.b16 %v2067, %v2051
    %v2660 = vpack.c.b16 %v2068, %v2052
    %v2661 = vpack.c.b16 %v2069, %v2053
    %v2662 = vpack.c.b16 %v2070, %v2054
    %v2663 = vpack.c.b16 %v2071, %v2055
    %v2664 = vpack.c.b16 %v2072, %v2056
    %v2665 = vpack.c.b16 %v2073, %v2057
    %v2666 = vpack.c.b16 %v2074, %v2058
    %v2667 = vpack.c.b16 %v2075, %v2059
    %v2668 = vpack.c.b16 %v2076, %v2060
    %v2669 = vpack.c.b16 %v2077, %v2061
    %v2670 = vpack.c.b16 %v2078, %v2062
    %v2671 = vpack.c.b16 %v2079, %v2063
    %v2672 = vpack.c.b16 %v2080, %v2064
    %v2673 = vpack.c.b16 %v2081, %v2065
    %v2674 = vpack.c.b16 %v2098, %v2082
    %v2675 = vpack.c.b16 %v2099, %v2083
    %v2676 = vpack.c.b16 %v2100, %v2084
    %v2677 = vpack.c.b16 %v2101, %v2085
    %v2678 = vpack.c.b16 %v2102, %v2086
    %v2679 = vpack.c.b16 %v2103, %v2087
    %v2680 = vpack.c.b16 %v2104, %v2088
    %v2681 = vpack.c.b16 %v2105, %v2089
    %v2682 = vpack.c.b16 %v2106, %v2090
    %v2683 = vpack.c.b16 %v2107, %v2091
    %v2684 = vpack.c.b16 %v2108, %v2092
    %v2685 = vpack.c.b16 %v2109, %v2093
    %v2686 = vpack.c.b16 %v2110, %v2094
    %v2687 = vpack.c.b16 %v2111, %v2095
    %v2688 = vpack.c.b16 %v2112, %v2096
    %v2689 = vpack.c.b16 %v2113, %v2097
    %v2690 = vpack.c.b16 %v2130, %v2114
    %v2691 = vpack.c.b16 %v2131, %v2115
    %v2692 = vpack.c.b16 %v2132, %v2116
    %v2693 = vpack.c.b16 %v2133, %v2117
    %v2694 = vpack.c.b16 %v2134, %v2118
    %v2695 = vpack.c.b16 %v2135, %v2119
    %v2696 = vpack.c.b16 %v2136, %v2120
    %v2697 = vpack.c.b16 %v2137, %v2121
    %v2698 = vpack.c.b16 %v2138, %v2122
    %v2699 = vpack.c.b16 %v2139, %v2123
    %v2700 = vpack.c.b16 %v2140, %v2124
    %v2701 = vpack.c.b16 %v2141, %v2125
    %v2702 = vpack.c.b16 %v2142, %v2126
    %v2703 = vpack.c.b16 %v2143, %v2127
    %v2704 = vpack.c.b16 %v2144, %v2128
    %v2705 = vpack.c.b16 %v2145, %v2129
    %v2706 = vpack.c.b16 %v2162, %v2146
    %v2707 = vpack.c.b16 %v2163, %v2147
    %v2708 = vpack.c.b16 %v2164, %v2148
    %v2709 = vpack.c.b16 %v2165, %v2149
    %v2710 = vpack.c.b16 %v2166, %v2150
    %v2711 = vpack.c.b16 %v2167, %v2151
    %v2712 = vpack.c.b16 %v2168, %v2152
    %v2713 = vpack.c.b16 %v2169, %v2153
    %v2714 = vpack.c.b16 %v2170, %v2154
    %v2715 = vpack.c.b16 %v2171, %v2155
    %v2716 = vpack.c.b16 %v2172, %v2156
    %v2717 = vpack.c.b16 %v2173, %v2157
    %v2718 = vpack.c.b16 %v2174, %v2158
    %v2719 = vpack.c.b16 %v2175, %v2159
    %v2720 = vpack.c.b16 %v2176, %v2160
    %v2721 = vpack.c.b16 %v2177, %v2161
    %v2722 = vpack.c.b16 %v2194, %v2178
    %v2723 = vpack.c.b16 %v2195, %v2179
    %v2724 = vpack.c.b16 %v2196, %v2180
    %v2725 = vpack.c.b16 %v2197, %v2181
    %v2726 = vpack.c.b16 %v2198, %v2182
    %v2727 = vpack.c.b16 %v2199, %v2183
    %v2728 = vpack.c.b16 %v2200, %v2184
    %v2729 = vpack.c.b16 %v2201, %v2185
    %v2730 = vpack.c.b16 %v2202, %v2186
    %v2731 = vpack.c.b16 %v2203, %v2187
    %v2732 = vpack.c.b16 %v2204, %v2188
    %v2733 = vpack.c.b16 %v2205, %v2189
    %v2734 = vpack.c.b16 %v2206, %v2190
    %v2735 = vpack.c.b16 %v2207, %v2191
    %v2736 = vpack.c.b16 %v2208, %v2192
    %v2737 = vpack.c.b16 %v2209, %v2193
    %v2738 = vpack.c.b16 %v2226, %v2210
    %v2739 = vpack.c.b16 %v2227, %v2211
    %v2740 = vpack.c.b16 %v2228, %v2212
    %v2741 = vpack.c.b16 %v2229, %v2213
    %v2742 = vpack.c.b16 %v2230, %v2214
    %v2743 = vpack.c.b16 %v2231, %v2215
    %v2744 = vpack.c.b16 %v2232, %v2216
    %v2745 = vpack.c.b16 %v2233, %v2217
    %v2746 = vpack.c.b16 %v2234, %v2218
    %v2747 = vpack.c.b16 %v2235, %v2219
    %v2748 = vpack.c.b16 %v2236, %v2220
    %v2749 = vpack.c.b16 %v2237, %v2221
    %v2750 = vpack.c.b16 %v2238, %v2222
    %v2751 = vpack.c.b16 %v2239, %v2223
    %v2752 = vpack.c.b16 %v2240, %v2224
    %v2753 = vpack.c.b16 %v2241, %v2225
    %3266 = vmatprep.subr.bf16.mxu0 %v2355
    %3267 = vmatpush1.bf16.msra.mxu0 %v2354
    %3268 = vmatprep.subr.bf16.mxu0 %v2339
    %3269 = vmatpush1.bf16.msra.mxu0 %v2338
    %3270 = vmatprep.subr.bf16.mxu0 %v2323
    %3271 = vmatpush1.bf16.msra.mxu0 %v2322
    %3272 = vmatprep.subr.bf16.mxu0 %v2307
    %3273 = vmatpush1.bf16.msra.mxu0 %v2306
    %3274 = vmatprep.subr.bf16.mxu0 %v2291
    %3275 = vmatpush1.bf16.msra.mxu0 %v2290
    %3276 = vmatprep.subr.bf16.mxu0 %v2275
    %3277 = vmatpush1.bf16.msra.mxu0 %v2274
    %3278 = vmatprep.subr.bf16.mxu0 %v2259
    %3279 = vmatpush1.bf16.msra.mxu0 %v2258
    %3280 = vmatprep.subr.bf16.mxu0 %v2243
    %3281 = vmatpush1.bf16.msra.mxu0 %v2242
    %3282 = vmatprep.subr.bf16.mxu0 %v2483
    %3283 = vmatpush2.bf16.msra.mxu0 %v2482
    %3284 = vmatprep.subr.bf16.mxu0 %v2467
    %3285 = vmatpush2.bf16.msra.mxu0 %v2466
    %3286 = vmatprep.subr.bf16.mxu0 %v2451
    %3287 = vmatpush2.bf16.msra.mxu0 %v2450
    %3288 = vmatprep.subr.bf16.mxu0 %v2435
    %3289 = vmatpush2.bf16.msra.mxu0 %v2434
    %3290 = vmatprep.subr.bf16.mxu0 %v2419
    %3291 = vmatpush2.bf16.msra.mxu0 %v2418
    %3292 = vmatprep.subr.bf16.mxu0 %v2403
    %3293 = vmatpush2.bf16.msra.mxu0 %v2402
    %3294 = vmatprep.subr.bf16.mxu0 %v2387
    %3295 = vmatpush2.bf16.msra.mxu0 %v2386
    %3296 = vmatprep.subr.bf16.mxu0 %v2371
    %3297 = vmatpush2.bf16.msra.mxu0 %v2370
    %3298 = vmatprep.mubr.bf16.mxu0 %v699
    %3299 = vmatmul.mubr.bf16.gmra.mxu0 %v698
    %v3300 = vpop.f32.mrf.mxu0
    %v3301 = vadd.f32 %v609, %v3300
    %v3302 = vpop.f32.mrf.mxu0
    %v3303 = vadd.f32 %v613, %v3302
    %v3304 = vpop.f32.mrf.mxu0
    %v3305 = vadd.f32 %v609, %v3304
    %v3306 = vpop.f32.mrf.mxu0
    %v3307 = vadd.f32 %v613, %v3306
    %3308 = vdwg.mxu0
    %3309 = vmatprep.subr.bf16.mxu0 %v2611
    %3310 = vmatpush1.bf16.msra.mxu0 %v2610
    %3311 = vmatprep.subr.bf16.mxu0 %v2595
    %3312 = vmatpush1.bf16.msra.mxu0 %v2594
    %3313 = vmatprep.subr.bf16.mxu0 %v2579
    %3314 = vmatpush1.bf16.msra.mxu0 %v2578
    %3315 = vmatprep.subr.bf16.mxu0 %v2563
    %3316 = vmatpush1.bf16.msra.mxu0 %v2562
    %3317 = vmatprep.subr.bf16.mxu0 %v2547
    %3318 = vmatpush1.bf16.msra.mxu0 %v2546
    %3319 = vmatprep.subr.bf16.mxu0 %v2531
    %3320 = vmatpush1.bf16.msra.mxu0 %v2530
    %3321 = vmatprep.subr.bf16.mxu0 %v2515
    %3322 = vmatpush1.bf16.msra.mxu0 %v2514
    %3323 = vmatprep.subr.bf16.mxu0 %v2499
    %3324 = vmatpush1.bf16.msra.mxu0 %v2498
    %3325 = vmatprep.subr.bf16.mxu0 %v2739
    %3326 = vmatpush2.bf16.msra.mxu0 %v2738
    %3327 = vmatprep.subr.bf16.mxu0 %v2723
    %3328 = vmatpush2.bf16.msra.mxu0 %v2722
    %3329 = vmatprep.subr.bf16.mxu0 %v2707
    %3330 = vmatpush2.bf16.msra.mxu0 %v2706
    %3331 = vmatprep.subr.bf16.mxu0 %v2691
    %3332 = vmatpush2.bf16.msra.mxu0 %v2690
    %3333 = vmatprep.subr.bf16.mxu0 %v2675
    %3334 = vmatpush2.bf16.msra.mxu0 %v2674
    %3335 = vmatprep.subr.bf16.mxu0 %v2659
    %3336 = vmatpush2.bf16.msra.mxu0 %v2658
    %3337 = vmatprep.subr.bf16.mxu0 %v2643
    %3338 = vmatpush2.bf16.msra.mxu0 %v2642
    %3339 = vmatprep.subr.bf16.mxu0 %v2627
    %3340 = vmatpush2.bf16.msra.mxu0 %v2626
    %3341 = vmatprep.mubr.bf16.mxu0 %v701
    %3342 = vmatmul.mubr.bf16.gmra.mxu0 %v700
    %v3343 = vpop.f32.mrf.mxu0
    %v3344 = vadd.f32 %v3301, %v3343
    %v3345 = vpop.f32.mrf.mxu0
    %v3346 = vadd.f32 %v3303, %v3345
    %v3347 = vpop.f32.mrf.mxu0
    %v3348 = vadd.f32 %v3305, %v3347
    %v3349 = vpop.f32.mrf.mxu0
    %v3350 = vadd.f32 %v3307, %v3349
    %3351 = vdwg.mxu0
    %3352 = vmatprep.subr.bf16.mxu0 %v2357
    %3353 = vmatpush1.bf16.msra.mxu0 %v2356
    %3354 = vmatprep.subr.bf16.mxu0 %v2341
    %3355 = vmatpush1.bf16.msra.mxu0 %v2340
    %3356 = vmatprep.subr.bf16.mxu0 %v2325
    %3357 = vmatpush1.bf16.msra.mxu0 %v2324
    %3358 = vmatprep.subr.bf16.mxu0 %v2309
    %3359 = vmatpush1.bf16.msra.mxu0 %v2308
    %3360 = vmatprep.subr.bf16.mxu0 %v2293
    %3361 = vmatpush1.bf16.msra.mxu0 %v2292
    %3362 = vmatprep.subr.bf16.mxu0 %v2277
    %3363 = vmatpush1.bf16.msra.mxu0 %v2276
    %3364 = vmatprep.subr.bf16.mxu0 %v2261
    %3365 = vmatpush1.bf16.msra.mxu0 %v2260
    %3366 = vmatprep.subr.bf16.mxu0 %v2245
    %3367 = vmatpush1.bf16.msra.mxu0 %v2244
    %3368 = vmatprep.subr.bf16.mxu0 %v2485
    %3369 = vmatpush2.bf16.msra.mxu0 %v2484
    %3370 = vmatprep.subr.bf16.mxu0 %v2469
    %3371 = vmatpush2.bf16.msra.mxu0 %v2468
    %3372 = vmatprep.subr.bf16.mxu0 %v2453
    %3373 = vmatpush2.bf16.msra.mxu0 %v2452
    %3374 = vmatprep.subr.bf16.mxu0 %v2437
    %3375 = vmatpush2.bf16.msra.mxu0 %v2436
    %3376 = vmatprep.subr.bf16.mxu0 %v2421
    %3377 = vmatpush2.bf16.msra.mxu0 %v2420
    %3378 = vmatprep.subr.bf16.mxu0 %v2405
    %3379 = vmatpush2.bf16.msra.mxu0 %v2404
    %3380 = vmatprep.subr.bf16.mxu0 %v2389
    %3381 = vmatpush2.bf16.msra.mxu0 %v2388
    %3382 = vmatprep.subr.bf16.mxu0 %v2373
    %3383 = vmatpush2.bf16.msra.mxu0 %v2372
    %3384 = vmatprep.mubr.bf16.mxu0 %v699
    %3385 = vmatmul.mubr.bf16.gmra.mxu0 %v698
    %v3386 = vpop.f32.mrf.mxu0
    %v3387 = vadd.f32 %v617, %v3386
    %v3388 = vpop.f32.mrf.mxu0
    %v3389 = vadd.f32 %v621, %v3388
    %v3390 = vpop.f32.mrf.mxu0
    %v3391 = vadd.f32 %v617, %v3390
    %v3392 = vpop.f32.mrf.mxu0
    %v3393 = vadd.f32 %v621, %v3392
    %3394 = vdwg.mxu0
    %3395 = vmatprep.subr.bf16.mxu0 %v2613
    %3396 = vmatpush1.bf16.msra.mxu0 %v2612
    %3397 = vmatprep.subr.bf16.mxu0 %v2597
    %3398 = vmatpush1.bf16.msra.mxu0 %v2596
    %3399 = vmatprep.subr.bf16.mxu0 %v2581
    %3400 = vmatpush1.bf16.msra.mxu0 %v2580
    %3401 = vmatprep.subr.bf16.mxu0 %v2565
    %3402 = vmatpush1.bf16.msra.mxu0 %v2564
    %3403 = vmatprep.subr.bf16.mxu0 %v2549
    %3404 = vmatpush1.bf16.msra.mxu0 %v2548
    %3405 = vmatprep.subr.bf16.mxu0 %v2533
    %3406 = vmatpush1.bf16.msra.mxu0 %v2532
    %3407 = vmatprep.subr.bf16.mxu0 %v2517
    %3408 = vmatpush1.bf16.msra.mxu0 %v2516
    %3409 = vmatprep.subr.bf16.mxu0 %v2501
    %3410 = vmatpush1.bf16.msra.mxu0 %v2500
    %3411 = vmatprep.subr.bf16.mxu0 %v2741
    %3412 = vmatpush2.bf16.msra.mxu0 %v2740
    %3413 = vmatprep.subr.bf16.mxu0 %v2725
    %3414 = vmatpush2.bf16.msra.mxu0 %v2724
    %3415 = vmatprep.subr.bf16.mxu0 %v2709
    %3416 = vmatpush2.bf16.msra.mxu0 %v2708
    %3417 = vmatprep.subr.bf16.mxu0 %v2693
    %3418 = vmatpush2.bf16.msra.mxu0 %v2692
    %3419 = vmatprep.subr.bf16.mxu0 %v2677
    %3420 = vmatpush2.bf16.msra.mxu0 %v2676
    %3421 = vmatprep.subr.bf16.mxu0 %v2661
    %3422 = vmatpush2.bf16.msra.mxu0 %v2660
    %3423 = vmatprep.subr.bf16.mxu0 %v2645
    %3424 = vmatpush2.bf16.msra.mxu0 %v2644
    %3425 = vmatprep.subr.bf16.mxu0 %v2629
    %3426 = vmatpush2.bf16.msra.mxu0 %v2628
    %3427 = vmatprep.mubr.bf16.mxu0 %v701
    %3428 = vmatmul.mubr.bf16.gmra.mxu0 %v700
    %v3429 = vpop.f32.mrf.mxu0
    %v3430 = vadd.f32 %v3387, %v3429
    %v3431 = vpop.f32.mrf.mxu0
    %v3432 = vadd.f32 %v3389, %v3431
    %v3433 = vpop.f32.mrf.mxu0
    %v3434 = vadd.f32 %v3391, %v3433
    %v3435 = vpop.f32.mrf.mxu0
    %v3436 = vadd.f32 %v3393, %v3435
    %3437 = vdwg.mxu0
    %3438 = vmatprep.subr.bf16.mxu0 %v2359
    %3439 = vmatpush1.bf16.msra.mxu0 %v2358
    %3440 = vmatprep.subr.bf16.mxu0 %v2343
    %3441 = vmatpush1.bf16.msra.mxu0 %v2342
    %3442 = vmatprep.subr.bf16.mxu0 %v2327
    %3443 = vmatpush1.bf16.msra.mxu0 %v2326
    %3444 = vmatprep.subr.bf16.mxu0 %v2311
    %3445 = vmatpush1.bf16.msra.mxu0 %v2310
    %3446 = vmatprep.subr.bf16.mxu0 %v2295
    %3447 = vmatpush1.bf16.msra.mxu0 %v2294
    %3448 = vmatprep.subr.bf16.mxu0 %v2279
    %3449 = vmatpush1.bf16.msra.mxu0 %v2278
    %3450 = vmatprep.subr.bf16.mxu0 %v2263
    %3451 = vmatpush1.bf16.msra.mxu0 %v2262
    %3452 = vmatprep.subr.bf16.mxu0 %v2247
    %3453 = vmatpush1.bf16.msra.mxu0 %v2246
    %3454 = vmatprep.subr.bf16.mxu0 %v2487
    %3455 = vmatpush2.bf16.msra.mxu0 %v2486
    %3456 = vmatprep.subr.bf16.mxu0 %v2471
    %3457 = vmatpush2.bf16.msra.mxu0 %v2470
    %3458 = vmatprep.subr.bf16.mxu0 %v2455
    %3459 = vmatpush2.bf16.msra.mxu0 %v2454
    %3460 = vmatprep.subr.bf16.mxu0 %v2439
    %3461 = vmatpush2.bf16.msra.mxu0 %v2438
    %3462 = vmatprep.subr.bf16.mxu0 %v2423
    %3463 = vmatpush2.bf16.msra.mxu0 %v2422
    %3464 = vmatprep.subr.bf16.mxu0 %v2407
    %3465 = vmatpush2.bf16.msra.mxu0 %v2406
    %3466 = vmatprep.subr.bf16.mxu0 %v2391
    %3467 = vmatpush2.bf16.msra.mxu0 %v2390
    %3468 = vmatprep.subr.bf16.mxu0 %v2375
    %3469 = vmatpush2.bf16.msra.mxu0 %v2374
    %3470 = vmatprep.mubr.bf16.mxu0 %v699
    %3471 = vmatmul.mubr.bf16.gmra.mxu0 %v698
    %v3472 = vpop.f32.mrf.mxu0
    %v3473 = vadd.f32 %v625, %v3472
    %v3474 = vpop.f32.mrf.mxu0
    %v3475 = vadd.f32 %v629, %v3474
    %v3476 = vpop.f32.mrf.mxu0
    %v3477 = vadd.f32 %v625, %v3476
    %v3478 = vpop.f32.mrf.mxu0
    %v3479 = vadd.f32 %v629, %v3478
    %3480 = vdwg.mxu0
    %3481 = vmatprep.subr.bf16.mxu0 %v2615
    %3482 = vmatpush1.bf16.msra.mxu0 %v2614
    %3483 = vmatprep.subr.bf16.mxu0 %v2599
    %3484 = vmatpush1.bf16.msra.mxu0 %v2598
    %3485 = vmatprep.subr.bf16.mxu0 %v2583
    %3486 = vmatpush1.bf16.msra.mxu0 %v2582
    %3487 = vmatprep.subr.bf16.mxu0 %v2567
    %3488 = vmatpush1.bf16.msra.mxu0 %v2566
    %3489 = vmatprep.subr.bf16.mxu0 %v2551
    %3490 = vmatpush1.bf16.msra.mxu0 %v2550
    %3491 = vmatprep.subr.bf16.mxu0 %v2535
    %3492 = vmatpush1.bf16.msra.mxu0 %v2534
    %3493 = vmatprep.subr.bf16.mxu0 %v2519
    %3494 = vmatpush1.bf16.msra.mxu0 %v2518
    %3495 = vmatprep.subr.bf16.mxu0 %v2503
    %3496 = vmatpush1.bf16.msra.mxu0 %v2502
    %3497 = vmatprep.subr.bf16.mxu0 %v2743
    %3498 = vmatpush2.bf16.msra.mxu0 %v2742
    %3499 = vmatprep.subr.bf16.mxu0 %v2727
    %3500 = vmatpush2.bf16.msra.mxu0 %v2726
    %3501 = vmatprep.subr.bf16.mxu0 %v2711
    %3502 = vmatpush2.bf16.msra.mxu0 %v2710
    %3503 = vmatprep.subr.bf16.mxu0 %v2695
    %3504 = vmatpush2.bf16.msra.mxu0 %v2694
    %3505 = vmatprep.subr.bf16.mxu0 %v2679
    %3506 = vmatpush2.bf16.msra.mxu0 %v2678
    %3507 = vmatprep.subr.bf16.mxu0 %v2663
    %3508 = vmatpush2.bf16.msra.mxu0 %v2662
    %3509 = vmatprep.subr.bf16.mxu0 %v2647
    %3510 = vmatpush2.bf16.msra.mxu0 %v2646
    %3511 = vmatprep.subr.bf16.mxu0 %v2631
    %3512 = vmatpush2.bf16.msra.mxu0 %v2630
    %3513 = vmatprep.mubr.bf16.mxu0 %v701
    %3514 = vmatmul.mubr.bf16.gmra.mxu0 %v700
    %v3515 = vpop.f32.mrf.mxu0
    %v3516 = vadd.f32 %v3473, %v3515
    %v3517 = vpop.f32.mrf.mxu0
    %v3518 = vadd.f32 %v3475, %v3517
    %v3519 = vpop.f32.mrf.mxu0
    %v3520 = vadd.f32 %v3477, %v3519
    %v3521 = vpop.f32.mrf.mxu0
    %v3522 = vadd.f32 %v3479, %v3521
    %3523 = vdwg.mxu0
    %3524 = vmatprep.subr.bf16.mxu0 %v2361
    %3525 = vmatpush1.bf16.msra.mxu0 %v2360
    %3526 = vmatprep.subr.bf16.mxu0 %v2345
    %3527 = vmatpush1.bf16.msra.mxu0 %v2344
    %3528 = vmatprep.subr.bf16.mxu0 %v2329
    %3529 = vmatpush1.bf16.msra.mxu0 %v2328
    %3530 = vmatprep.subr.bf16.mxu0 %v2313
    %3531 = vmatpush1.bf16.msra.mxu0 %v2312
    %3532 = vmatprep.subr.bf16.mxu0 %v2297
    %3533 = vmatpush1.bf16.msra.mxu0 %v2296
    %3534 = vmatprep.subr.bf16.mxu0 %v2281
    %3535 = vmatpush1.bf16.msra.mxu0 %v2280
    %3536 = vmatprep.subr.bf16.mxu0 %v2265
    %3537 = vmatpush1.bf16.msra.mxu0 %v2264
    %3538 = vmatprep.subr.bf16.mxu0 %v2249
    %3539 = vmatpush1.bf16.msra.mxu0 %v2248
    %3540 = vmatprep.subr.bf16.mxu0 %v2489
    %3541 = vmatpush2.bf16.msra.mxu0 %v2488
    %3542 = vmatprep.subr.bf16.mxu0 %v2473
    %3543 = vmatpush2.bf16.msra.mxu0 %v2472
    %3544 = vmatprep.subr.bf16.mxu0 %v2457
    %3545 = vmatpush2.bf16.msra.mxu0 %v2456
    %3546 = vmatprep.subr.bf16.mxu0 %v2441
    %3547 = vmatpush2.bf16.msra.mxu0 %v2440
    %3548 = vmatprep.subr.bf16.mxu0 %v2425
    %3549 = vmatpush2.bf16.msra.mxu0 %v2424
    %3550 = vmatprep.subr.bf16.mxu0 %v2409
    %3551 = vmatpush2.bf16.msra.mxu0 %v2408
    %3552 = vmatprep.subr.bf16.mxu0 %v2393
    %3553 = vmatpush2.bf16.msra.mxu0 %v2392
    %3554 = vmatprep.subr.bf16.mxu0 %v2377
    %3555 = vmatpush2.bf16.msra.mxu0 %v2376
    %3556 = vmatprep.mubr.bf16.mxu0 %v699
    %3557 = vmatmul.mubr.bf16.gmra.mxu0 %v698
    %v3558 = vpop.f32.mrf.mxu0
    %v3559 = vadd.f32 %v633, %v3558
    %v3560 = vpop.f32.mrf.mxu0
    %v3561 = vadd.f32 %v637, %v3560
    %v3562 = vpop.f32.mrf.mxu0
    %v3563 = vadd.f32 %v633, %v3562
    %v3564 = vpop.f32.mrf.mxu0
    %v3565 = vadd.f32 %v637, %v3564
    %3566 = vdwg.mxu0
    %3567 = vmatprep.subr.bf16.mxu0 %v2617
    %3568 = vmatpush1.bf16.msra.mxu0 %v2616
    %3569 = vmatprep.subr.bf16.mxu0 %v2601
    %3570 = vmatpush1.bf16.msra.mxu0 %v2600
    %3571 = vmatprep.subr.bf16.mxu0 %v2585
    %3572 = vmatpush1.bf16.msra.mxu0 %v2584
    %3573 = vmatprep.subr.bf16.mxu0 %v2569
    %3574 = vmatpush1.bf16.msra.mxu0 %v2568
    %3575 = vmatprep.subr.bf16.mxu0 %v2553
    %3576 = vmatpush1.bf16.msra.mxu0 %v2552
    %3577 = vmatprep.subr.bf16.mxu0 %v2537
    %3578 = vmatpush1.bf16.msra.mxu0 %v2536
    %3579 = vmatprep.subr.bf16.mxu0 %v2521
    %3580 = vmatpush1.bf16.msra.mxu0 %v2520
    %3581 = vmatprep.subr.bf16.mxu0 %v2505
    %3582 = vmatpush1.bf16.msra.mxu0 %v2504
    %3583 = vmatprep.subr.bf16.mxu0 %v2745
    %3584 = vmatpush2.bf16.msra.mxu0 %v2744
    %3585 = vmatprep.subr.bf16.mxu0 %v2729
    %3586 = vmatpush2.bf16.msra.mxu0 %v2728
    %3587 = vmatprep.subr.bf16.mxu0 %v2713
    %3588 = vmatpush2.bf16.msra.mxu0 %v2712
    %3589 = vmatprep.subr.bf16.mxu0 %v2697
    %3590 = vmatpush2.bf16.msra.mxu0 %v2696
    %3591 = vmatprep.subr.bf16.mxu0 %v2681
    %3592 = vmatpush2.bf16.msra.mxu0 %v2680
    %3593 = vmatprep.subr.bf16.mxu0 %v2665
    %3594 = vmatpush2.bf16.msra.mxu0 %v2664
    %3595 = vmatprep.subr.bf16.mxu0 %v2649
    %3596 = vmatpush2.bf16.msra.mxu0 %v2648
    %3597 = vmatprep.subr.bf16.mxu0 %v2633
    %3598 = vmatpush2.bf16.msra.mxu0 %v2632
    %3599 = vmatprep.mubr.bf16.mxu0 %v701
    %3600 = vmatmul.mubr.bf16.gmra.mxu0 %v700
    %v3601 = vpop.f32.mrf.mxu0
    %v3602 = vadd.f32 %v3559, %v3601
    %v3603 = vpop.f32.mrf.mxu0
    %v3604 = vadd.f32 %v3561, %v3603
    %v3605 = vpop.f32.mrf.mxu0
    %v3606 = vadd.f32 %v3563, %v3605
    %v3607 = vpop.f32.mrf.mxu0
    %v3608 = vadd.f32 %v3565, %v3607
    %3609 = vdwg.mxu0
    %3610 = vmatprep.subr.bf16.mxu0 %v2363
    %3611 = vmatpush1.bf16.msra.mxu0 %v2362
    %3612 = vmatprep.subr.bf16.mxu0 %v2347
    %3613 = vmatpush1.bf16.msra.mxu0 %v2346
    %3614 = vmatprep.subr.bf16.mxu0 %v2331
    %3615 = vmatpush1.bf16.msra.mxu0 %v2330
    %3616 = vmatprep.subr.bf16.mxu0 %v2315
    %3617 = vmatpush1.bf16.msra.mxu0 %v2314
    %3618 = vmatprep.subr.bf16.mxu0 %v2299
    %3619 = vmatpush1.bf16.msra.mxu0 %v2298
    %3620 = vmatprep.subr.bf16.mxu0 %v2283
    %3621 = vmatpush1.bf16.msra.mxu0 %v2282
    %3622 = vmatprep.subr.bf16.mxu0 %v2267
    %3623 = vmatpush1.bf16.msra.mxu0 %v2266
    %3624 = vmatprep.subr.bf16.mxu0 %v2251
    %3625 = vmatpush1.bf16.msra.mxu0 %v2250
    %3626 = vmatprep.subr.bf16.mxu0 %v2491
    %3627 = vmatpush2.bf16.msra.mxu0 %v2490
    %3628 = vmatprep.subr.bf16.mxu0 %v2475
    %3629 = vmatpush2.bf16.msra.mxu0 %v2474
    %3630 = vmatprep.subr.bf16.mxu0 %v2459
    %3631 = vmatpush2.bf16.msra.mxu0 %v2458
    %3632 = vmatprep.subr.bf16.mxu0 %v2443
    %3633 = vmatpush2.bf16.msra.mxu0 %v2442
    %3634 = vmatprep.subr.bf16.mxu0 %v2427
    %3635 = vmatpush2.bf16.msra.mxu0 %v2426
    %3636 = vmatprep.subr.bf16.mxu0 %v2411
    %3637 = vmatpush2.bf16.msra.mxu0 %v2410
    %3638 = vmatprep.subr.bf16.mxu0 %v2395
    %3639 = vmatpush2.bf16.msra.mxu0 %v2394
    %3640 = vmatprep.subr.bf16.mxu0 %v2379
    %3641 = vmatpush2.bf16.msra.mxu0 %v2378
    %3642 = vmatprep.mubr.bf16.mxu0 %v699
    %3643 = vmatmul.mubr.bf16.gmra.mxu0 %v698
    %v3644 = vpop.f32.mrf.mxu0
    %v3645 = vadd.f32 %v641, %v3644
    %v3646 = vpop.f32.mrf.mxu0
    %v3647 = vadd.f32 %v645, %v3646
    %v3648 = vpop.f32.mrf.mxu0
    %v3649 = vadd.f32 %v641, %v3648
    %v3650 = vpop.f32.mrf.mxu0
    %v3651 = vadd.f32 %v645, %v3650
    %3652 = vdwg.mxu0
    %3653 = vmatprep.subr.bf16.mxu0 %v2619
    %3654 = vmatpush1.bf16.msra.mxu0 %v2618
    %3655 = vmatprep.subr.bf16.mxu0 %v2603
    %3656 = vmatpush1.bf16.msra.mxu0 %v2602
    %3657 = vmatprep.subr.bf16.mxu0 %v2587
    %3658 = vmatpush1.bf16.msra.mxu0 %v2586
    %3659 = vmatprep.subr.bf16.mxu0 %v2571
    %3660 = vmatpush1.bf16.msra.mxu0 %v2570
    %3661 = vmatprep.subr.bf16.mxu0 %v2555
    %3662 = vmatpush1.bf16.msra.mxu0 %v2554
    %3663 = vmatprep.subr.bf16.mxu0 %v2539
    %3664 = vmatpush1.bf16.msra.mxu0 %v2538
    %3665 = vmatprep.subr.bf16.mxu0 %v2523
    %3666 = vmatpush1.bf16.msra.mxu0 %v2522
    %3667 = vmatprep.subr.bf16.mxu0 %v2507
    %3668 = vmatpush1.bf16.msra.mxu0 %v2506
    %3669 = vmatprep.subr.bf16.mxu0 %v2747
    %3670 = vmatpush2.bf16.msra.mxu0 %v2746
    %3671 = vmatprep.subr.bf16.mxu0 %v2731
    %3672 = vmatpush2.bf16.msra.mxu0 %v2730
    %3673 = vmatprep.subr.bf16.mxu0 %v2715
    %3674 = vmatpush2.bf16.msra.mxu0 %v2714
    %3675 = vmatprep.subr.bf16.mxu0 %v2699
    %3676 = vmatpush2.bf16.msra.mxu0 %v2698
    %3677 = vmatprep.subr.bf16.mxu0 %v2683
    %3678 = vmatpush2.bf16.msra.mxu0 %v2682
    %3679 = vmatprep.subr.bf16.mxu0 %v2667
    %3680 = vmatpush2.bf16.msra.mxu0 %v2666
    %3681 = vmatprep.subr.bf16.mxu0 %v2651
    %3682 = vmatpush2.bf16.msra.mxu0 %v2650
    %3683 = vmatprep.subr.bf16.mxu0 %v2635
    %3684 = vmatpush2.bf16.msra.mxu0 %v2634
    %3685 = vmatprep.mubr.bf16.mxu0 %v701
    %3686 = vmatmul.mubr.bf16.gmra.mxu0 %v700
    %v3687 = vpop.f32.mrf.mxu0
    %v3688 = vadd.f32 %v3645, %v3687
    %v3689 = vpop.f32.mrf.mxu0
    %v3690 = vadd.f32 %v3647, %v3689
    %v3691 = vpop.f32.mrf.mxu0
    %v3692 = vadd.f32 %v3649, %v3691
    %v3693 = vpop.f32.mrf.mxu0
    %v3694 = vadd.f32 %v3651, %v3693
    %3695 = vdwg.mxu0
    %3696 = vmatprep.subr.bf16.mxu0 %v2365
    %3697 = vmatpush1.bf16.msra.mxu0 %v2364
    %3698 = vmatprep.subr.bf16.mxu0 %v2349
    %3699 = vmatpush1.bf16.msra.mxu0 %v2348
    %3700 = vmatprep.subr.bf16.mxu0 %v2333
    %3701 = vmatpush1.bf16.msra.mxu0 %v2332
    %3702 = vmatprep.subr.bf16.mxu0 %v2317
    %3703 = vmatpush1.bf16.msra.mxu0 %v2316
    %3704 = vmatprep.subr.bf16.mxu0 %v2301
    %3705 = vmatpush1.bf16.msra.mxu0 %v2300
    %3706 = vmatprep.subr.bf16.mxu0 %v2285
    %3707 = vmatpush1.bf16.msra.mxu0 %v2284
    %3708 = vmatprep.subr.bf16.mxu0 %v2269
    %3709 = vmatpush1.bf16.msra.mxu0 %v2268
    %3710 = vmatprep.subr.bf16.mxu0 %v2253
    %3711 = vmatpush1.bf16.msra.mxu0 %v2252
    %3712 = vmatprep.subr.bf16.mxu0 %v2493
    %3713 = vmatpush2.bf16.msra.mxu0 %v2492
    %3714 = vmatprep.subr.bf16.mxu0 %v2477
    %3715 = vmatpush2.bf16.msra.mxu0 %v2476
    %3716 = vmatprep.subr.bf16.mxu0 %v2461
    %3717 = vmatpush2.bf16.msra.mxu0 %v2460
    %3718 = vmatprep.subr.bf16.mxu0 %v2445
    %3719 = vmatpush2.bf16.msra.mxu0 %v2444
    %3720 = vmatprep.subr.bf16.mxu0 %v2429
    %3721 = vmatpush2.bf16.msra.mxu0 %v2428
    %3722 = vmatprep.subr.bf16.mxu0 %v2413
    %3723 = vmatpush2.bf16.msra.mxu0 %v2412
    %3724 = vmatprep.subr.bf16.mxu0 %v2397
    %3725 = vmatpush2.bf16.msra.mxu0 %v2396
    %3726 = vmatprep.subr.bf16.mxu0 %v2381
    %3727 = vmatpush2.bf16.msra.mxu0 %v2380
    %3728 = vmatprep.mubr.bf16.mxu0 %v699
    %3729 = vmatmul.mubr.bf16.gmra.mxu0 %v698
    %v3730 = vpop.f32.mrf.mxu0
    %v3731 = vadd.f32 %v649, %v3730
    %v3732 = vpop.f32.mrf.mxu0
    %v3733 = vadd.f32 %v653, %v3732
    %v3734 = vpop.f32.mrf.mxu0
    %v3735 = vadd.f32 %v649, %v3734
    %v3736 = vpop.f32.mrf.mxu0
    %v3737 = vadd.f32 %v653, %v3736
    %3738 = vdwg.mxu0
    %3739 = vmatprep.subr.bf16.mxu0 %v2621
    %3740 = vmatpush1.bf16.msra.mxu0 %v2620
    %3741 = vmatprep.subr.bf16.mxu0 %v2605
    %3742 = vmatpush1.bf16.msra.mxu0 %v2604
    %3743 = vmatprep.subr.bf16.mxu0 %v2589
    %3744 = vmatpush1.bf16.msra.mxu0 %v2588
    %3745 = vmatprep.subr.bf16.mxu0 %v2573
    %3746 = vmatpush1.bf16.msra.mxu0 %v2572
    %3747 = vmatprep.subr.bf16.mxu0 %v2557
    %3748 = vmatpush1.bf16.msra.mxu0 %v2556
    %3749 = vmatprep.subr.bf16.mxu0 %v2541
    %3750 = vmatpush1.bf16.msra.mxu0 %v2540
    %3751 = vmatprep.subr.bf16.mxu0 %v2525
    %3752 = vmatpush1.bf16.msra.mxu0 %v2524
    %3753 = vmatprep.subr.bf16.mxu0 %v2509
    %3754 = vmatpush1.bf16.msra.mxu0 %v2508
    %3755 = vmatprep.subr.bf16.mxu0 %v2749
    %3756 = vmatpush2.bf16.msra.mxu0 %v2748
    %3757 = vmatprep.subr.bf16.mxu0 %v2733
    %3758 = vmatpush2.bf16.msra.mxu0 %v2732
    %3759 = vmatprep.subr.bf16.mxu0 %v2717
    %3760 = vmatpush2.bf16.msra.mxu0 %v2716
    %3761 = vmatprep.subr.bf16.mxu0 %v2701
    %3762 = vmatpush2.bf16.msra.mxu0 %v2700
    %3763 = vmatprep.subr.bf16.mxu0 %v2685
    %3764 = vmatpush2.bf16.msra.mxu0 %v2684
    %3765 = vmatprep.subr.bf16.mxu0 %v2669
    %3766 = vmatpush2.bf16.msra.mxu0 %v2668
    %3767 = vmatprep.subr.bf16.mxu0 %v2653
    %3768 = vmatpush2.bf16.msra.mxu0 %v2652
    %3769 = vmatprep.subr.bf16.mxu0 %v2637
    %3770 = vmatpush2.bf16.msra.mxu0 %v2636
    %3771 = vmatprep.mubr.bf16.mxu0 %v701
    %3772 = vmatmul.mubr.bf16.gmra.mxu0 %v700
    %v3773 = vpop.f32.mrf.mxu0
    %v3774 = vadd.f32 %v3731, %v3773
    %v3775 = vpop.f32.mrf.mxu0
    %v3776 = vadd.f32 %v3733, %v3775
    %v3777 = vpop.f32.mrf.mxu0
    %v3778 = vadd.f32 %v3735, %v3777
    %v3779 = vpop.f32.mrf.mxu0
    %v3780 = vadd.f32 %v3737, %v3779
    %3781 = vdwg.mxu0
    %3782 = vmatprep.subr.bf16.mxu0 %v2367
    %3783 = vmatpush1.bf16.msra.mxu0 %v2366
    %3784 = vmatprep.subr.bf16.mxu0 %v2351
    %3785 = vmatpush1.bf16.msra.mxu0 %v2350
    %3786 = vmatprep.subr.bf16.mxu0 %v2335
    %3787 = vmatpush1.bf16.msra.mxu0 %v2334
    %3788 = vmatprep.subr.bf16.mxu0 %v2319
    %3789 = vmatpush1.bf16.msra.mxu0 %v2318
    %3790 = vmatprep.subr.bf16.mxu0 %v2303
    %3791 = vmatpush1.bf16.msra.mxu0 %v2302
    %3792 = vmatprep.subr.bf16.mxu0 %v2287
    %3793 = vmatpush1.bf16.msra.mxu0 %v2286
    %3794 = vmatprep.subr.bf16.mxu0 %v2271
    %3795 = vmatpush1.bf16.msra.mxu0 %v2270
    %3796 = vmatprep.subr.bf16.mxu0 %v2255
    %3797 = vmatpush1.bf16.msra.mxu0 %v2254
    %3798 = vmatprep.subr.bf16.mxu0 %v2495
    %3799 = vmatpush2.bf16.msra.mxu0 %v2494
    %3800 = vmatprep.subr.bf16.mxu0 %v2479
    %3801 = vmatpush2.bf16.msra.mxu0 %v2478
    %3802 = vmatprep.subr.bf16.mxu0 %v2463
    %3803 = vmatpush2.bf16.msra.mxu0 %v2462
    %3804 = vmatprep.subr.bf16.mxu0 %v2447
    %3805 = vmatpush2.bf16.msra.mxu0 %v2446
    %3806 = vmatprep.subr.bf16.mxu0 %v2431
    %3807 = vmatpush2.bf16.msra.mxu0 %v2430
    %3808 = vmatprep.subr.bf16.mxu0 %v2415
    %3809 = vmatpush2.bf16.msra.mxu0 %v2414
    %3810 = vmatprep.subr.bf16.mxu0 %v2399
    %3811 = vmatpush2.bf16.msra.mxu0 %v2398
    %3812 = vmatprep.subr.bf16.mxu0 %v2383
    %3813 = vmatpush2.bf16.msra.mxu0 %v2382
    %3814 = vmatprep.mubr.bf16.mxu0 %v699
    %3815 = vmatmul.mubr.bf16.gmra.mxu0 %v698
    %v3816 = vpop.f32.mrf.mxu0
    %v3817 = vadd.f32 %v657, %v3816
    %v3818 = vpop.f32.mrf.mxu0
    %v3819 = vadd.f32 %v661, %v3818
    %v3820 = vpop.f32.mrf.mxu0
    %v3821 = vadd.f32 %v657, %v3820
    %v3822 = vpop.f32.mrf.mxu0
    %v3823 = vadd.f32 %v661, %v3822
    %3824 = vdwg.mxu0
    %3825 = vmatprep.subr.bf16.mxu0 %v2623
    %3826 = vmatpush1.bf16.msra.mxu0 %v2622
    %3827 = vmatprep.subr.bf16.mxu0 %v2607
    %3828 = vmatpush1.bf16.msra.mxu0 %v2606
    %3829 = vmatprep.subr.bf16.mxu0 %v2591
    %3830 = vmatpush1.bf16.msra.mxu0 %v2590
    %3831 = vmatprep.subr.bf16.mxu0 %v2575
    %3832 = vmatpush1.bf16.msra.mxu0 %v2574
    %3833 = vmatprep.subr.bf16.mxu0 %v2559
    %3834 = vmatpush1.bf16.msra.mxu0 %v2558
    %3835 = vmatprep.subr.bf16.mxu0 %v2543
    %3836 = vmatpush1.bf16.msra.mxu0 %v2542
    %3837 = vmatprep.subr.bf16.mxu0 %v2527
    %3838 = vmatpush1.bf16.msra.mxu0 %v2526
    %3839 = vmatprep.subr.bf16.mxu0 %v2511
    %3840 = vmatpush1.bf16.msra.mxu0 %v2510
    %3841 = vmatprep.subr.bf16.mxu0 %v2751
    %3842 = vmatpush2.bf16.msra.mxu0 %v2750
    %3843 = vmatprep.subr.bf16.mxu0 %v2735
    %3844 = vmatpush2.bf16.msra.mxu0 %v2734
    %3845 = vmatprep.subr.bf16.mxu0 %v2719
    %3846 = vmatpush2.bf16.msra.mxu0 %v2718
    %3847 = vmatprep.subr.bf16.mxu0 %v2703
    %3848 = vmatpush2.bf16.msra.mxu0 %v2702
    %3849 = vmatprep.subr.bf16.mxu0 %v2687
    %3850 = vmatpush2.bf16.msra.mxu0 %v2686
    %3851 = vmatprep.subr.bf16.mxu0 %v2671
    %3852 = vmatpush2.bf16.msra.mxu0 %v2670
    %3853 = vmatprep.subr.bf16.mxu0 %v2655
    %3854 = vmatpush2.bf16.msra.mxu0 %v2654
    %3855 = vmatprep.subr.bf16.mxu0 %v2639
    %3856 = vmatpush2.bf16.msra.mxu0 %v2638
    %3857 = vmatprep.mubr.bf16.mxu0 %v701
    %3858 = vmatmul.mubr.bf16.gmra.mxu0 %v700
    %v3859 = vpop.f32.mrf.mxu0
    %v3860 = vadd.f32 %v3817, %v3859
    %v3861 = vpop.f32.mrf.mxu0
    %v3862 = vadd.f32 %v3819, %v3861
    %v3863 = vpop.f32.mrf.mxu0
    %v3864 = vadd.f32 %v3821, %v3863
    %v3865 = vpop.f32.mrf.mxu0
    %v3866 = vadd.f32 %v3823, %v3865
    %3867 = vdwg.mxu0
    %3868 = vmatprep.subr.bf16.mxu0 %v2369
    %3869 = vmatpush1.bf16.msra.mxu0 %v2368
    %3870 = vmatprep.subr.bf16.mxu0 %v2353
    %3871 = vmatpush1.bf16.msra.mxu0 %v2352
    %3872 = vmatprep.subr.bf16.mxu0 %v2337
    %3873 = vmatpush1.bf16.msra.mxu0 %v2336
    %3874 = vmatprep.subr.bf16.mxu0 %v2321
    %3875 = vmatpush1.bf16.msra.mxu0 %v2320
    %3876 = vmatprep.subr.bf16.mxu0 %v2305
    %3877 = vmatpush1.bf16.msra.mxu0 %v2304
    %3878 = vmatprep.subr.bf16.mxu0 %v2289
    %3879 = vmatpush1.bf16.msra.mxu0 %v2288
    %3880 = vmatprep.subr.bf16.mxu0 %v2273
    %3881 = vmatpush1.bf16.msra.mxu0 %v2272
    %3882 = vmatprep.subr.bf16.mxu0 %v2257
    %3883 = vmatpush1.bf16.msra.mxu0 %v2256
    %3884 = vmatprep.subr.bf16.mxu0 %v2497
    %3885 = vmatpush2.bf16.msra.mxu0 %v2496
    %3886 = vmatprep.subr.bf16.mxu0 %v2481
    %3887 = vmatpush2.bf16.msra.mxu0 %v2480
    %3888 = vmatprep.subr.bf16.mxu0 %v2465
    %3889 = vmatpush2.bf16.msra.mxu0 %v2464
    %3890 = vmatprep.subr.bf16.mxu0 %v2449
    %3891 = vmatpush2.bf16.msra.mxu0 %v2448
    %3892 = vmatprep.subr.bf16.mxu0 %v2433
    %3893 = vmatpush2.bf16.msra.mxu0 %v2432
    %3894 = vmatprep.subr.bf16.mxu0 %v2417
    %3895 = vmatpush2.bf16.msra.mxu0 %v2416
    %3896 = vmatprep.subr.bf16.mxu0 %v2401
    %3897 = vmatpush2.bf16.msra.mxu0 %v2400
    %3898 = vmatprep.subr.bf16.mxu0 %v2385
    %3899 = vmatpush2.bf16.msra.mxu0 %v2384
    %3900 = vmatprep.mubr.bf16.mxu0 %v699
    %3901 = vmatmul.mubr.bf16.gmra.mxu0 %v698
    %v3902 = vpop.f32.mrf.mxu0
    %v3903 = vadd.f32 %v665, %v3902
    %v3904 = vpop.f32.mrf.mxu0
    %v3905 = vadd.f32 %v669, %v3904
    %v3906 = vpop.f32.mrf.mxu0
    %v3907 = vadd.f32 %v665, %v3906
    %v3908 = vpop.f32.mrf.mxu0
    %v3909 = vadd.f32 %v669, %v3908
    %3910 = vdwg.mxu0
    %3911 = vmatprep.subr.bf16.mxu0 %v2625
    %3912 = vmatpush1.bf16.msra.mxu0 %v2624
    %3913 = vmatprep.subr.bf16.mxu0 %v2609
    %3914 = vmatpush1.bf16.msra.mxu0 %v2608
    %3915 = vmatprep.subr.bf16.mxu0 %v2593
    %3916 = vmatpush1.bf16.msra.mxu0 %v2592
    %3917 = vmatprep.subr.bf16.mxu0 %v2577
    %3918 = vmatpush1.bf16.msra.mxu0 %v2576
    %3919 = vmatprep.subr.bf16.mxu0 %v2561
    %3920 = vmatpush1.bf16.msra.mxu0 %v2560
    %3921 = vmatprep.subr.bf16.mxu0 %v2545
    %3922 = vmatpush1.bf16.msra.mxu0 %v2544
    %3923 = vmatprep.subr.bf16.mxu0 %v2529
    %3924 = vmatpush1.bf16.msra.mxu0 %v2528
    %3925 = vmatprep.subr.bf16.mxu0 %v2513
    %3926 = vmatpush1.bf16.msra.mxu0 %v2512
    %3927 = vmatprep.subr.bf16.mxu0 %v2753
    %3928 = vmatpush2.bf16.msra.mxu0 %v2752
    %3929 = vmatprep.subr.bf16.mxu0 %v2737
    %3930 = vmatpush2.bf16.msra.mxu0 %v2736
    %3931 = vmatprep.subr.bf16.mxu0 %v2721
    %3932 = vmatpush2.bf16.msra.mxu0 %v2720
    %3933 = vmatprep.subr.bf16.mxu0 %v2705
    %3934 = vmatpush2.bf16.msra.mxu0 %v2704
    %3935 = vmatprep.subr.bf16.mxu0 %v2689
    %3936 = vmatpush2.bf16.msra.mxu0 %v2688
    %3937 = vmatprep.subr.bf16.mxu0 %v2673
    %3938 = vmatpush2.bf16.msra.mxu0 %v2672
    %3939 = vmatprep.subr.bf16.mxu0 %v2657
    %3940 = vmatpush2.bf16.msra.mxu0 %v2656
    %3941 = vmatprep.subr.bf16.mxu0 %v2641
    %3942 = vmatpush2.bf16.msra.mxu0 %v2640
    %3943 = vmatprep.mubr.bf16.mxu0 %v701
    %3944 = vmatmul.mubr.bf16.gmra.mxu0 %v700
    %v3945 = vpop.f32.mrf.mxu0
    %v3946 = vadd.f32 %v3903, %v3945
    %v3947 = vpop.f32.mrf.mxu0
    %v3948 = vadd.f32 %v3905, %v3947
    %v3949 = vpop.f32.mrf.mxu0
    %v3950 = vadd.f32 %v3907, %v3949
    %v3951 = vpop.f32.mrf.mxu0
    %v3952 = vadd.f32 %v3909, %v3951
    %3953 = vdwg.mxu0
    %v3954 = vmul.f32 %v3344, 0.01
    %v3955 = vmul.f32 %v3346, 0.01
    %v3956 = vmul.f32 %v3430, 0.01
    %v3957 = vmul.f32 %v3432, 0.01
    %v3958 = vmul.f32 %v3516, 0.01
    %v3959 = vmul.f32 %v3518, 0.01
    %v3960 = vmul.f32 %v3602, 0.01
    %v3961 = vmul.f32 %v3604, 0.01
    %v3962 = vmul.f32 %v3688, 0.01
    %v3963 = vmul.f32 %v3690, 0.01
    %v3964 = vmul.f32 %v3774, 0.01
    %v3965 = vmul.f32 %v3776, 0.01
    %v3966 = vmul.f32 %v3860, 0.01
    %v3967 = vmul.f32 %v3862, 0.01
    %v3968 = vmul.f32 %v3946, 0.01
    %v3969 = vmul.f32 %v3948, 0.01
    %v3970 = vmul.f32 %v3348, 0.01
    %v3971 = vmul.f32 %v3350, 0.01
    %v3972 = vmul.f32 %v3434, 0.01
    %v3973 = vmul.f32 %v3436, 0.01
    %v3974 = vmul.f32 %v3520, 0.01
    %v3975 = vmul.f32 %v3522, 0.01
    %v3976 = vmul.f32 %v3606, 0.01
    %v3977 = vmul.f32 %v3608, 0.01
    %v3978 = vmul.f32 %v3692, 0.01
    %v3979 = vmul.f32 %v3694, 0.01
    %v3980 = vmul.f32 %v3778, 0.01
    %v3981 = vmul.f32 %v3780, 0.01
    %v3982 = vmul.f32 %v3864, 0.01
    %v3983 = vmul.f32 %v3866, 0.01
    %v3984 = vmul.f32 %v3950, 0.01
    %v3985 = vmul.f32 %v3952, 0.01
    %v3986 = vmax.f32 %v3344, %v3954
    %v3987 = vmax.f32 %v3346, %v3955
    %v3988 = vmax.f32 %v3430, %v3956
    %v3989 = vmax.f32 %v3432, %v3957
    %v3990 = vmax.f32 %v3516, %v3958
    %v3991 = vmax.f32 %v3518, %v3959
    %v3992 = vmax.f32 %v3602, %v3960
    %v3993 = vmax.f32 %v3604, %v3961
    %v3994 = vmax.f32 %v3688, %v3962
    %v3995 = vmax.f32 %v3690, %v3963
    %v3996 = vmax.f32 %v3774, %v3964
    %v3997 = vmax.f32 %v3776, %v3965
    %v3998 = vmax.f32 %v3860, %v3966
    %v3999 = vmax.f32 %v3862, %v3967
    %v4000 = vmax.f32 %v3946, %v3968
    %v4001 = vmax.f32 %v3948, %v3969
    %v4002 = vmax.f32 %v3348, %v3970
    %v4003 = vmax.f32 %v3350, %v3971
    %v4004 = vmax.f32 %v3434, %v3972
    %v4005 = vmax.f32 %v3436, %v3973
    %v4006 = vmax.f32 %v3520, %v3974
    %v4007 = vmax.f32 %v3522, %v3975
    %v4008 = vmax.f32 %v3606, %v3976
    %v4009 = vmax.f32 %v3608, %v3977
    %v4010 = vmax.f32 %v3692, %v3978
    %v4011 = vmax.f32 %v3694, %v3979
    %v4012 = vmax.f32 %v3778, %v3980
    %v4013 = vmax.f32 %v3780, %v3981
    %v4014 = vmax.f32 %v3864, %v3982
    %v4015 = vmax.f32 %v3866, %v3983
    %v4016 = vmax.f32 %v3950, %v3984
    %v4017 = vmax.f32 %v3952, %v3985
    %v4018 = vpack.c.bf16 %v4002, %v3986
    %v4019 = vpack.c.bf16 %v4003, %v3987
    %v4020 = vpack.c.bf16 %v4004, %v3988
    %v4021 = vpack.c.bf16 %v4005, %v3989
    %v4022 = vpack.c.bf16 %v4006, %v3990
    %v4023 = vpack.c.bf16 %v4007, %v3991
    %v4024 = vpack.c.bf16 %v4008, %v3992
    %v4025 = vpack.c.bf16 %v4009, %v3993
    %v4026 = vpack.c.bf16 %v4010, %v3994
    %v4027 = vpack.c.bf16 %v4011, %v3995
    %v4028 = vpack.c.bf16 %v4012, %v3996
    %v4029 = vpack.c.bf16 %v4013, %v3997
    %v4030 = vpack.c.bf16 %v4014, %v3998
    %v4031 = vpack.c.bf16 %v4015, %v3999
    %v4032 = vpack.c.bf16 %v4016, %v4000
    %v4033 = vpack.c.bf16 %v4017, %v4001
    %v4034 = vld [vmem:[#allocation8] sm:$0xf]
    %v4035 = vld [vmem:[#allocation8 + $0x4] sm:$0xf]
    %v4036 = vld [vmem:[#allocation8 + $0x8] sm:$0xf]
    %v4037 = vld [vmem:[#allocation8 + $0xc] sm:$0xf]
    %v4038 = vld [vmem:[#allocation8 + $0x10] sm:$0xf]
    %v4039 = vld [vmem:[#allocation8 + $0x14] sm:$0xf]
    %v4040 = vld [vmem:[#allocation8 + $0x18] sm:$0xf]
    %v4041 = vld [vmem:[#allocation8 + $0x1c] sm:$0xf]
    %v4042 = vld [vmem:[#allocation8 + $0x20] sm:$0xf]
    %v4043 = vld [vmem:[#allocation8 + $0x24] sm:$0xf]
    %v4044 = vld [vmem:[#allocation8 + $0x28] sm:$0xf]
    %v4045 = vld [vmem:[#allocation8 + $0x2c] sm:$0xf]
    %v4046 = vld [vmem:[#allocation8 + $0x30] sm:$0xf]
    %v4047 = vld [vmem:[#allocation8 + $0x34] sm:$0xf]
    %v4048 = vld [vmem:[#allocation8 + $0x38] sm:$0xf]
    %v4049 = vld [vmem:[#allocation8 + $0x3c] sm:$0xf]
    %v4050 = vld [vmem:[#allocation8 + $0x40] sm:$0xf]
    %v4051 = vld [vmem:[#allocation8 + $0x44] sm:$0xf]
    %v4052 = vld [vmem:[#allocation8 + $0x48] sm:$0xf]
    %v4053 = vld [vmem:[#allocation8 + $0x4c] sm:$0xf]
    %v4054 = vld [vmem:[#allocation8 + $0x50] sm:$0xf]
    %v4055 = vld [vmem:[#allocation8 + $0x54] sm:$0xf]
    %v4056 = vld [vmem:[#allocation8 + $0x58] sm:$0xf]
    %v4057 = vld [vmem:[#allocation8 + $0x5c] sm:$0xf]
    %v4058 = vld [vmem:[#allocation8 + $0x60] sm:$0xf]
    %v4059 = vld [vmem:[#allocation8 + $0x64] sm:$0xf]
    %v4060 = vld [vmem:[#allocation8 + $0x68] sm:$0xf]
    %v4061 = vld [vmem:[#allocation8 + $0x6c] sm:$0xf]
    %v4062 = vld [vmem:[#allocation8 + $0x70] sm:$0xf]
    %v4063 = vld [vmem:[#allocation8 + $0x74] sm:$0xf]
    %v4064 = vld [vmem:[#allocation8 + $0x78] sm:$0xf]
    %v4065 = vld [vmem:[#allocation8 + $0x7c] sm:$0xf]
    %v4066 = vld [vmem:[#allocation8 + $0x80] sm:$0xf]
    %v4067 = vld [vmem:[#allocation8 + $0x84] sm:$0xf]
    %v4068 = vld [vmem:[#allocation8 + $0x88] sm:$0xf]
    %v4069 = vld [vmem:[#allocation8 + $0x8c] sm:$0xf]
    %v4070 = vld [vmem:[#allocation8 + $0x90] sm:$0xf]
    %v4071 = vld [vmem:[#allocation8 + $0x94] sm:$0xf]
    %v4072 = vld [vmem:[#allocation8 + $0x98] sm:$0xf]
    %v4073 = vld [vmem:[#allocation8 + $0x9c] sm:$0xf]
    %v4074 = vld [vmem:[#allocation8 + $0xa0] sm:$0xf]
    %v4075 = vld [vmem:[#allocation8 + $0xa4] sm:$0xf]
    %v4076 = vld [vmem:[#allocation8 + $0xa8] sm:$0xf]
    %v4077 = vld [vmem:[#allocation8 + $0xac] sm:$0xf]
    %v4078 = vld [vmem:[#allocation8 + $0xb0] sm:$0xf]
    %v4079 = vld [vmem:[#allocation8 + $0xb4] sm:$0xf]
    %v4080 = vld [vmem:[#allocation8 + $0xb8] sm:$0xf]
    %v4081 = vld [vmem:[#allocation8 + $0xbc] sm:$0xf]
    %v4082 = vld [vmem:[#allocation8 + $0xc0] sm:$0xf]
    %v4083 = vld [vmem:[#allocation8 + $0xc4] sm:$0xf]
    %v4084 = vld [vmem:[#allocation8 + $0xc8] sm:$0xf]
    %v4085 = vld [vmem:[#allocation8 + $0xcc] sm:$0xf]
    %v4086 = vld [vmem:[#allocation8 + $0xd0] sm:$0xf]
    %v4087 = vld [vmem:[#allocation8 + $0xd4] sm:$0xf]
    %v4088 = vld [vmem:[#allocation8 + $0xd8] sm:$0xf]
    %v4089 = vld [vmem:[#allocation8 + $0xdc] sm:$0xf]
    %v4090 = vld [vmem:[#allocation8 + $0xe0] sm:$0xf]
    %v4091 = vld [vmem:[#allocation8 + $0xe4] sm:$0xf]
    %v4092 = vld [vmem:[#allocation8 + $0xe8] sm:$0xf]
    %v4093 = vld [vmem:[#allocation8 + $0xec] sm:$0xf]
    %v4094 = vld [vmem:[#allocation8 + $0xf0] sm:$0xf]
    %v4095 = vld [vmem:[#allocation8 + $0xf4] sm:$0xf]
    %v4096 = vld [vmem:[#allocation8 + $0xf8] sm:$0xf]
    %v4097 = vld [vmem:[#allocation8 + $0xfc] sm:$0xf]
    %v4098 = vld [vmem:[#allocation8 + $0x100] sm:$0xf]
    %v4099 = vld [vmem:[#allocation8 + $0x104] sm:$0xf]
    %v4100 = vld [vmem:[#allocation8 + $0x108] sm:$0xf]
    %v4101 = vld [vmem:[#allocation8 + $0x10c] sm:$0xf]
    %v4102 = vld [vmem:[#allocation8 + $0x110] sm:$0xf]
    %v4103 = vld [vmem:[#allocation8 + $0x114] sm:$0xf]
    %v4104 = vld [vmem:[#allocation8 + $0x118] sm:$0xf]
    %v4105 = vld [vmem:[#allocation8 + $0x11c] sm:$0xf]
    %v4106 = vld [vmem:[#allocation8 + $0x120] sm:$0xf]
    %v4107 = vld [vmem:[#allocation8 + $0x124] sm:$0xf]
    %v4108 = vld [vmem:[#allocation8 + $0x128] sm:$0xf]
    %v4109 = vld [vmem:[#allocation8 + $0x12c] sm:$0xf]
    %v4110 = vld [vmem:[#allocation8 + $0x130] sm:$0xf]
    %v4111 = vld [vmem:[#allocation8 + $0x134] sm:$0xf]
    %v4112 = vld [vmem:[#allocation8 + $0x138] sm:$0xf]
    %v4113 = vld [vmem:[#allocation8 + $0x13c] sm:$0xf]
    %v4114 = vld [vmem:[#allocation8 + $0x140] sm:$0xf]
    %v4115 = vld [vmem:[#allocation8 + $0x144] sm:$0xf]
    %v4116 = vld [vmem:[#allocation8 + $0x148] sm:$0xf]
    %v4117 = vld [vmem:[#allocation8 + $0x14c] sm:$0xf]
    %v4118 = vld [vmem:[#allocation8 + $0x150] sm:$0xf]
    %v4119 = vld [vmem:[#allocation8 + $0x154] sm:$0xf]
    %v4120 = vld [vmem:[#allocation8 + $0x158] sm:$0xf]
    %v4121 = vld [vmem:[#allocation8 + $0x15c] sm:$0xf]
    %v4122 = vld [vmem:[#allocation8 + $0x160] sm:$0xf]
    %v4123 = vld [vmem:[#allocation8 + $0x164] sm:$0xf]
    %v4124 = vld [vmem:[#allocation8 + $0x168] sm:$0xf]
    %v4125 = vld [vmem:[#allocation8 + $0x16c] sm:$0xf]
    %v4126 = vld [vmem:[#allocation8 + $0x170] sm:$0xf]
    %v4127 = vld [vmem:[#allocation8 + $0x174] sm:$0xf]
    %v4128 = vld [vmem:[#allocation8 + $0x178] sm:$0xf]
    %v4129 = vld [vmem:[#allocation8 + $0x17c] sm:$0xf]
    %v4130 = vld [vmem:[#allocation8 + $0x180] sm:$0xf]
    %v4131 = vld [vmem:[#allocation8 + $0x184] sm:$0xf]
    %v4132 = vld [vmem:[#allocation8 + $0x188] sm:$0xf]
    %v4133 = vld [vmem:[#allocation8 + $0x18c] sm:$0xf]
    %v4134 = vld [vmem:[#allocation8 + $0x190] sm:$0xf]
    %v4135 = vld [vmem:[#allocation8 + $0x194] sm:$0xf]
    %v4136 = vld [vmem:[#allocation8 + $0x198] sm:$0xf]
    %v4137 = vld [vmem:[#allocation8 + $0x19c] sm:$0xf]
    %v4138 = vld [vmem:[#allocation8 + $0x1a0] sm:$0xf]
    %v4139 = vld [vmem:[#allocation8 + $0x1a4] sm:$0xf]
    %v4140 = vld [vmem:[#allocation8 + $0x1a8] sm:$0xf]
    %v4141 = vld [vmem:[#allocation8 + $0x1ac] sm:$0xf]
    %v4142 = vld [vmem:[#allocation8 + $0x1b0] sm:$0xf]
    %v4143 = vld [vmem:[#allocation8 + $0x1b4] sm:$0xf]
    %v4144 = vld [vmem:[#allocation8 + $0x1b8] sm:$0xf]
    %v4145 = vld [vmem:[#allocation8 + $0x1bc] sm:$0xf]
    %v4146 = vld [vmem:[#allocation8 + $0x1c0] sm:$0xf]
    %v4147 = vld [vmem:[#allocation8 + $0x1c4] sm:$0xf]
    %v4148 = vld [vmem:[#allocation8 + $0x1c8] sm:$0xf]
    %v4149 = vld [vmem:[#allocation8 + $0x1cc] sm:$0xf]
    %v4150 = vld [vmem:[#allocation8 + $0x1d0] sm:$0xf]
    %v4151 = vld [vmem:[#allocation8 + $0x1d4] sm:$0xf]
    %v4152 = vld [vmem:[#allocation8 + $0x1d8] sm:$0xf]
    %v4153 = vld [vmem:[#allocation8 + $0x1dc] sm:$0xf]
    %v4154 = vld [vmem:[#allocation8 + $0x1e0] sm:$0xf]
    %v4155 = vld [vmem:[#allocation8 + $0x1e4] sm:$0xf]
    %v4156 = vld [vmem:[#allocation8 + $0x1e8] sm:$0xf]
    %v4157 = vld [vmem:[#allocation8 + $0x1ec] sm:$0xf]
    %v4158 = vld [vmem:[#allocation8 + $0x1f0] sm:$0xf]
    %v4159 = vld [vmem:[#allocation8 + $0x1f4] sm:$0xf]
    %v4160 = vld [vmem:[#allocation8 + $0x1f8] sm:$0xf]
    %v4161 = vld [vmem:[#allocation8 + $0x1fc] sm:$0xf]
    %v4162 = vld [vmem:[#allocation8 + $0x200] sm:$0xf]
    %v4163 = vld [vmem:[#allocation8 + $0x204] sm:$0xf]
    %v4164 = vld [vmem:[#allocation8 + $0x208] sm:$0xf]
    %v4165 = vld [vmem:[#allocation8 + $0x20c] sm:$0xf]
    %v4166 = vld [vmem:[#allocation8 + $0x210] sm:$0xf]
    %v4167 = vld [vmem:[#allocation8 + $0x214] sm:$0xf]
    %v4168 = vld [vmem:[#allocation8 + $0x218] sm:$0xf]
    %v4169 = vld [vmem:[#allocation8 + $0x21c] sm:$0xf]
    %v4170 = vld [vmem:[#allocation8 + $0x220] sm:$0xf]
    %v4171 = vld [vmem:[#allocation8 + $0x224] sm:$0xf]
    %v4172 = vld [vmem:[#allocation8 + $0x228] sm:$0xf]
    %v4173 = vld [vmem:[#allocation8 + $0x22c] sm:$0xf]
    %v4174 = vld [vmem:[#allocation8 + $0x230] sm:$0xf]
    %v4175 = vld [vmem:[#allocation8 + $0x234] sm:$0xf]
    %v4176 = vld [vmem:[#allocation8 + $0x238] sm:$0xf]
    %v4177 = vld [vmem:[#allocation8 + $0x23c] sm:$0xf]
    %v4178 = vld [vmem:[#allocation8 + $0x240] sm:$0xf]
    %v4179 = vld [vmem:[#allocation8 + $0x244] sm:$0xf]
    %v4180 = vld [vmem:[#allocation8 + $0x248] sm:$0xf]
    %v4181 = vld [vmem:[#allocation8 + $0x24c] sm:$0xf]
    %v4182 = vld [vmem:[#allocation8 + $0x250] sm:$0xf]
    %v4183 = vld [vmem:[#allocation8 + $0x254] sm:$0xf]
    %v4184 = vld [vmem:[#allocation8 + $0x258] sm:$0xf]
    %v4185 = vld [vmem:[#allocation8 + $0x25c] sm:$0xf]
    %v4186 = vld [vmem:[#allocation8 + $0x260] sm:$0xf]
    %v4187 = vld [vmem:[#allocation8 + $0x264] sm:$0xf]
    %v4188 = vld [vmem:[#allocation8 + $0x268] sm:$0xf]
    %v4189 = vld [vmem:[#allocation8 + $0x26c] sm:$0xf]
    %v4190 = vld [vmem:[#allocation8 + $0x270] sm:$0xf]
    %v4191 = vld [vmem:[#allocation8 + $0x274] sm:$0xf]
    %v4192 = vld [vmem:[#allocation8 + $0x278] sm:$0xf]
    %v4193 = vld [vmem:[#allocation8 + $0x27c] sm:$0xf]
    %v4194 = vld [vmem:[#allocation8 + $0x280] sm:$0xf]
    %v4195 = vld [vmem:[#allocation8 + $0x284] sm:$0xf]
    %v4196 = vld [vmem:[#allocation8 + $0x288] sm:$0xf]
    %v4197 = vld [vmem:[#allocation8 + $0x28c] sm:$0xf]
    %v4198 = vld [vmem:[#allocation8 + $0x290] sm:$0xf]
    %v4199 = vld [vmem:[#allocation8 + $0x294] sm:$0xf]
    %v4200 = vld [vmem:[#allocation8 + $0x298] sm:$0xf]
    %v4201 = vld [vmem:[#allocation8 + $0x29c] sm:$0xf]
    %v4202 = vld [vmem:[#allocation8 + $0x2a0] sm:$0xf]
    %v4203 = vld [vmem:[#allocation8 + $0x2a4] sm:$0xf]
    %v4204 = vld [vmem:[#allocation8 + $0x2a8] sm:$0xf]
    %v4205 = vld [vmem:[#allocation8 + $0x2ac] sm:$0xf]
    %v4206 = vld [vmem:[#allocation8 + $0x2b0] sm:$0xf]
    %v4207 = vld [vmem:[#allocation8 + $0x2b4] sm:$0xf]
    %v4208 = vld [vmem:[#allocation8 + $0x2b8] sm:$0xf]
    %v4209 = vld [vmem:[#allocation8 + $0x2bc] sm:$0xf]
    %v4210 = vld [vmem:[#allocation8 + $0x2c0] sm:$0xf]
    %v4211 = vld [vmem:[#allocation8 + $0x2c4] sm:$0xf]
    %v4212 = vld [vmem:[#allocation8 + $0x2c8] sm:$0xf]
    %v4213 = vld [vmem:[#allocation8 + $0x2cc] sm:$0xf]
    %v4214 = vld [vmem:[#allocation8 + $0x2d0] sm:$0xf]
    %v4215 = vld [vmem:[#allocation8 + $0x2d4] sm:$0xf]
    %v4216 = vld [vmem:[#allocation8 + $0x2d8] sm:$0xf]
    %v4217 = vld [vmem:[#allocation8 + $0x2dc] sm:$0xf]
    %v4218 = vld [vmem:[#allocation8 + $0x2e0] sm:$0xf]
    %v4219 = vld [vmem:[#allocation8 + $0x2e4] sm:$0xf]
    %v4220 = vld [vmem:[#allocation8 + $0x2e8] sm:$0xf]
    %v4221 = vld [vmem:[#allocation8 + $0x2ec] sm:$0xf]
    %v4222 = vld [vmem:[#allocation8 + $0x2f0] sm:$0xf]
    %v4223 = vld [vmem:[#allocation8 + $0x2f4] sm:$0xf]
    %v4224 = vld [vmem:[#allocation8 + $0x2f8] sm:$0xf]
    %v4225 = vld [vmem:[#allocation8 + $0x2fc] sm:$0xf]
    %v4226 = vld [vmem:[#allocation8 + $0x300] sm:$0xf]
    %v4227 = vld [vmem:[#allocation8 + $0x304] sm:$0xf]
    %v4228 = vld [vmem:[#allocation8 + $0x308] sm:$0xf]
    %v4229 = vld [vmem:[#allocation8 + $0x30c] sm:$0xf]
    %v4230 = vld [vmem:[#allocation8 + $0x310] sm:$0xf]
    %v4231 = vld [vmem:[#allocation8 + $0x314] sm:$0xf]
    %v4232 = vld [vmem:[#allocation8 + $0x318] sm:$0xf]
    %v4233 = vld [vmem:[#allocation8 + $0x31c] sm:$0xf]
    %v4234 = vld [vmem:[#allocation8 + $0x320] sm:$0xf]
    %v4235 = vld [vmem:[#allocation8 + $0x324] sm:$0xf]
    %v4236 = vld [vmem:[#allocation8 + $0x328] sm:$0xf]
    %v4237 = vld [vmem:[#allocation8 + $0x32c] sm:$0xf]
    %v4238 = vld [vmem:[#allocation8 + $0x330] sm:$0xf]
    %v4239 = vld [vmem:[#allocation8 + $0x334] sm:$0xf]
    %v4240 = vld [vmem:[#allocation8 + $0x338] sm:$0xf]
    %v4241 = vld [vmem:[#allocation8 + $0x33c] sm:$0xf]
    %v4242 = vld [vmem:[#allocation8 + $0x340] sm:$0xf]
    %v4243 = vld [vmem:[#allocation8 + $0x344] sm:$0xf]
    %v4244 = vld [vmem:[#allocation8 + $0x348] sm:$0xf]
    %v4245 = vld [vmem:[#allocation8 + $0x34c] sm:$0xf]
    %v4246 = vld [vmem:[#allocation8 + $0x350] sm:$0xf]
    %v4247 = vld [vmem:[#allocation8 + $0x354] sm:$0xf]
    %v4248 = vld [vmem:[#allocation8 + $0x358] sm:$0xf]
    %v4249 = vld [vmem:[#allocation8 + $0x35c] sm:$0xf]
    %v4250 = vld [vmem:[#allocation8 + $0x360] sm:$0xf]
    %v4251 = vld [vmem:[#allocation8 + $0x364] sm:$0xf]
    %v4252 = vld [vmem:[#allocation8 + $0x368] sm:$0xf]
    %v4253 = vld [vmem:[#allocation8 + $0x36c] sm:$0xf]
    %v4254 = vld [vmem:[#allocation8 + $0x370] sm:$0xf]
    %v4255 = vld [vmem:[#allocation8 + $0x374] sm:$0xf]
    %v4256 = vld [vmem:[#allocation8 + $0x378] sm:$0xf]
    %v4257 = vld [vmem:[#allocation8 + $0x37c] sm:$0xf]
    %v4258 = vld [vmem:[#allocation8 + $0x380] sm:$0xf]
    %v4259 = vld [vmem:[#allocation8 + $0x384] sm:$0xf]
    %v4260 = vld [vmem:[#allocation8 + $0x388] sm:$0xf]
    %v4261 = vld [vmem:[#allocation8 + $0x38c] sm:$0xf]
    %v4262 = vld [vmem:[#allocation8 + $0x390] sm:$0xf]
    %v4263 = vld [vmem:[#allocation8 + $0x394] sm:$0xf]
    %v4264 = vld [vmem:[#allocation8 + $0x398] sm:$0xf]
    %v4265 = vld [vmem:[#allocation8 + $0x39c] sm:$0xf]
    %v4266 = vld [vmem:[#allocation8 + $0x3a0] sm:$0xf]
    %v4267 = vld [vmem:[#allocation8 + $0x3a4] sm:$0xf]
    %v4268 = vld [vmem:[#allocation8 + $0x3a8] sm:$0xf]
    %v4269 = vld [vmem:[#allocation8 + $0x3ac] sm:$0xf]
    %v4270 = vld [vmem:[#allocation8 + $0x3b0] sm:$0xf]
    %v4271 = vld [vmem:[#allocation8 + $0x3b4] sm:$0xf]
    %v4272 = vld [vmem:[#allocation8 + $0x3b8] sm:$0xf]
    %v4273 = vld [vmem:[#allocation8 + $0x3bc] sm:$0xf]
    %v4274 = vld [vmem:[#allocation8 + $0x3c0] sm:$0xf]
    %v4275 = vld [vmem:[#allocation8 + $0x3c4] sm:$0xf]
    %v4276 = vld [vmem:[#allocation8 + $0x3c8] sm:$0xf]
    %v4277 = vld [vmem:[#allocation8 + $0x3cc] sm:$0xf]
    %v4278 = vld [vmem:[#allocation8 + $0x3d0] sm:$0xf]
    %v4279 = vld [vmem:[#allocation8 + $0x3d4] sm:$0xf]
    %v4280 = vld [vmem:[#allocation8 + $0x3d8] sm:$0xf]
    %v4281 = vld [vmem:[#allocation8 + $0x3dc] sm:$0xf]
    %v4282 = vld [vmem:[#allocation8 + $0x3e0] sm:$0xf]
    %v4283 = vld [vmem:[#allocation8 + $0x3e4] sm:$0xf]
    %v4284 = vld [vmem:[#allocation8 + $0x3e8] sm:$0xf]
    %v4285 = vld [vmem:[#allocation8 + $0x3ec] sm:$0xf]
    %v4286 = vld [vmem:[#allocation8 + $0x3f0] sm:$0xf]
    %v4287 = vld [vmem:[#allocation8 + $0x3f4] sm:$0xf]
    %v4288 = vld [vmem:[#allocation8 + $0x3f8] sm:$0xf]
    %v4289 = vld [vmem:[#allocation8 + $0x3fc] sm:$0xf]
    %v4290 = vld [vmem:[#allocation10] sm:$0x1]
    %v4292 = vlaneseq
    %v4293 = vshrl.u32 %v4292, 7
    %v4294 = vsub.s32 0, %v4293
    %v4295 = vrot.slane %v4290, %v4294
    %v4553 = vunpack.c.l.b16 %v4034
    %v4554 = vunpack.c.l.b16 %v4035
    %v4555 = vunpack.c.l.b16 %v4036
    %v4556 = vunpack.c.l.b16 %v4037
    %v4557 = vunpack.c.l.b16 %v4038
    %v4558 = vunpack.c.l.b16 %v4039
    %v4559 = vunpack.c.l.b16 %v4040
    %v4560 = vunpack.c.l.b16 %v4041
    %v4561 = vunpack.c.l.b16 %v4042
    %v4562 = vunpack.c.l.b16 %v4043
    %v4563 = vunpack.c.l.b16 %v4044
    %v4564 = vunpack.c.l.b16 %v4045
    %v4565 = vunpack.c.l.b16 %v4046
    %v4566 = vunpack.c.l.b16 %v4047
    %v4567 = vunpack.c.l.b16 %v4048
    %v4568 = vunpack.c.l.b16 %v4049
    %v4569 = vunpack.c.l.b16 %v4050
    %v4570 = vunpack.c.l.b16 %v4051
    %v4571 = vunpack.c.l.b16 %v4052
    %v4572 = vunpack.c.l.b16 %v4053
    %v4573 = vunpack.c.l.b16 %v4054
    %v4574 = vunpack.c.l.b16 %v4055
    %v4575 = vunpack.c.l.b16 %v4056
    %v4576 = vunpack.c.l.b16 %v4057
    %v4577 = vunpack.c.l.b16 %v4058
    %v4578 = vunpack.c.l.b16 %v4059
    %v4579 = vunpack.c.l.b16 %v4060
    %v4580 = vunpack.c.l.b16 %v4061
    %v4581 = vunpack.c.l.b16 %v4062
    %v4582 = vunpack.c.l.b16 %v4063
    %v4583 = vunpack.c.l.b16 %v4064
    %v4584 = vunpack.c.l.b16 %v4065
    %v4585 = vunpack.c.l.b16 %v4066
    %v4586 = vunpack.c.l.b16 %v4067
    %v4587 = vunpack.c.l.b16 %v4068
    %v4588 = vunpack.c.l.b16 %v4069
    %v4589 = vunpack.c.l.b16 %v4070
    %v4590 = vunpack.c.l.b16 %v4071
    %v4591 = vunpack.c.l.b16 %v4072
    %v4592 = vunpack.c.l.b16 %v4073
    %v4593 = vunpack.c.l.b16 %v4074
    %v4594 = vunpack.c.l.b16 %v4075
    %v4595 = vunpack.c.l.b16 %v4076
    %v4596 = vunpack.c.l.b16 %v4077
    %v4597 = vunpack.c.l.b16 %v4078
    %v4598 = vunpack.c.l.b16 %v4079
    %v4599 = vunpack.c.l.b16 %v4080
    %v4600 = vunpack.c.l.b16 %v4081
    %v4601 = vunpack.c.l.b16 %v4082
    %v4602 = vunpack.c.l.b16 %v4083
    %v4603 = vunpack.c.l.b16 %v4084
    %v4604 = vunpack.c.l.b16 %v4085
    %v4605 = vunpack.c.l.b16 %v4086
    %v4606 = vunpack.c.l.b16 %v4087
    %v4607 = vunpack.c.l.b16 %v4088
    %v4608 = vunpack.c.l.b16 %v4089
    %v4609 = vunpack.c.l.b16 %v4090
    %v4610 = vunpack.c.l.b16 %v4091
    %v4611 = vunpack.c.l.b16 %v4092
    %v4612 = vunpack.c.l.b16 %v4093
    %v4613 = vunpack.c.l.b16 %v4094
    %v4614 = vunpack.c.l.b16 %v4095
    %v4615 = vunpack.c.l.b16 %v4096
    %v4616 = vunpack.c.l.b16 %v4097
    %v4617 = vunpack.c.l.b16 %v4098
    %v4618 = vunpack.c.l.b16 %v4099
    %v4619 = vunpack.c.l.b16 %v4100
    %v4620 = vunpack.c.l.b16 %v4101
    %v4621 = vunpack.c.l.b16 %v4102
    %v4622 = vunpack.c.l.b16 %v4103
    %v4623 = vunpack.c.l.b16 %v4104
    %v4624 = vunpack.c.l.b16 %v4105
    %v4625 = vunpack.c.l.b16 %v4106
    %v4626 = vunpack.c.l.b16 %v4107
    %v4627 = vunpack.c.l.b16 %v4108
    %v4628 = vunpack.c.l.b16 %v4109
    %v4629 = vunpack.c.l.b16 %v4110
    %v4630 = vunpack.c.l.b16 %v4111
    %v4631 = vunpack.c.l.b16 %v4112
    %v4632 = vunpack.c.l.b16 %v4113
    %v4633 = vunpack.c.l.b16 %v4114
    %v4634 = vunpack.c.l.b16 %v4115
    %v4635 = vunpack.c.l.b16 %v4116
    %v4636 = vunpack.c.l.b16 %v4117
    %v4637 = vunpack.c.l.b16 %v4118
    %v4638 = vunpack.c.l.b16 %v4119
    %v4639 = vunpack.c.l.b16 %v4120
    %v4640 = vunpack.c.l.b16 %v4121
    %v4641 = vunpack.c.l.b16 %v4122
    %v4642 = vunpack.c.l.b16 %v4123
    %v4643 = vunpack.c.l.b16 %v4124
    %v4644 = vunpack.c.l.b16 %v4125
    %v4645 = vunpack.c.l.b16 %v4126
    %v4646 = vunpack.c.l.b16 %v4127
    %v4647 = vunpack.c.l.b16 %v4128
    %v4648 = vunpack.c.l.b16 %v4129
    %v4649 = vunpack.c.l.b16 %v4130
    %v4650 = vunpack.c.l.b16 %v4131
    %v4651 = vunpack.c.l.b16 %v4132
    %v4652 = vunpack.c.l.b16 %v4133
    %v4653 = vunpack.c.l.b16 %v4134
    %v4654 = vunpack.c.l.b16 %v4135
    %v4655 = vunpack.c.l.b16 %v4136
    %v4656 = vunpack.c.l.b16 %v4137
    %v4657 = vunpack.c.l.b16 %v4138
    %v4658 = vunpack.c.l.b16 %v4139
    %v4659 = vunpack.c.l.b16 %v4140
    %v4660 = vunpack.c.l.b16 %v4141
    %v4661 = vunpack.c.l.b16 %v4142
    %v4662 = vunpack.c.l.b16 %v4143
    %v4663 = vunpack.c.l.b16 %v4144
    %v4664 = vunpack.c.l.b16 %v4145
    %v4665 = vunpack.c.l.b16 %v4146
    %v4666 = vunpack.c.l.b16 %v4147
    %v4667 = vunpack.c.l.b16 %v4148
    %v4668 = vunpack.c.l.b16 %v4149
    %v4669 = vunpack.c.l.b16 %v4150
    %v4670 = vunpack.c.l.b16 %v4151
    %v4671 = vunpack.c.l.b16 %v4152
    %v4672 = vunpack.c.l.b16 %v4153
    %v4673 = vunpack.c.l.b16 %v4154
    %v4674 = vunpack.c.l.b16 %v4155
    %v4675 = vunpack.c.l.b16 %v4156
    %v4676 = vunpack.c.l.b16 %v4157
    %v4677 = vunpack.c.l.b16 %v4158
    %v4678 = vunpack.c.l.b16 %v4159
    %v4679 = vunpack.c.l.b16 %v4160
    %v4680 = vunpack.c.l.b16 %v4161
    %v4681 = vunpack.c.l.b16 %v4162
    %v4682 = vunpack.c.l.b16 %v4163
    %v4683 = vunpack.c.l.b16 %v4164
    %v4684 = vunpack.c.l.b16 %v4165
    %v4685 = vunpack.c.l.b16 %v4166
    %v4686 = vunpack.c.l.b16 %v4167
    %v4687 = vunpack.c.l.b16 %v4168
    %v4688 = vunpack.c.l.b16 %v4169
    %v4689 = vunpack.c.l.b16 %v4170
    %v4690 = vunpack.c.l.b16 %v4171
    %v4691 = vunpack.c.l.b16 %v4172
    %v4692 = vunpack.c.l.b16 %v4173
    %v4693 = vunpack.c.l.b16 %v4174
    %v4694 = vunpack.c.l.b16 %v4175
    %v4695 = vunpack.c.l.b16 %v4176
    %v4696 = vunpack.c.l.b16 %v4177
    %v4697 = vunpack.c.l.b16 %v4178
    %v4698 = vunpack.c.l.b16 %v4179
    %v4699 = vunpack.c.l.b16 %v4180
    %v4700 = vunpack.c.l.b16 %v4181
    %v4701 = vunpack.c.l.b16 %v4182
    %v4702 = vunpack.c.l.b16 %v4183
    %v4703 = vunpack.c.l.b16 %v4184
    %v4704 = vunpack.c.l.b16 %v4185
    %v4705 = vunpack.c.l.b16 %v4186
    %v4706 = vunpack.c.l.b16 %v4187
    %v4707 = vunpack.c.l.b16 %v4188
    %v4708 = vunpack.c.l.b16 %v4189
    %v4709 = vunpack.c.l.b16 %v4190
    %v4710 = vunpack.c.l.b16 %v4191
    %v4711 = vunpack.c.l.b16 %v4192
    %v4712 = vunpack.c.l.b16 %v4193
    %v4713 = vunpack.c.l.b16 %v4194
    %v4714 = vunpack.c.l.b16 %v4195
    %v4715 = vunpack.c.l.b16 %v4196
    %v4716 = vunpack.c.l.b16 %v4197
    %v4717 = vunpack.c.l.b16 %v4198
    %v4718 = vunpack.c.l.b16 %v4199
    %v4719 = vunpack.c.l.b16 %v4200
    %v4720 = vunpack.c.l.b16 %v4201
    %v4721 = vunpack.c.l.b16 %v4202
    %v4722 = vunpack.c.l.b16 %v4203
    %v4723 = vunpack.c.l.b16 %v4204
    %v4724 = vunpack.c.l.b16 %v4205
    %v4725 = vunpack.c.l.b16 %v4206
    %v4726 = vunpack.c.l.b16 %v4207
    %v4727 = vunpack.c.l.b16 %v4208
    %v4728 = vunpack.c.l.b16 %v4209
    %v4729 = vunpack.c.l.b16 %v4210
    %v4730 = vunpack.c.l.b16 %v4211
    %v4731 = vunpack.c.l.b16 %v4212
    %v4732 = vunpack.c.l.b16 %v4213
    %v4733 = vunpack.c.l.b16 %v4214
    %v4734 = vunpack.c.l.b16 %v4215
    %v4735 = vunpack.c.l.b16 %v4216
    %v4736 = vunpack.c.l.b16 %v4217
    %v4737 = vunpack.c.l.b16 %v4218
    %v4738 = vunpack.c.l.b16 %v4219
    %v4739 = vunpack.c.l.b16 %v4220
    %v4740 = vunpack.c.l.b16 %v4221
    %v4741 = vunpack.c.l.b16 %v4222
    %v4742 = vunpack.c.l.b16 %v4223
    %v4743 = vunpack.c.l.b16 %v4224
    %v4744 = vunpack.c.l.b16 %v4225
    %v4745 = vunpack.c.l.b16 %v4226
    %v4746 = vunpack.c.l.b16 %v4227
    %v4747 = vunpack.c.l.b16 %v4228
    %v4748 = vunpack.c.l.b16 %v4229
    %v4749 = vunpack.c.l.b16 %v4230
    %v4750 = vunpack.c.l.b16 %v4231
    %v4751 = vunpack.c.l.b16 %v4232
    %v4752 = vunpack.c.l.b16 %v4233
    %v4753 = vunpack.c.l.b16 %v4234
    %v4754 = vunpack.c.l.b16 %v4235
    %v4755 = vunpack.c.l.b16 %v4236
    %v4756 = vunpack.c.l.b16 %v4237
    %v4757 = vunpack.c.l.b16 %v4238
    %v4758 = vunpack.c.l.b16 %v4239
    %v4759 = vunpack.c.l.b16 %v4240
    %v4760 = vunpack.c.l.b16 %v4241
    %v4761 = vunpack.c.l.b16 %v4242
    %v4762 = vunpack.c.l.b16 %v4243
    %v4763 = vunpack.c.l.b16 %v4244
    %v4764 = vunpack.c.l.b16 %v4245
    %v4765 = vunpack.c.l.b16 %v4246
    %v4766 = vunpack.c.l.b16 %v4247
    %v4767 = vunpack.c.l.b16 %v4248
    %v4768 = vunpack.c.l.b16 %v4249
    %v4769 = vunpack.c.l.b16 %v4250
    %v4770 = vunpack.c.l.b16 %v4251
    %v4771 = vunpack.c.l.b16 %v4252
    %v4772 = vunpack.c.l.b16 %v4253
    %v4773 = vunpack.c.l.b16 %v4254
    %v4774 = vunpack.c.l.b16 %v4255
    %v4775 = vunpack.c.l.b16 %v4256
    %v4776 = vunpack.c.l.b16 %v4257
    %v4777 = vunpack.c.l.b16 %v4258
    %v4778 = vunpack.c.l.b16 %v4259
    %v4779 = vunpack.c.l.b16 %v4260
    %v4780 = vunpack.c.l.b16 %v4261
    %v4781 = vunpack.c.l.b16 %v4262
    %v4782 = vunpack.c.l.b16 %v4263
    %v4783 = vunpack.c.l.b16 %v4264
    %v4784 = vunpack.c.l.b16 %v4265
    %v4785 = vunpack.c.l.b16 %v4266
    %v4786 = vunpack.c.l.b16 %v4267
    %v4787 = vunpack.c.l.b16 %v4268
    %v4788 = vunpack.c.l.b16 %v4269
    %v4789 = vunpack.c.l.b16 %v4270
    %v4790 = vunpack.c.l.b16 %v4271
    %v4791 = vunpack.c.l.b16 %v4272
    %v4792 = vunpack.c.l.b16 %v4273
    %v4793 = vunpack.c.l.b16 %v4274
    %v4794 = vunpack.c.l.b16 %v4275
    %v4795 = vunpack.c.l.b16 %v4276
    %v4796 = vunpack.c.l.b16 %v4277
    %v4797 = vunpack.c.l.b16 %v4278
    %v4798 = vunpack.c.l.b16 %v4279
    %v4799 = vunpack.c.l.b16 %v4280
    %v4800 = vunpack.c.l.b16 %v4281
    %v4801 = vunpack.c.l.b16 %v4282
    %v4802 = vunpack.c.l.b16 %v4283
    %v4803 = vunpack.c.l.b16 %v4284
    %v4804 = vunpack.c.l.b16 %v4285
    %v4805 = vunpack.c.l.b16 %v4286
    %v4806 = vunpack.c.l.b16 %v4287
    %v4807 = vunpack.c.l.b16 %v4288
    %v4808 = vunpack.c.l.b16 %v4289
    %v4809 = vpack.c.b16 %v4554, %v4553
    %v4810 = vpack.c.b16 %v4556, %v4555
    %v4811 = vpack.c.b16 %v4558, %v4557
    %v4812 = vpack.c.b16 %v4560, %v4559
    %v4813 = vpack.c.b16 %v4562, %v4561
    %v4814 = vpack.c.b16 %v4564, %v4563
    %v4815 = vpack.c.b16 %v4566, %v4565
    %v4816 = vpack.c.b16 %v4568, %v4567
    %v4817 = vpack.c.b16 %v4570, %v4569
    %v4818 = vpack.c.b16 %v4572, %v4571
    %v4819 = vpack.c.b16 %v4574, %v4573
    %v4820 = vpack.c.b16 %v4576, %v4575
    %v4821 = vpack.c.b16 %v4578, %v4577
    %v4822 = vpack.c.b16 %v4580, %v4579
    %v4823 = vpack.c.b16 %v4582, %v4581
    %v4824 = vpack.c.b16 %v4584, %v4583
    %v4825 = vpack.c.b16 %v4586, %v4585
    %v4826 = vpack.c.b16 %v4588, %v4587
    %v4827 = vpack.c.b16 %v4590, %v4589
    %v4828 = vpack.c.b16 %v4592, %v4591
    %v4829 = vpack.c.b16 %v4594, %v4593
    %v4830 = vpack.c.b16 %v4596, %v4595
    %v4831 = vpack.c.b16 %v4598, %v4597
    %v4832 = vpack.c.b16 %v4600, %v4599
    %v4833 = vpack.c.b16 %v4602, %v4601
    %v4834 = vpack.c.b16 %v4604, %v4603
    %v4835 = vpack.c.b16 %v4606, %v4605
    %v4836 = vpack.c.b16 %v4608, %v4607
    %v4837 = vpack.c.b16 %v4610, %v4609
    %v4838 = vpack.c.b16 %v4612, %v4611
    %v4839 = vpack.c.b16 %v4614, %v4613
    %v4840 = vpack.c.b16 %v4616, %v4615
    %v4841 = vpack.c.b16 %v4618, %v4617
    %v4842 = vpack.c.b16 %v4620, %v4619
    %v4843 = vpack.c.b16 %v4622, %v4621
    %v4844 = vpack.c.b16 %v4624, %v4623
    %v4845 = vpack.c.b16 %v4626, %v4625
    %v4846 = vpack.c.b16 %v4628, %v4627
    %v4847 = vpack.c.b16 %v4630, %v4629
    %v4848 = vpack.c.b16 %v4632, %v4631
    %v4849 = vpack.c.b16 %v4634, %v4633
    %v4850 = vpack.c.b16 %v4636, %v4635
    %v4851 = vpack.c.b16 %v4638, %v4637
    %v4852 = vpack.c.b16 %v4640, %v4639
    %v4853 = vpack.c.b16 %v4642, %v4641
    %v4854 = vpack.c.b16 %v4644, %v4643
    %v4855 = vpack.c.b16 %v4646, %v4645
    %v4856 = vpack.c.b16 %v4648, %v4647
    %v4857 = vpack.c.b16 %v4650, %v4649
    %v4858 = vpack.c.b16 %v4652, %v4651
    %v4859 = vpack.c.b16 %v4654, %v4653
    %v4860 = vpack.c.b16 %v4656, %v4655
    %v4861 = vpack.c.b16 %v4658, %v4657
    %v4862 = vpack.c.b16 %v4660, %v4659
    %v4863 = vpack.c.b16 %v4662, %v4661
    %v4864 = vpack.c.b16 %v4664, %v4663
    %v4865 = vpack.c.b16 %v4666, %v4665
    %v4866 = vpack.c.b16 %v4668, %v4667
    %v4867 = vpack.c.b16 %v4670, %v4669
    %v4868 = vpack.c.b16 %v4672, %v4671
    %v4869 = vpack.c.b16 %v4674, %v4673
    %v4870 = vpack.c.b16 %v4676, %v4675
    %v4871 = vpack.c.b16 %v4678, %v4677
    %v4872 = vpack.c.b16 %v4680, %v4679
    %v4873 = vpack.c.b16 %v4682, %v4681
    %v4874 = vpack.c.b16 %v4684, %v4683
    %v4875 = vpack.c.b16 %v4686, %v4685
    %v4876 = vpack.c.b16 %v4688, %v4687
    %v4877 = vpack.c.b16 %v4690, %v4689
    %v4878 = vpack.c.b16 %v4692, %v4691
    %v4879 = vpack.c.b16 %v4694, %v4693
    %v4880 = vpack.c.b16 %v4696, %v4695
    %v4881 = vpack.c.b16 %v4698, %v4697
    %v4882 = vpack.c.b16 %v4700, %v4699
    %v4883 = vpack.c.b16 %v4702, %v4701
    %v4884 = vpack.c.b16 %v4704, %v4703
    %v4885 = vpack.c.b16 %v4706, %v4705
    %v4886 = vpack.c.b16 %v4708, %v4707
    %v4887 = vpack.c.b16 %v4710, %v4709
    %v4888 = vpack.c.b16 %v4712, %v4711
    %v4889 = vpack.c.b16 %v4714, %v4713
    %v4890 = vpack.c.b16 %v4716, %v4715
    %v4891 = vpack.c.b16 %v4718, %v4717
    %v4892 = vpack.c.b16 %v4720, %v4719
    %v4893 = vpack.c.b16 %v4722, %v4721
    %v4894 = vpack.c.b16 %v4724, %v4723
    %v4895 = vpack.c.b16 %v4726, %v4725
    %v4896 = vpack.c.b16 %v4728, %v4727
    %v4897 = vpack.c.b16 %v4730, %v4729
    %v4898 = vpack.c.b16 %v4732, %v4731
    %v4899 = vpack.c.b16 %v4734, %v4733
    %v4900 = vpack.c.b16 %v4736, %v4735
    %v4901 = vpack.c.b16 %v4738, %v4737
    %v4902 = vpack.c.b16 %v4740, %v4739
    %v4903 = vpack.c.b16 %v4742, %v4741
    %v4904 = vpack.c.b16 %v4744, %v4743
    %v4905 = vpack.c.b16 %v4746, %v4745
    %v4906 = vpack.c.b16 %v4748, %v4747
    %v4907 = vpack.c.b16 %v4750, %v4749
    %v4908 = vpack.c.b16 %v4752, %v4751
    %v4909 = vpack.c.b16 %v4754, %v4753
    %v4910 = vpack.c.b16 %v4756, %v4755
    %v4911 = vpack.c.b16 %v4758, %v4757
    %v4912 = vpack.c.b16 %v4760, %v4759
    %v4913 = vpack.c.b16 %v4762, %v4761
    %v4914 = vpack.c.b16 %v4764, %v4763
    %v4915 = vpack.c.b16 %v4766, %v4765
    %v4916 = vpack.c.b16 %v4768, %v4767
    %v4917 = vpack.c.b16 %v4770, %v4769
    %v4918 = vpack.c.b16 %v4772, %v4771
    %v4919 = vpack.c.b16 %v4774, %v4773
    %v4920 = vpack.c.b16 %v4776, %v4775
    %v4921 = vpack.c.b16 %v4778, %v4777
    %v4922 = vpack.c.b16 %v4780, %v4779
    %v4923 = vpack.c.b16 %v4782, %v4781
    %v4924 = vpack.c.b16 %v4784, %v4783
    %v4925 = vpack.c.b16 %v4786, %v4785
    %v4926 = vpack.c.b16 %v4788, %v4787
    %v4927 = vpack.c.b16 %v4790, %v4789
    %v4928 = vpack.c.b16 %v4792, %v4791
    %v4929 = vpack.c.b16 %v4794, %v4793
    %v4930 = vpack.c.b16 %v4796, %v4795
    %v4931 = vpack.c.b16 %v4798, %v4797
    %v4932 = vpack.c.b16 %v4800, %v4799
    %v4933 = vpack.c.b16 %v4802, %v4801
    %v4934 = vpack.c.b16 %v4804, %v4803
    %v4935 = vpack.c.b16 %v4806, %v4805
    %v4936 = vpack.c.b16 %v4808, %v4807
    %5065 = vmatprep.subr.bf16.mxu0 0
    %5066 = vmatpush1.bf16.msra.mxu0 %v4816
    %5067 = vmatprep.subr.bf16.mxu0 0
    %5068 = vmatpush1.bf16.msra.mxu0 %v4815
    %5069 = vmatprep.subr.bf16.mxu0 0
    %5070 = vmatpush1.bf16.msra.mxu0 %v4814
    %5071 = vmatprep.subr.bf16.mxu0 0
    %5072 = vmatpush1.bf16.msra.mxu0 %v4813
    %5073 = vmatprep.subr.bf16.mxu0 0
    %5074 = vmatpush1.bf16.msra.mxu0 %v4812
    %5075 = vmatprep.subr.bf16.mxu0 0
    %5076 = vmatpush1.bf16.msra.mxu0 %v4811
    %5077 = vmatprep.subr.bf16.mxu0 0
    %5078 = vmatpush1.bf16.msra.mxu0 %v4810
    %5079 = vmatprep.subr.bf16.mxu0 0
    %5080 = vmatpush1.bf16.msra.mxu0 %v4809
    %5081 = vmatprep.subr.bf16.mxu0 0
    %5082 = vmatpush2.bf16.msra.mxu0 %v4824
    %5083 = vmatprep.subr.bf16.mxu0 0
    %5084 = vmatpush2.bf16.msra.mxu0 %v4823
    %5085 = vmatprep.subr.bf16.mxu0 0
    %5086 = vmatpush2.bf16.msra.mxu0 %v4822
    %5087 = vmatprep.subr.bf16.mxu0 0
    %5088 = vmatpush2.bf16.msra.mxu0 %v4821
    %5089 = vmatprep.subr.bf16.mxu0 0
    %5090 = vmatpush2.bf16.msra.mxu0 %v4820
    %5091 = vmatprep.subr.bf16.mxu0 0
    %5092 = vmatpush2.bf16.msra.mxu0 %v4819
    %5093 = vmatprep.subr.bf16.mxu0 0
    %5094 = vmatpush2.bf16.msra.mxu0 %v4818
    %5095 = vmatprep.subr.bf16.mxu0 0
    %5096 = vmatpush2.bf16.msra.mxu0 %v4817
    %5097 = vmatprep.mubr.bf16.mxu0 %v4019
    %5098 = vmatmul.mubr.bf16.gmra.mxu0 %v4018
    %v5099 = vpop.f32.mrf.mxu0
    %v5100 = vadd.f32 %v4295, %v5099
    %v5101 = vpop.f32.mrf.mxu0
    %v5102 = vpop.f32.mrf.mxu0
    %v5103 = vadd.f32 %v4295, %v5102
    %v5104 = vpop.f32.mrf.mxu0
    %5105 = vdwg.mxu0
    %5106 = vmatprep.subr.bf16.mxu0 0
    %5107 = vmatpush1.bf16.msra.mxu0 %v4832
    %5108 = vmatprep.subr.bf16.mxu0 0
    %5109 = vmatpush1.bf16.msra.mxu0 %v4831
    %5110 = vmatprep.subr.bf16.mxu0 0
    %5111 = vmatpush1.bf16.msra.mxu0 %v4830
    %5112 = vmatprep.subr.bf16.mxu0 0
    %5113 = vmatpush1.bf16.msra.mxu0 %v4829
    %5114 = vmatprep.subr.bf16.mxu0 0
    %5115 = vmatpush1.bf16.msra.mxu0 %v4828
    %5116 = vmatprep.subr.bf16.mxu0 0
    %5117 = vmatpush1.bf16.msra.mxu0 %v4827
    %5118 = vmatprep.subr.bf16.mxu0 0
    %5119 = vmatpush1.bf16.msra.mxu0 %v4826
    %5120 = vmatprep.subr.bf16.mxu0 0
    %5121 = vmatpush1.bf16.msra.mxu0 %v4825
    %5122 = vmatprep.subr.bf16.mxu0 0
    %5123 = vmatpush2.bf16.msra.mxu0 %v4840
    %5124 = vmatprep.subr.bf16.mxu0 0
    %5125 = vmatpush2.bf16.msra.mxu0 %v4839
    %5126 = vmatprep.subr.bf16.mxu0 0
    %5127 = vmatpush2.bf16.msra.mxu0 %v4838
    %5128 = vmatprep.subr.bf16.mxu0 0
    %5129 = vmatpush2.bf16.msra.mxu0 %v4837
    %5130 = vmatprep.subr.bf16.mxu0 0
    %5131 = vmatpush2.bf16.msra.mxu0 %v4836
    %5132 = vmatprep.subr.bf16.mxu0 0
    %5133 = vmatpush2.bf16.msra.mxu0 %v4835
    %5134 = vmatprep.subr.bf16.mxu0 0
    %5135 = vmatpush2.bf16.msra.mxu0 %v4834
    %5136 = vmatprep.subr.bf16.mxu0 0
    %5137 = vmatpush2.bf16.msra.mxu0 %v4833
    %5138 = vmatprep.mubr.bf16.mxu0 %v4021
    %5139 = vmatmul.mubr.bf16.gmra.mxu0 %v4020
    %v5140 = vpop.f32.mrf.mxu0
    %v5141 = vadd.f32 %v5100, %v5140
    %v5142 = vpop.f32.mrf.mxu0
    %v5143 = vpop.f32.mrf.mxu0
    %v5144 = vadd.f32 %v5103, %v5143
    %v5145 = vpop.f32.mrf.mxu0
    %5146 = vdwg.mxu0
    %5147 = vmatprep.subr.bf16.mxu0 0
    %5148 = vmatpush1.bf16.msra.mxu0 %v4848
    %5149 = vmatprep.subr.bf16.mxu0 0
    %5150 = vmatpush1.bf16.msra.mxu0 %v4847
    %5151 = vmatprep.subr.bf16.mxu0 0
    %5152 = vmatpush1.bf16.msra.mxu0 %v4846
    %5153 = vmatprep.subr.bf16.mxu0 0
    %5154 = vmatpush1.bf16.msra.mxu0 %v4845
    %5155 = vmatprep.subr.bf16.mxu0 0
    %5156 = vmatpush1.bf16.msra.mxu0 %v4844
    %5157 = vmatprep.subr.bf16.mxu0 0
    %5158 = vmatpush1.bf16.msra.mxu0 %v4843
    %5159 = vmatprep.subr.bf16.mxu0 0
    %5160 = vmatpush1.bf16.msra.mxu0 %v4842
    %5161 = vmatprep.subr.bf16.mxu0 0
    %5162 = vmatpush1.bf16.msra.mxu0 %v4841
    %5163 = vmatprep.subr.bf16.mxu0 0
    %5164 = vmatpush2.bf16.msra.mxu0 %v4856
    %5165 = vmatprep.subr.bf16.mxu0 0
    %5166 = vmatpush2.bf16.msra.mxu0 %v4855
    %5167 = vmatprep.subr.bf16.mxu0 0
    %5168 = vmatpush2.bf16.msra.mxu0 %v4854
    %5169 = vmatprep.subr.bf16.mxu0 0
    %5170 = vmatpush2.bf16.msra.mxu0 %v4853
    %5171 = vmatprep.subr.bf16.mxu0 0
    %5172 = vmatpush2.bf16.msra.mxu0 %v4852
    %5173 = vmatprep.subr.bf16.mxu0 0
    %5174 = vmatpush2.bf16.msra.mxu0 %v4851
    %5175 = vmatprep.subr.bf16.mxu0 0
    %5176 = vmatpush2.bf16.msra.mxu0 %v4850
    %5177 = vmatprep.subr.bf16.mxu0 0
    %5178 = vmatpush2.bf16.msra.mxu0 %v4849
    %5179 = vmatprep.mubr.bf16.mxu0 %v4023
    %5180 = vmatmul.mubr.bf16.gmra.mxu0 %v4022
    %v5181 = vpop.f32.mrf.mxu0
    %v5182 = vadd.f32 %v5141, %v5181
    %v5183 = vpop.f32.mrf.mxu0
    %v5184 = vpop.f32.mrf.mxu0
    %v5185 = vadd.f32 %v5144, %v5184
    %v5186 = vpop.f32.mrf.mxu0
    %5187 = vdwg.mxu0
    %5188 = vmatprep.subr.bf16.mxu0 0
    %5189 = vmatpush1.bf16.msra.mxu0 %v4864
    %5190 = vmatprep.subr.bf16.mxu0 0
    %5191 = vmatpush1.bf16.msra.mxu0 %v4863
    %5192 = vmatprep.subr.bf16.mxu0 0
    %5193 = vmatpush1.bf16.msra.mxu0 %v4862
    %5194 = vmatprep.subr.bf16.mxu0 0
    %5195 = vmatpush1.bf16.msra.mxu0 %v4861
    %5196 = vmatprep.subr.bf16.mxu0 0
    %5197 = vmatpush1.bf16.msra.mxu0 %v4860
    %5198 = vmatprep.subr.bf16.mxu0 0
    %5199 = vmatpush1.bf16.msra.mxu0 %v4859
    %5200 = vmatprep.subr.bf16.mxu0 0
    %5201 = vmatpush1.bf16.msra.mxu0 %v4858
    %5202 = vmatprep.subr.bf16.mxu0 0
    %5203 = vmatpush1.bf16.msra.mxu0 %v4857
    %5204 = vmatprep.subr.bf16.mxu0 0
    %5205 = vmatpush2.bf16.msra.mxu0 %v4872
    %5206 = vmatprep.subr.bf16.mxu0 0
    %5207 = vmatpush2.bf16.msra.mxu0 %v4871
    %5208 = vmatprep.subr.bf16.mxu0 0
    %5209 = vmatpush2.bf16.msra.mxu0 %v4870
    %5210 = vmatprep.subr.bf16.mxu0 0
    %5211 = vmatpush2.bf16.msra.mxu0 %v4869
    %5212 = vmatprep.subr.bf16.mxu0 0
    %5213 = vmatpush2.bf16.msra.mxu0 %v4868
    %5214 = vmatprep.subr.bf16.mxu0 0
    %5215 = vmatpush2.bf16.msra.mxu0 %v4867
    %5216 = vmatprep.subr.bf16.mxu0 0
    %5217 = vmatpush2.bf16.msra.mxu0 %v4866
    %5218 = vmatprep.subr.bf16.mxu0 0
    %5219 = vmatpush2.bf16.msra.mxu0 %v4865
    %5220 = vmatprep.mubr.bf16.mxu0 %v4025
    %5221 = vmatmul.mubr.bf16.gmra.mxu0 %v4024
    %v5222 = vpop.f32.mrf.mxu0
    %v5223 = vadd.f32 %v5182, %v5222
    %v5224 = vpop.f32.mrf.mxu0
    %v5225 = vpop.f32.mrf.mxu0
    %v5226 = vadd.f32 %v5185, %v5225
    %v5227 = vpop.f32.mrf.mxu0
    %5228 = vdwg.mxu0
    %5229 = vmatprep.subr.bf16.mxu0 0
    %5230 = vmatpush1.bf16.msra.mxu0 %v4880
    %5231 = vmatprep.subr.bf16.mxu0 0
    %5232 = vmatpush1.bf16.msra.mxu0 %v4879
    %5233 = vmatprep.subr.bf16.mxu0 0
    %5234 = vmatpush1.bf16.msra.mxu0 %v4878
    %5235 = vmatprep.subr.bf16.mxu0 0
    %5236 = vmatpush1.bf16.msra.mxu0 %v4877
    %5237 = vmatprep.subr.bf16.mxu0 0
    %5238 = vmatpush1.bf16.msra.mxu0 %v4876
    %5239 = vmatprep.subr.bf16.mxu0 0
    %5240 = vmatpush1.bf16.msra.mxu0 %v4875
    %5241 = vmatprep.subr.bf16.mxu0 0
    %5242 = vmatpush1.bf16.msra.mxu0 %v4874
    %5243 = vmatprep.subr.bf16.mxu0 0
    %5244 = vmatpush1.bf16.msra.mxu0 %v4873
    %5245 = vmatprep.subr.bf16.mxu0 0
    %5246 = vmatpush2.bf16.msra.mxu0 %v4888
    %5247 = vmatprep.subr.bf16.mxu0 0
    %5248 = vmatpush2.bf16.msra.mxu0 %v4887
    %5249 = vmatprep.subr.bf16.mxu0 0
    %5250 = vmatpush2.bf16.msra.mxu0 %v4886
    %5251 = vmatprep.subr.bf16.mxu0 0
    %5252 = vmatpush2.bf16.msra.mxu0 %v4885
    %5253 = vmatprep.subr.bf16.mxu0 0
    %5254 = vmatpush2.bf16.msra.mxu0 %v4884
    %5255 = vmatprep.subr.bf16.mxu0 0
    %5256 = vmatpush2.bf16.msra.mxu0 %v4883
    %5257 = vmatprep.subr.bf16.mxu0 0
    %5258 = vmatpush2.bf16.msra.mxu0 %v4882
    %5259 = vmatprep.subr.bf16.mxu0 0
    %5260 = vmatpush2.bf16.msra.mxu0 %v4881
    %5261 = vmatprep.mubr.bf16.mxu0 %v4027
    %5262 = vmatmul.mubr.bf16.gmra.mxu0 %v4026
    %v5263 = vpop.f32.mrf.mxu0
    %v5264 = vadd.f32 %v5223, %v5263
    %v5265 = vpop.f32.mrf.mxu0
    %v5266 = vpop.f32.mrf.mxu0
    %v5267 = vadd.f32 %v5226, %v5266
    %v5268 = vpop.f32.mrf.mxu0
    %5269 = vdwg.mxu0
    %5270 = vmatprep.subr.bf16.mxu0 0
    %5271 = vmatpush1.bf16.msra.mxu0 %v4896
    %5272 = vmatprep.subr.bf16.mxu0 0
    %5273 = vmatpush1.bf16.msra.mxu0 %v4895
    %5274 = vmatprep.subr.bf16.mxu0 0
    %5275 = vmatpush1.bf16.msra.mxu0 %v4894
    %5276 = vmatprep.subr.bf16.mxu0 0
    %5277 = vmatpush1.bf16.msra.mxu0 %v4893
    %5278 = vmatprep.subr.bf16.mxu0 0
    %5279 = vmatpush1.bf16.msra.mxu0 %v4892
    %5280 = vmatprep.subr.bf16.mxu0 0
    %5281 = vmatpush1.bf16.msra.mxu0 %v4891
    %5282 = vmatprep.subr.bf16.mxu0 0
    %5283 = vmatpush1.bf16.msra.mxu0 %v4890
    %5284 = vmatprep.subr.bf16.mxu0 0
    %5285 = vmatpush1.bf16.msra.mxu0 %v4889
    %5286 = vmatprep.subr.bf16.mxu0 0
    %5287 = vmatpush2.bf16.msra.mxu0 %v4904
    %5288 = vmatprep.subr.bf16.mxu0 0
    %5289 = vmatpush2.bf16.msra.mxu0 %v4903
    %5290 = vmatprep.subr.bf16.mxu0 0
    %5291 = vmatpush2.bf16.msra.mxu0 %v4902
    %5292 = vmatprep.subr.bf16.mxu0 0
    %5293 = vmatpush2.bf16.msra.mxu0 %v4901
    %5294 = vmatprep.subr.bf16.mxu0 0
    %5295 = vmatpush2.bf16.msra.mxu0 %v4900
    %5296 = vmatprep.subr.bf16.mxu0 0
    %5297 = vmatpush2.bf16.msra.mxu0 %v4899
    %5298 = vmatprep.subr.bf16.mxu0 0
    %5299 = vmatpush2.bf16.msra.mxu0 %v4898
    %5300 = vmatprep.subr.bf16.mxu0 0
    %5301 = vmatpush2.bf16.msra.mxu0 %v4897
    %5302 = vmatprep.mubr.bf16.mxu0 %v4029
    %5303 = vmatmul.mubr.bf16.gmra.mxu0 %v4028
    %v5304 = vpop.f32.mrf.mxu0
    %v5305 = vadd.f32 %v5264, %v5304
    %v5306 = vpop.f32.mrf.mxu0
    %v5307 = vpop.f32.mrf.mxu0
    %v5308 = vadd.f32 %v5267, %v5307
    %v5309 = vpop.f32.mrf.mxu0
    %5310 = vdwg.mxu0
    %5311 = vmatprep.subr.bf16.mxu0 0
    %5312 = vmatpush1.bf16.msra.mxu0 %v4912
    %5313 = vmatprep.subr.bf16.mxu0 0
    %5314 = vmatpush1.bf16.msra.mxu0 %v4911
    %5315 = vmatprep.subr.bf16.mxu0 0
    %5316 = vmatpush1.bf16.msra.mxu0 %v4910
    %5317 = vmatprep.subr.bf16.mxu0 0
    %5318 = vmatpush1.bf16.msra.mxu0 %v4909
    %5319 = vmatprep.subr.bf16.mxu0 0
    %5320 = vmatpush1.bf16.msra.mxu0 %v4908
    %5321 = vmatprep.subr.bf16.mxu0 0
    %5322 = vmatpush1.bf16.msra.mxu0 %v4907
    %5323 = vmatprep.subr.bf16.mxu0 0
    %5324 = vmatpush1.bf16.msra.mxu0 %v4906
    %5325 = vmatprep.subr.bf16.mxu0 0
    %5326 = vmatpush1.bf16.msra.mxu0 %v4905
    %5327 = vmatprep.subr.bf16.mxu0 0
    %5328 = vmatpush2.bf16.msra.mxu0 %v4920
    %5329 = vmatprep.subr.bf16.mxu0 0
    %5330 = vmatpush2.bf16.msra.mxu0 %v4919
    %5331 = vmatprep.subr.bf16.mxu0 0
    %5332 = vmatpush2.bf16.msra.mxu0 %v4918
    %5333 = vmatprep.subr.bf16.mxu0 0
    %5334 = vmatpush2.bf16.msra.mxu0 %v4917
    %5335 = vmatprep.subr.bf16.mxu0 0
    %5336 = vmatpush2.bf16.msra.mxu0 %v4916
    %5337 = vmatprep.subr.bf16.mxu0 0
    %5338 = vmatpush2.bf16.msra.mxu0 %v4915
    %5339 = vmatprep.subr.bf16.mxu0 0
    %5340 = vmatpush2.bf16.msra.mxu0 %v4914
    %5341 = vmatprep.subr.bf16.mxu0 0
    %5342 = vmatpush2.bf16.msra.mxu0 %v4913
    %5343 = vmatprep.mubr.bf16.mxu0 %v4031
    %5344 = vmatmul.mubr.bf16.gmra.mxu0 %v4030
    %v5345 = vpop.f32.mrf.mxu0
    %v5346 = vadd.f32 %v5305, %v5345
    %v5347 = vpop.f32.mrf.mxu0
    %v5348 = vpop.f32.mrf.mxu0
    %v5349 = vadd.f32 %v5308, %v5348
    %v5350 = vpop.f32.mrf.mxu0
    %5351 = vdwg.mxu0
    %5352 = vmatprep.subr.bf16.mxu0 0
    %5353 = vmatpush1.bf16.msra.mxu0 %v4928
    %5354 = vmatprep.subr.bf16.mxu0 0
    %5355 = vmatpush1.bf16.msra.mxu0 %v4927
    %5356 = vmatprep.subr.bf16.mxu0 0
    %5357 = vmatpush1.bf16.msra.mxu0 %v4926
    %5358 = vmatprep.subr.bf16.mxu0 0
    %5359 = vmatpush1.bf16.msra.mxu0 %v4925
    %5360 = vmatprep.subr.bf16.mxu0 0
    %5361 = vmatpush1.bf16.msra.mxu0 %v4924
    %5362 = vmatprep.subr.bf16.mxu0 0
    %5363 = vmatpush1.bf16.msra.mxu0 %v4923
    %5364 = vmatprep.subr.bf16.mxu0 0
    %5365 = vmatpush1.bf16.msra.mxu0 %v4922
    %5366 = vmatprep.subr.bf16.mxu0 0
    %5367 = vmatpush1.bf16.msra.mxu0 %v4921
    %5368 = vmatprep.subr.bf16.mxu0 0
    %5369 = vmatpush2.bf16.msra.mxu0 %v4936
    %5370 = vmatprep.subr.bf16.mxu0 0
    %5371 = vmatpush2.bf16.msra.mxu0 %v4935
    %5372 = vmatprep.subr.bf16.mxu0 0
    %5373 = vmatpush2.bf16.msra.mxu0 %v4934
    %5374 = vmatprep.subr.bf16.mxu0 0
    %5375 = vmatpush2.bf16.msra.mxu0 %v4933
    %5376 = vmatprep.subr.bf16.mxu0 0
    %5377 = vmatpush2.bf16.msra.mxu0 %v4932
    %5378 = vmatprep.subr.bf16.mxu0 0
    %5379 = vmatpush2.bf16.msra.mxu0 %v4931
    %5380 = vmatprep.subr.bf16.mxu0 0
    %5381 = vmatpush2.bf16.msra.mxu0 %v4930
    %5382 = vmatprep.subr.bf16.mxu0 0
    %5383 = vmatpush2.bf16.msra.mxu0 %v4929
    %5384 = vmatprep.mubr.bf16.mxu0 %v4033
    %5385 = vmatmul.mubr.bf16.gmra.mxu0 %v4032
    %v5386 = vpop.f32.mrf.mxu0
    %v5387 = vadd.f32 %v5346, %v5386
    %v5388 = vpop.f32.mrf.mxu0
    %v5389 = vpop.f32.mrf.mxu0
    %v5390 = vadd.f32 %v5349, %v5389
    %v5391 = vpop.f32.mrf.mxu0
    %5392 = vdwg.mxu0
    %v5393 = vmul.f32 %v5387, 0.01
    %v5394 = vmul.f32 %v5390, 0.01
    %v5395 = vmax.f32 %v5387, %v5393
    %v5396 = vmax.f32 %v5390, %v5394
    %v5397 = vpack.c.bf16 %v5396, %v5395
    %5398 = vst [vmem:[#allocation11] sm:$0xf] %v5397
    %v5400 = vunpack.c.h.b16 %v5397
    %v5401 = vpack.c.b16 %v5400, %v5400
    %5403 = vst [vmem:[#allocation11 + $0x4] sm:$0xf] %v5401
    // Predicated region
    $region42: #{tpu_custom_call.1} parent=1 // pred_check
      _
    $region43: #{tpu_custom_call.1} parent=1 // pred_check_branch
      %5405 = sbr.rel (0) target = $region45
    $region44: #{tpu_custom_call.1} parent=1 // pred_region
      %s5407 = ssub.s32 128, 128
      %5408 = vsyncadd [#allocation4], %s5407
      %s5410 = sshll.u32 [#allocation11], 4
      %s5411 = int_to_ptr.vmem [resolvable:$true] %s5410
      %5413 = dma.vmem_to_hbm [thread:$0]  %s5411, 128, %s5, [#allocation4]
    $region45: #{tpu_custom_call.1} parent=1 // pred_fallthru
      _
    // Predicated region
    $region46: #{tpu_custom_call.1} parent=1 // pred_check
      _
    $region47: #{tpu_custom_call.1} parent=1 // pred_check_branch
      %5415 = sbr.rel (0) target = $region49
    $region48: #{tpu_custom_call.1} parent=1 // pred_region
      %5416 = dma.done [#allocation4], 128
    $region49: #{tpu_custom_call.1} parent=1 // pred_fallthru
      _
    %5417 = vsyncpa [#allocation3], 1
    %5418 = vsyncpa [#allocation6], 1
    %5419 = vsyncpa [#allocation9], 1
    %5420 = vsyncpa [#allocation4], 1

</llo_original>
